<compile_context>
chip_gen: v7x
topology: tpu7x:2x2x1
jax: 0.10.0
libtpu: 0.0.40
codegen_flags: <defaults>
</compile_context>

<pallas_src>
import functools

import jax
import jax.numpy as jnp
from jax.experimental import pallas as pl
from jax.experimental.pallas import tpu as pltpu

NEG_SLOPE = 0.01   # nn.LeakyReLU default negative_slope
BN_EPS = 1e-5      # nn.BatchNorm2d default eps


# ----------------------------- Pallas kernels ------------------------------

def _stem_front_kernel(xee, xeo, xoe, xoo,
                       w1a_ref, b1a_ref, wdw_ref, bdw_ref, wp1_ref, bp1_ref,
                       out1_ref, t_ref, *, Ho, Wo, mid):
    """conv1a(3x3 s2)+BN+Leaky -> dw3x3+BN+Leaky -> branch1 1x1+BN+ReLU."""
    M = Ho * Wo
    phases = (xee[0], xeo[0], xoe[0], xoo[0])     # (PH, PW, Cin) f32 each

    # --- 3x3 stride-2 conv as 9 small MXU dots over phase slices (bf16 x bf16 -> f32)
    acc = jnp.zeros((M, mid), jnp.float32)
    for k in range(9):
        ky, kx = k // 3, k % 3
        ph = phases[(ky % 2) * 2 + (kx % 2)]
        tap = ph[ky // 2:ky // 2 + Ho, kx // 2:kx // 2 + Wo, :]
        tap = tap.reshape(M, ph.shape[-1]).astype(jnp.bfloat16)
        acc = acc + jnp.dot(tap, w1a_ref[k], preferred_element_type=jnp.float32)
    y = acc + b1a_ref[...]                         # BN (scale folded into weights)
    y = jnp.where(y > 0, y, NEG_SLOPE * y)         # LeakyReLU
    y = y.reshape(Ho, Wo, mid)

    # --- depthwise 3x3 s1 p1 + BN + LeakyReLU (zero padding built in-register)
    zc = jnp.zeros((Ho, 1, mid), jnp.float32)
    zr = jnp.zeros((1, Wo + 2, mid), jnp.float32)
    yp = jnp.concatenate([zc, y, zc], axis=1)
    yp = jnp.concatenate([zr, yp, zr], axis=0)     # (Ho+2, Wo+2, mid)
    acc2 = jnp.zeros((Ho, Wo, mid), jnp.float32)
    for k in range(9):
        ky, kx = k // 3, k % 3
        acc2 = acc2 + yp[ky:ky + Ho, kx:kx + Wo, :] * wdw_ref[k]
    out1 = acc2 + bdw_ref[...]
    out1 = jnp.where(out1 > 0, out1, NEG_SLOPE * out1)
    out1_ref[...] = out1.reshape(1, Ho, Wo, mid)

    # --- branch1 1x1 conv + BN + ReLU (fused: same tile, no HBM round trip)
    t = jnp.dot(out1.reshape(M, mid).astype(jnp.bfloat16), wp1_ref[...],
                preferred_element_type=jnp.float32) + bp1_ref[...]
    t_ref[...] = jnp.maximum(t, 0.0).reshape(1, Ho, Wo, mid)


def _stem_back_kernel(tee, teo, toe, too, p00, p01, p10, p11,
                      wb2_ref, bb2_ref, wft_ref, wfb_ref, bf_ref,
                      o_ref, *, Ho2, Wo2, mid, out_c):
    """branch1 3x3 s2+BN+ReLU, maxpool 2x2, concat + 1x1 conv (split matmul)."""
    M = Ho2 * Wo2
    tph = (tee[0], teo[0], toe[0], too[0])         # phases of padded t

    # --- 3x3 stride-2 conv on t, 9 taps, bf16 MXU dots, f32 accumulate
    acc = jnp.zeros((M, mid), jnp.float32)
    for k in range(9):
        ky, kx = k // 3, k % 3
        ph = tph[(ky % 2) * 2 + (kx % 2)]
        tap = ph[ky // 2:ky // 2 + Ho2, kx // 2:kx // 2 + Wo2, :]
        tap = tap.reshape(M, mid).astype(jnp.bfloat16)
        acc = acc + jnp.dot(tap, wb2_ref[k], preferred_element_type=jnp.float32)
    b1 = jnp.maximum(acc + bb2_ref[...], 0.0)

    # --- branch2 maxpool(2,2): elementwise max of the four phases of out1
    b2 = jnp.maximum(jnp.maximum(p00[0], p01[0]), jnp.maximum(p10[0], p11[0]))
    b2 = b2.reshape(M, mid)

    # --- concat([b1, b2]) + 1x1 conv + bias as a split matmul
    out = jnp.dot(b1.astype(jnp.bfloat16), wft_ref[...],
                  preferred_element_type=jnp.float32)
    out = out + jnp.dot(b2.astype(jnp.bfloat16), wfb_ref[...],
                        preferred_element_type=jnp.float32)
    out = out + bf_ref[...]
    o_ref[...] = out.reshape(1, Ho2, Wo2, out_c)


# ----------------------------- JAX glue -------------------------------------

def _fold_bn(bn_params, conv_bias=None):
    """Eval-mode BatchNorm (+ optional conv bias) folded into scale/shift."""
    gamma, beta, mean, var = bn_params
    scale = gamma / jnp.sqrt(var + BN_EPS)
    shift = beta - mean * scale
    if conv_bias is not None:
        shift = shift + scale * conv_bias
    return scale, shift


def _phases(a):
    """2x2 space-to-depth split: 4 arrays, same total bytes as `a`."""
    return [a[:, dy::2, dx::2, :] for dy in (0, 1) for dx in (0, 1)]


def _img_spec(arr):
    return pl.BlockSpec((1,) + arr.shape[1:], lambda n: (n, 0, 0, 0))


def _full_spec(arr):
    return pl.BlockSpec(arr.shape, lambda n, nd=arr.ndim: (0,) * nd)


def pelee_stem_forward(x_nchw, p):
    """Pallas forward. x_nchw: (N, 3, H, W) f32 -> (N, out_c, H//4, W//4)."""
    mid, out_c = p["mid"], p["out_c"]
    x = jnp.transpose(x_nchw, (0, 2, 3, 1)).astype(jnp.float32)   # NHWC
    N, H, W, _ = x.shape
    Ho, Wo = (H + 1) // 2, (W + 1) // 2          # conv 3x3 s2 p1 output
    Ho2, Wo2 = Ho // 2, Wo // 2                  # stride-2 / pool output

    # ---- fold BN into weights (scale) and bias (shift); cast weights to bf16
    s, b = _fold_bn(p["bn1a"])
    w1a = (p["w1a"] * s).reshape(9, 3, mid).astype(jnp.bfloat16)
    b1a = b.reshape(1, mid)

    s, b = _fold_bn(p["bn1b"])
    wdw = (p["w1b_dw"] * s).reshape(9, 1, mid)                    # VPU path, f32
    bdw = b.reshape(1, mid)

    s, b = _fold_bn(p["bnb1_1"], conv_bias=p["bb1_1"])
    wp1 = (p["wb1_1"] * s).astype(jnp.bfloat16)
    bp1 = b.reshape(1, mid)

    s, b = _fold_bn(p["bnb1_2"], conv_bias=p["bb1_2"])
    wb2 = (p["wb1_2"] * s).reshape(9, mid, mid).astype(jnp.bfloat16)
    bb2 = b.reshape(1, mid)

    wft = p["wf"][:mid].astype(jnp.bfloat16)
    wfb = p["wf"][mid:].astype(jnp.bfloat16)
    bf = p["bf"].reshape(1, out_c)

    cp = pltpu.CompilerParams(dimension_semantics=("parallel",),
                              vmem_limit_bytes=32 * 1024 * 1024)

    # ---- stage 1: conv1a + depthwise + branch1-1x1 (one pallas_call, grid over N)
    xp = jnp.pad(x, ((0, 0), (1, 1), (1, 1), (0, 0)))
    xph = _phases(xp)
    consts1 = (w1a, b1a, wdw, bdw, wp1, bp1)
    out1, t = pl.pallas_call(
        functools.partial(_stem_front_kernel, Ho=Ho, Wo=Wo, mid=mid),
        grid=(N,),
        in_specs=[_img_spec(a) for a in xph] + [_full_spec(a) for a in consts1],
        out_specs=[pl.BlockSpec((1, Ho, Wo, mid), lambda n: (n, 0, 0, 0))] * 2,
        out_shape=[jax.ShapeDtypeStruct((N, Ho, Wo, mid), jnp.float32)] * 2,
        compiler_params=cp,
    )(*xph, *consts1)

    # ---- stage 2: branch1 3x3 s2 + maxpool + concat + final 1x1
    tp = jnp.pad(t, ((0, 0), (1, 1), (1, 1), (0, 0)))
    tph = _phases(tp)                # taps for the stride-2 conv
    oph = _phases(out1)              # the 4 maxpool taps
    consts2 = (wb2, bb2, wft, wfb, bf)
    out = pl.pallas_call(
        functools.partial(_stem_back_kernel, Ho2=Ho2, Wo2=Wo2, mid=mid, out_c=out_c),
        grid=(N,),
        in_specs=[_img_spec(a) for a in tph + oph] + [_full_spec(a) for a in consts2],
        out_specs=pl.BlockSpec((1, Ho2, Wo2, out_c), lambda n: (n, 0, 0, 0)),
        out_shape=jax.ShapeDtypeStruct((N, Ho2, Wo2, out_c), jnp.float32),
        compiler_params=cp,
    )(*tph, *oph, *consts2)

    return jnp.transpose(out, (0, 3, 1, 2))      # NCHW


# ----------------------- deterministic parameters ---------------------------

def make_params(key, out_channel=64, min_mid_c=16):
    mid = out_channel // 4 if out_channel // 4 >= min_mid_c else min_mid_c
    ks = iter(jax.random.split(key, 32))

    def w(shape, scale=0.1):
        return jax.random.normal(next(ks), shape, jnp.float32) * scale

    def bn(c):  # (gamma, beta, running_mean, running_var)
        return (jax.random.uniform(next(ks), (c,), jnp.float32, 0.5, 1.5),
                w((c,)), w((c,)),
                jax.random.uniform(next(ks), (c,), jnp.float32, 0.5, 1.5))

    p = dict(mid=mid, out_c=out_channel)
    p["w1a"] = w((3, 3, 3, mid));        p["bn1a"] = bn(mid)        # HWIO
    p["w1b_dw"] = w((3, 3, mid));        p["bn1b"] = bn(mid)        # depthwise
    p["wb1_1"] = w((mid, mid));          p["bb1_1"] = w((mid,));    p["bnb1_1"] = bn(mid)
    p["wb1_2"] = w((3, 3, mid, mid));    p["bb1_2"] = w((mid,));    p["bnb1_2"] = bn(mid)
    p["wf"] = w((2 * mid, out_channel)); p["bf"] = w((out_channel,))
    return p


# --------------------------- pure-JAX reference ------------------------------

def reference_forward(x_nchw, p):
    mid, out_c = p["mid"], p["out_c"]
    HP = jax.lax.Precision.HIGHEST
    x = jnp.transpose(x_nchw, (0, 2, 3, 1))

    def conv(x, w, stride, pad, groups=1):
        return jax.lax.conv_general_dilated(
            x, w, (stride, stride), [(pad, pad), (pad, pad)],
            dimension_numbers=("NHWC", "HWIO", "NHWC"),
            feature_group_count=groups, precision=HP)

    def bn(x, bnp):
        gamma, beta, mean, var = bnp
        return (x - mean) / jnp.sqrt(var + BN_EPS) * gamma + beta

    y = bn(conv(x, p["w1a"], 2, 1), p["bn1a"])
    y = jnp.where(y > 0, y, NEG_SLOPE * y)
    y = bn(conv(y, p["w1b_dw"].reshape(3, 3, 1, mid), 1, 1, groups=mid), p["bn1b"])
    out1 = jnp.where(y > 0, y, NEG_SLOPE * y)

    t = conv(out1, p["wb1_1"].reshape(1, 1, mid, mid), 1, 0) + p["bb1_1"]
    t = jnp.maximum(bn(t, p["bnb1_1"]), 0.0)
    t = conv(t, p["wb1_2"], 2, 1) + p["bb1_2"]
    b1 = jnp.maximum(bn(t, p["bnb1_2"]), 0.0)

    N, Ho, Wo, _ = out1.shape
    b2 = out1.reshape(N, Ho // 2, 2, Wo // 2, 2, mid).max(axis=(2, 4))
    cat = jnp.concatenate([b1, b2], axis=-1)
    out = conv(cat, p["wf"].reshape(1, 1, 2 * mid, out_c), 1, 0) + p["bf"]
    return jnp.transpose(out, (0, 3, 1, 2))


# --------------------------------- main --------------------------------------

if __name__ == "__main__":
    key = jax.random.PRNGKey(0)
    kx, kp = jax.random.split(key)

    # out_channel=64 -> mid_channel=16 (same formula as the module); input has
    # 3 channels (RGB stem).  32x32 spatial keeps all in-kernel reshapes 8-aligned.
    params = make_params(kp, out_channel=64, min_mid_c=16)
    x = jax.random.normal(kx, (2, 3, 32, 32), jnp.float32)   # NCHW like PyTorch

    out = jax.block_until_ready(pelee_stem_forward(x, params))
    ref = jax.block_until_ready(reference_forward(x, params))

    assert out.shape == (2, 64, 8, 8), out.shape
    max_err = float(jnp.max(jnp.abs(out - ref)))
    assert jnp.allclose(out, ref, rtol=5e-2, atol=5e-2), max_err   # bf16 MXU path
    print("KERNEL_OK")
</pallas_src>

<mosaic_0001>
module attributes {stable_mosaic.version = 11 : i64} {
  func.func @_stem_front_kernel(%arg0: i32, %arg1: memref<1x17x17x3xf32, #tpu.memory_space<vmem>>, %arg2: memref<1x17x17x3xf32, #tpu.memory_space<vmem>>, %arg3: memref<1x17x17x3xf32, #tpu.memory_space<vmem>>, %arg4: memref<1x17x17x3xf32, #tpu.memory_space<vmem>>, %arg5: memref<9x3x16xbf16, #tpu.memory_space<vmem>>, %arg6: memref<1x16xf32, #tpu.memory_space<vmem>>, %arg7: memref<9x1x16xf32, #tpu.memory_space<vmem>>, %arg8: memref<1x16xf32, #tpu.memory_space<vmem>>, %arg9: memref<16x16xbf16, #tpu.memory_space<vmem>>, %arg10: memref<1x16xf32, #tpu.memory_space<vmem>>, %arg11: memref<1x16x16x16xf32, #tpu.memory_space<vmem>>, %arg12: memref<1x16x16x16xf32, #tpu.memory_space<vmem>>) attributes {dimension_semantics = [#tpu.dimension_semantics<parallel>], iteration_bounds = array<i64: 2>, scalar_prefetch = 0 : i64, scratch_operands = 0 : i64, tpu.core_type = #tpu.core_type<tc>, window_params = [{transform_indices = @transform_0, window_bounds = array<i64: 1, 17, 17, 3>}, {transform_indices = @transform_1, window_bounds = array<i64: 1, 17, 17, 3>}, {transform_indices = @transform_2, window_bounds = array<i64: 1, 17, 17, 3>}, {transform_indices = @transform_3, window_bounds = array<i64: 1, 17, 17, 3>}, {pipeline_mode = #tpu.pipeline_mode<synchronous>, transform_indices = @transform_4, window_bounds = array<i64: 9, 3, 16>}, {pipeline_mode = #tpu.pipeline_mode<synchronous>, transform_indices = @transform_5, window_bounds = array<i64: 1, 16>}, {pipeline_mode = #tpu.pipeline_mode<synchronous>, transform_indices = @transform_6, window_bounds = array<i64: 9, 1, 16>}, {pipeline_mode = #tpu.pipeline_mode<synchronous>, transform_indices = @transform_7, window_bounds = array<i64: 1, 16>}, {pipeline_mode = #tpu.pipeline_mode<synchronous>, transform_indices = @transform_8, window_bounds = array<i64: 16, 16>}, {pipeline_mode = #tpu.pipeline_mode<synchronous>, transform_indices = @transform_9, window_bounds = array<i64: 1, 16>}, {transform_indices = @transform_10, window_bounds = array<i64: 1, 16, 16, 16>}, {transform_indices = @transform_11, window_bounds = array<i64: 1, 16, 16, 16>}]} {
    %c0 = arith.constant 0 : index
    %c0_0 = arith.constant 0 : index
    %c0_1 = arith.constant 0 : index
    %c0_2 = arith.constant 0 : index
    %0 = vector.load %arg1[%c0, %c0_0, %c0_1, %c0_2] : memref<1x17x17x3xf32, #tpu.memory_space<vmem>>, vector<1x17x17x3xf32>
    %1 = vector.shape_cast %0 : vector<1x17x17x3xf32> to vector<17x17x3xf32>
    %c0_3 = arith.constant 0 : index
    %c0_4 = arith.constant 0 : index
    %c0_5 = arith.constant 0 : index
    %c0_6 = arith.constant 0 : index
    %2 = vector.load %arg2[%c0_3, %c0_4, %c0_5, %c0_6] : memref<1x17x17x3xf32, #tpu.memory_space<vmem>>, vector<1x17x17x3xf32>
    %3 = vector.shape_cast %2 : vector<1x17x17x3xf32> to vector<17x17x3xf32>
    %c0_7 = arith.constant 0 : index
    %c0_8 = arith.constant 0 : index
    %c0_9 = arith.constant 0 : index
    %c0_10 = arith.constant 0 : index
    %4 = vector.load %arg3[%c0_7, %c0_8, %c0_9, %c0_10] : memref<1x17x17x3xf32, #tpu.memory_space<vmem>>, vector<1x17x17x3xf32>
    %5 = vector.shape_cast %4 : vector<1x17x17x3xf32> to vector<17x17x3xf32>
    %c0_11 = arith.constant 0 : index
    %c0_12 = arith.constant 0 : index
    %c0_13 = arith.constant 0 : index
    %c0_14 = arith.constant 0 : index
    %6 = vector.load %arg4[%c0_11, %c0_12, %c0_13, %c0_14] : memref<1x17x17x3xf32, #tpu.memory_space<vmem>>, vector<1x17x17x3xf32>
    %7 = vector.shape_cast %6 : vector<1x17x17x3xf32> to vector<17x17x3xf32>
    %cst = arith.constant 0.000000e+00 : f32
    %8 = vector.broadcast %cst : f32 to vector<256x16xf32>
    %9 = vector.extract_strided_slice %1 {offsets = [0, 0, 0], sizes = [16, 16, 3], strides = [1, 1, 1]} : vector<17x17x3xf32> to vector<16x16x3xf32>
    %10 = vector.shape_cast %9 : vector<16x16x3xf32> to vector<256x3xf32>
    %11 = arith.truncf %10 : vector<256x3xf32> to vector<256x3xbf16>
    %c0_15 = arith.constant 0 : index
    %c0_16 = arith.constant 0 : index
    %c0_17 = arith.constant 0 : index
    %12 = vector.load %arg5[%c0_15, %c0_16, %c0_17] : memref<9x3x16xbf16, #tpu.memory_space<vmem>>, vector<1x3x16xbf16>
    %13 = vector.shape_cast %12 : vector<1x3x16xbf16> to vector<3x16xbf16>
    %cst_18 = arith.constant dense<0.000000e+00> : vector<256x16xf32>
    %14 = tpu.matmul %11, %13, %cst_18 {dimension_numbers = #tpu.dot_dimension_numbers<[1], [0], [0], [1], [0, 0, 1, 1], [], []>} : vector<256x3xbf16>, vector<3x16xbf16>, vector<256x16xf32> -> vector<256x16xf32>
    %15 = arith.addf %8, %14 : vector<256x16xf32>
    %16 = vector.extract_strided_slice %3 {offsets = [0, 0, 0], sizes = [16, 16, 3], strides = [1, 1, 1]} : vector<17x17x3xf32> to vector<16x16x3xf32>
    %17 = vector.shape_cast %16 : vector<16x16x3xf32> to vector<256x3xf32>
    %18 = arith.truncf %17 : vector<256x3xf32> to vector<256x3xbf16>
    %c1 = arith.constant 1 : index
    %c0_19 = arith.constant 0 : index
    %c0_20 = arith.constant 0 : index
    %19 = vector.load %arg5[%c1, %c0_19, %c0_20] : memref<9x3x16xbf16, #tpu.memory_space<vmem>>, vector<1x3x16xbf16>
    %20 = vector.shape_cast %19 : vector<1x3x16xbf16> to vector<3x16xbf16>
    %cst_21 = arith.constant dense<0.000000e+00> : vector<256x16xf32>
    %21 = tpu.matmul %18, %20, %cst_21 {dimension_numbers = #tpu.dot_dimension_numbers<[1], [0], [0], [1], [0, 0, 1, 1], [], []>} : vector<256x3xbf16>, vector<3x16xbf16>, vector<256x16xf32> -> vector<256x16xf32>
    %22 = arith.addf %15, %21 : vector<256x16xf32>
    %23 = vector.extract_strided_slice %1 {offsets = [0, 1, 0], sizes = [16, 16, 3], strides = [1, 1, 1]} : vector<17x17x3xf32> to vector<16x16x3xf32>
    %24 = vector.shape_cast %23 : vector<16x16x3xf32> to vector<256x3xf32>
    %25 = arith.truncf %24 : vector<256x3xf32> to vector<256x3xbf16>
    %c2 = arith.constant 2 : index
    %c0_22 = arith.constant 0 : index
    %c0_23 = arith.constant 0 : index
    %26 = vector.load %arg5[%c2, %c0_22, %c0_23] : memref<9x3x16xbf16, #tpu.memory_space<vmem>>, vector<1x3x16xbf16>
    %27 = vector.shape_cast %26 : vector<1x3x16xbf16> to vector<3x16xbf16>
    %cst_24 = arith.constant dense<0.000000e+00> : vector<256x16xf32>
    %28 = tpu.matmul %25, %27, %cst_24 {dimension_numbers = #tpu.dot_dimension_numbers<[1], [0], [0], [1], [0, 0, 1, 1], [], []>} : vector<256x3xbf16>, vector<3x16xbf16>, vector<256x16xf32> -> vector<256x16xf32>
    %29 = arith.addf %22, %28 : vector<256x16xf32>
    %30 = vector.extract_strided_slice %5 {offsets = [0, 0, 0], sizes = [16, 16, 3], strides = [1, 1, 1]} : vector<17x17x3xf32> to vector<16x16x3xf32>
    %31 = vector.shape_cast %30 : vector<16x16x3xf32> to vector<256x3xf32>
    %32 = arith.truncf %31 : vector<256x3xf32> to vector<256x3xbf16>
    %c3 = arith.constant 3 : index
    %c0_25 = arith.constant 0 : index
    %c0_26 = arith.constant 0 : index
    %33 = vector.load %arg5[%c3, %c0_25, %c0_26] : memref<9x3x16xbf16, #tpu.memory_space<vmem>>, vector<1x3x16xbf16>
    %34 = vector.shape_cast %33 : vector<1x3x16xbf16> to vector<3x16xbf16>
    %cst_27 = arith.constant dense<0.000000e+00> : vector<256x16xf32>
    %35 = tpu.matmul %32, %34, %cst_27 {dimension_numbers = #tpu.dot_dimension_numbers<[1], [0], [0], [1], [0, 0, 1, 1], [], []>} : vector<256x3xbf16>, vector<3x16xbf16>, vector<256x16xf32> -> vector<256x16xf32>
    %36 = arith.addf %29, %35 : vector<256x16xf32>
    %37 = vector.extract_strided_slice %7 {offsets = [0, 0, 0], sizes = [16, 16, 3], strides = [1, 1, 1]} : vector<17x17x3xf32> to vector<16x16x3xf32>
    %38 = vector.shape_cast %37 : vector<16x16x3xf32> to vector<256x3xf32>
    %39 = arith.truncf %38 : vector<256x3xf32> to vector<256x3xbf16>
    %c4 = arith.constant 4 : index
    %c0_28 = arith.constant 0 : index
    %c0_29 = arith.constant 0 : index
    %40 = vector.load %arg5[%c4, %c0_28, %c0_29] : memref<9x3x16xbf16, #tpu.memory_space<vmem>>, vector<1x3x16xbf16>
    %41 = vector.shape_cast %40 : vector<1x3x16xbf16> to vector<3x16xbf16>
    %cst_30 = arith.constant dense<0.000000e+00> : vector<256x16xf32>
    %42 = tpu.matmul %39, %41, %cst_30 {dimension_numbers = #tpu.dot_dimension_numbers<[1], [0], [0], [1], [0, 0, 1, 1], [], []>} : vector<256x3xbf16>, vector<3x16xbf16>, vector<256x16xf32> -> vector<256x16xf32>
    %43 = arith.addf %36, %42 : vector<256x16xf32>
    %44 = vector.extract_strided_slice %5 {offsets = [0, 1, 0], sizes = [16, 16, 3], strides = [1, 1, 1]} : vector<17x17x3xf32> to vector<16x16x3xf32>
    %45 = vector.shape_cast %44 : vector<16x16x3xf32> to vector<256x3xf32>
    %46 = arith.truncf %45 : vector<256x3xf32> to vector<256x3xbf16>
    %c5 = arith.constant 5 : index
    %c0_31 = arith.constant 0 : index
    %c0_32 = arith.constant 0 : index
    %47 = vector.load %arg5[%c5, %c0_31, %c0_32] : memref<9x3x16xbf16, #tpu.memory_space<vmem>>, vector<1x3x16xbf16>
    %48 = vector.shape_cast %47 : vector<1x3x16xbf16> to vector<3x16xbf16>
    %cst_33 = arith.constant dense<0.000000e+00> : vector<256x16xf32>
    %49 = tpu.matmul %46, %48, %cst_33 {dimension_numbers = #tpu.dot_dimension_numbers<[1], [0], [0], [1], [0, 0, 1, 1], [], []>} : vector<256x3xbf16>, vector<3x16xbf16>, vector<256x16xf32> -> vector<256x16xf32>
    %50 = arith.addf %43, %49 : vector<256x16xf32>
    %51 = vector.extract_strided_slice %1 {offsets = [1, 0, 0], sizes = [16, 16, 3], strides = [1, 1, 1]} : vector<17x17x3xf32> to vector<16x16x3xf32>
    %52 = vector.shape_cast %51 : vector<16x16x3xf32> to vector<256x3xf32>
    %53 = arith.truncf %52 : vector<256x3xf32> to vector<256x3xbf16>
    %c6 = arith.constant 6 : index
    %c0_34 = arith.constant 0 : index
    %c0_35 = arith.constant 0 : index
    %54 = vector.load %arg5[%c6, %c0_34, %c0_35] : memref<9x3x16xbf16, #tpu.memory_space<vmem>>, vector<1x3x16xbf16>
    %55 = vector.shape_cast %54 : vector<1x3x16xbf16> to vector<3x16xbf16>
    %cst_36 = arith.constant dense<0.000000e+00> : vector<256x16xf32>
    %56 = tpu.matmul %53, %55, %cst_36 {dimension_numbers = #tpu.dot_dimension_numbers<[1], [0], [0], [1], [0, 0, 1, 1], [], []>} : vector<256x3xbf16>, vector<3x16xbf16>, vector<256x16xf32> -> vector<256x16xf32>
    %57 = arith.addf %50, %56 : vector<256x16xf32>
    %58 = vector.extract_strided_slice %3 {offsets = [1, 0, 0], sizes = [16, 16, 3], strides = [1, 1, 1]} : vector<17x17x3xf32> to vector<16x16x3xf32>
    %59 = vector.shape_cast %58 : vector<16x16x3xf32> to vector<256x3xf32>
    %60 = arith.truncf %59 : vector<256x3xf32> to vector<256x3xbf16>
    %c7 = arith.constant 7 : index
    %c0_37 = arith.constant 0 : index
    %c0_38 = arith.constant 0 : index
    %61 = vector.load %arg5[%c7, %c0_37, %c0_38] : memref<9x3x16xbf16, #tpu.memory_space<vmem>>, vector<1x3x16xbf16>
    %62 = vector.shape_cast %61 : vector<1x3x16xbf16> to vector<3x16xbf16>
    %cst_39 = arith.constant dense<0.000000e+00> : vector<256x16xf32>
    %63 = tpu.matmul %60, %62, %cst_39 {dimension_numbers = #tpu.dot_dimension_numbers<[1], [0], [0], [1], [0, 0, 1, 1], [], []>} : vector<256x3xbf16>, vector<3x16xbf16>, vector<256x16xf32> -> vector<256x16xf32>
    %64 = arith.addf %57, %63 : vector<256x16xf32>
    %65 = vector.extract_strided_slice %1 {offsets = [1, 1, 0], sizes = [16, 16, 3], strides = [1, 1, 1]} : vector<17x17x3xf32> to vector<16x16x3xf32>
    %66 = vector.shape_cast %65 : vector<16x16x3xf32> to vector<256x3xf32>
    %67 = arith.truncf %66 : vector<256x3xf32> to vector<256x3xbf16>
    %c8 = arith.constant 8 : index
    %c0_40 = arith.constant 0 : index
    %c0_41 = arith.constant 0 : index
    %68 = vector.load %arg5[%c8, %c0_40, %c0_41] : memref<9x3x16xbf16, #tpu.memory_space<vmem>>, vector<1x3x16xbf16>
    %69 = vector.shape_cast %68 : vector<1x3x16xbf16> to vector<3x16xbf16>
    %cst_42 = arith.constant dense<0.000000e+00> : vector<256x16xf32>
    %70 = tpu.matmul %67, %69, %cst_42 {dimension_numbers = #tpu.dot_dimension_numbers<[1], [0], [0], [1], [0, 0, 1, 1], [], []>} : vector<256x3xbf16>, vector<3x16xbf16>, vector<256x16xf32> -> vector<256x16xf32>
    %71 = arith.addf %64, %70 : vector<256x16xf32>
    %c0_43 = arith.constant 0 : index
    %c0_44 = arith.constant 0 : index
    %72 = vector.load %arg6[%c0_43, %c0_44] : memref<1x16xf32, #tpu.memory_space<vmem>>, vector<1x16xf32>
    %73 = vector.broadcast %72 : vector<1x16xf32> to vector<256x16xf32>
    %74 = arith.addf %71, %73 : vector<256x16xf32>
    %cst_45 = arith.constant 0.000000e+00 : f32
    %75 = vector.broadcast %cst_45 : f32 to vector<256x16xf32>
    %76 = arith.cmpf ogt, %74, %75 : vector<256x16xf32>
    %cst_46 = arith.constant 0.00999999977 : f32
    %77 = vector.broadcast %cst_46 : f32 to vector<256x16xf32>
    %78 = arith.mulf %77, %74 : vector<256x16xf32>
    %79 = arith.select %76, %74, %78 : vector<256x16xi1>, vector<256x16xf32>
    %80 = vector.shape_cast %79 : vector<256x16xf32> to vector<16x16x16xf32>
    %cst_47 = arith.constant 0.000000e+00 : f32
    %81 = vector.broadcast %cst_47 : f32 to vector<16x1x16xf32>
    %cst_48 = arith.constant 0.000000e+00 : f32
    %82 = vector.broadcast %cst_48 : f32 to vector<1x18x16xf32>
    %83 = tpu.concatenate %81, %80, %81 in 1 : vector<16x1x16xf32>, vector<16x16x16xf32>, vector<16x1x16xf32> -> vector<16x18x16xf32>
    %84 = tpu.concatenate %82, %83, %82 in 0 : vector<1x18x16xf32>, vector<16x18x16xf32>, vector<1x18x16xf32> -> vector<18x18x16xf32>
    %cst_49 = arith.constant 0.000000e+00 : f32
    %85 = vector.broadcast %cst_49 : f32 to vector<16x16x16xf32>
    %86 = vector.extract_strided_slice %84 {offsets = [0, 0, 0], sizes = [16, 16, 16], strides = [1, 1, 1]} : vector<18x18x16xf32> to vector<16x16x16xf32>
    %c0_50 = arith.constant 0 : index
    %c0_51 = arith.constant 0 : index
    %c0_52 = arith.constant 0 : index
    %87 = vector.load %arg7[%c0_50, %c0_51, %c0_52] : memref<9x1x16xf32, #tpu.memory_space<vmem>>, vector<1x1x16xf32>
    %88 = vector.shape_cast %87 : vector<1x1x16xf32> to vector<1x16xf32>
    %89 = vector.shape_cast %88 : vector<1x16xf32> to vector<1x1x16xf32>
    %90 = vector.broadcast %89 : vector<1x1x16xf32> to vector<16x16x16xf32>
    %91 = arith.mulf %86, %90 : vector<16x16x16xf32>
    %92 = arith.addf %85, %91 : vector<16x16x16xf32>
    %93 = vector.extract_strided_slice %84 {offsets = [0, 1, 0], sizes = [16, 16, 16], strides = [1, 1, 1]} : vector<18x18x16xf32> to vector<16x16x16xf32>
    %c1_53 = arith.constant 1 : index
    %c0_54 = arith.constant 0 : index
    %c0_55 = arith.constant 0 : index
    %94 = vector.load %arg7[%c1_53, %c0_54, %c0_55] : memref<9x1x16xf32, #tpu.memory_space<vmem>>, vector<1x1x16xf32>
    %95 = vector.shape_cast %94 : vector<1x1x16xf32> to vector<1x16xf32>
    %96 = vector.shape_cast %95 : vector<1x16xf32> to vector<1x1x16xf32>
    %97 = vector.broadcast %96 : vector<1x1x16xf32> to vector<16x16x16xf32>
    %98 = arith.mulf %93, %97 : vector<16x16x16xf32>
    %99 = arith.addf %92, %98 : vector<16x16x16xf32>
    %100 = vector.extract_strided_slice %84 {offsets = [0, 2, 0], sizes = [16, 16, 16], strides = [1, 1, 1]} : vector<18x18x16xf32> to vector<16x16x16xf32>
    %c2_56 = arith.constant 2 : index
    %c0_57 = arith.constant 0 : index
    %c0_58 = arith.constant 0 : index
    %101 = vector.load %arg7[%c2_56, %c0_57, %c0_58] : memref<9x1x16xf32, #tpu.memory_space<vmem>>, vector<1x1x16xf32>
    %102 = vector.shape_cast %101 : vector<1x1x16xf32> to vector<1x16xf32>
    %103 = vector.shape_cast %102 : vector<1x16xf32> to vector<1x1x16xf32>
    %104 = vector.broadcast %103 : vector<1x1x16xf32> to vector<16x16x16xf32>
    %105 = arith.mulf %100, %104 : vector<16x16x16xf32>
    %106 = arith.addf %99, %105 : vector<16x16x16xf32>
    %107 = vector.extract_strided_slice %84 {offsets = [1, 0, 0], sizes = [16, 16, 16], strides = [1, 1, 1]} : vector<18x18x16xf32> to vector<16x16x16xf32>
    %c3_59 = arith.constant 3 : index
    %c0_60 = arith.constant 0 : index
    %c0_61 = arith.constant 0 : index
    %108 = vector.load %arg7[%c3_59, %c0_60, %c0_61] : memref<9x1x16xf32, #tpu.memory_space<vmem>>, vector<1x1x16xf32>
    %109 = vector.shape_cast %108 : vector<1x1x16xf32> to vector<1x16xf32>
    %110 = vector.shape_cast %109 : vector<1x16xf32> to vector<1x1x16xf32>
    %111 = vector.broadcast %110 : vector<1x1x16xf32> to vector<16x16x16xf32>
    %112 = arith.mulf %107, %111 : vector<16x16x16xf32>
    %113 = arith.addf %106, %112 : vector<16x16x16xf32>
    %114 = vector.extract_strided_slice %84 {offsets = [1, 1, 0], sizes = [16, 16, 16], strides = [1, 1, 1]} : vector<18x18x16xf32> to vector<16x16x16xf32>
    %c4_62 = arith.constant 4 : index
    %c0_63 = arith.constant 0 : index
    %c0_64 = arith.constant 0 : index
    %115 = vector.load %arg7[%c4_62, %c0_63, %c0_64] : memref<9x1x16xf32, #tpu.memory_space<vmem>>, vector<1x1x16xf32>
    %116 = vector.shape_cast %115 : vector<1x1x16xf32> to vector<1x16xf32>
    %117 = vector.shape_cast %116 : vector<1x16xf32> to vector<1x1x16xf32>
    %118 = vector.broadcast %117 : vector<1x1x16xf32> to vector<16x16x16xf32>
    %119 = arith.mulf %114, %118 : vector<16x16x16xf32>
    %120 = arith.addf %113, %119 : vector<16x16x16xf32>
    %121 = vector.extract_strided_slice %84 {offsets = [1, 2, 0], sizes = [16, 16, 16], strides = [1, 1, 1]} : vector<18x18x16xf32> to vector<16x16x16xf32>
    %c5_65 = arith.constant 5 : index
    %c0_66 = arith.constant 0 : index
    %c0_67 = arith.constant 0 : index
    %122 = vector.load %arg7[%c5_65, %c0_66, %c0_67] : memref<9x1x16xf32, #tpu.memory_space<vmem>>, vector<1x1x16xf32>
    %123 = vector.shape_cast %122 : vector<1x1x16xf32> to vector<1x16xf32>
    %124 = vector.shape_cast %123 : vector<1x16xf32> to vector<1x1x16xf32>
    %125 = vector.broadcast %124 : vector<1x1x16xf32> to vector<16x16x16xf32>
    %126 = arith.mulf %121, %125 : vector<16x16x16xf32>
    %127 = arith.addf %120, %126 : vector<16x16x16xf32>
    %128 = vector.extract_strided_slice %84 {offsets = [2, 0, 0], sizes = [16, 16, 16], strides = [1, 1, 1]} : vector<18x18x16xf32> to vector<16x16x16xf32>
    %c6_68 = arith.constant 6 : index
    %c0_69 = arith.constant 0 : index
    %c0_70 = arith.constant 0 : index
    %129 = vector.load %arg7[%c6_68, %c0_69, %c0_70] : memref<9x1x16xf32, #tpu.memory_space<vmem>>, vector<1x1x16xf32>
    %130 = vector.shape_cast %129 : vector<1x1x16xf32> to vector<1x16xf32>
    %131 = vector.shape_cast %130 : vector<1x16xf32> to vector<1x1x16xf32>
    %132 = vector.broadcast %131 : vector<1x1x16xf32> to vector<16x16x16xf32>
    %133 = arith.mulf %128, %132 : vector<16x16x16xf32>
    %134 = arith.addf %127, %133 : vector<16x16x16xf32>
    %135 = vector.extract_strided_slice %84 {offsets = [2, 1, 0], sizes = [16, 16, 16], strides = [1, 1, 1]} : vector<18x18x16xf32> to vector<16x16x16xf32>
    %c7_71 = arith.constant 7 : index
    %c0_72 = arith.constant 0 : index
    %c0_73 = arith.constant 0 : index
    %136 = vector.load %arg7[%c7_71, %c0_72, %c0_73] : memref<9x1x16xf32, #tpu.memory_space<vmem>>, vector<1x1x16xf32>
    %137 = vector.shape_cast %136 : vector<1x1x16xf32> to vector<1x16xf32>
    %138 = vector.shape_cast %137 : vector<1x16xf32> to vector<1x1x16xf32>
    %139 = vector.broadcast %138 : vector<1x1x16xf32> to vector<16x16x16xf32>
    %140 = arith.mulf %135, %139 : vector<16x16x16xf32>
    %141 = arith.addf %134, %140 : vector<16x16x16xf32>
    %142 = vector.extract_strided_slice %84 {offsets = [2, 2, 0], sizes = [16, 16, 16], strides = [1, 1, 1]} : vector<18x18x16xf32> to vector<16x16x16xf32>
    %c8_74 = arith.constant 8 : index
    %c0_75 = arith.constant 0 : index
    %c0_76 = arith.constant 0 : index
    %143 = vector.load %arg7[%c8_74, %c0_75, %c0_76] : memref<9x1x16xf32, #tpu.memory_space<vmem>>, vector<1x1x16xf32>
    %144 = vector.shape_cast %143 : vector<1x1x16xf32> to vector<1x16xf32>
    %145 = vector.shape_cast %144 : vector<1x16xf32> to vector<1x1x16xf32>
    %146 = vector.broadcast %145 : vector<1x1x16xf32> to vector<16x16x16xf32>
    %147 = arith.mulf %142, %146 : vector<16x16x16xf32>
    %148 = arith.addf %141, %147 : vector<16x16x16xf32>
    %c0_77 = arith.constant 0 : index
    %c0_78 = arith.constant 0 : index
    %149 = vector.load %arg8[%c0_77, %c0_78] : memref<1x16xf32, #tpu.memory_space<vmem>>, vector<1x16xf32>
    %150 = vector.shape_cast %149 : vector<1x16xf32> to vector<1x1x16xf32>
    %151 = vector.broadcast %150 : vector<1x1x16xf32> to vector<16x16x16xf32>
    %152 = arith.addf %148, %151 : vector<16x16x16xf32>
    %cst_79 = arith.constant 0.000000e+00 : f32
    %153 = vector.broadcast %cst_79 : f32 to vector<16x16x16xf32>
    %154 = arith.cmpf ogt, %152, %153 : vector<16x16x16xf32>
    %cst_80 = arith.constant 0.00999999977 : f32
    %155 = vector.broadcast %cst_80 : f32 to vector<16x16x16xf32>
    %156 = arith.mulf %155, %152 : vector<16x16x16xf32>
    %157 = arith.select %154, %152, %156 : vector<16x16x16xi1>, vector<16x16x16xf32>
    %158 = vector.shape_cast %157 : vector<16x16x16xf32> to vector<1x16x16x16xf32>
    %c0_81 = arith.constant 0 : index
    %c0_82 = arith.constant 0 : index
    %c0_83 = arith.constant 0 : index
    %c0_84 = arith.constant 0 : index
    %159 = vector.load %arg11[%c0_81, %c0_82, %c0_83, %c0_84] : memref<1x16x16x16xf32, #tpu.memory_space<vmem>>, vector<1x16x16x16xf32>
    tpu.vector_store %arg11[%c0_81, %c0_82, %c0_83, %c0_84], %158 {strides = array<i32>} : memref<1x16x16x16xf32, #tpu.memory_space<vmem>>, vector<1x16x16x16xf32>,
    %160 = vector.shape_cast %157 : vector<16x16x16xf32> to vector<256x16xf32>
    %161 = arith.truncf %160 : vector<256x16xf32> to vector<256x16xbf16>
    %c0_85 = arith.constant 0 : index
    %c0_86 = arith.constant 0 : index
    %162 = vector.load %arg9[%c0_85, %c0_86] : memref<16x16xbf16, #tpu.memory_space<vmem>>, vector<16x16xbf16>
    %cst_87 = arith.constant dense<0.000000e+00> : vector<256x16xf32>
    %163 = tpu.matmul %161, %162, %cst_87 {dimension_numbers = #tpu.dot_dimension_numbers<[1], [0], [0], [1], [0, 0, 1, 1], [], []>} : vector<256x16xbf16>, vector<16x16xbf16>, vector<256x16xf32> -> vector<256x16xf32>
    %c0_88 = arith.constant 0 : index
    %c0_89 = arith.constant 0 : index
    %164 = vector.load %arg10[%c0_88, %c0_89] : memref<1x16xf32, #tpu.memory_space<vmem>>, vector<1x16xf32>
    %165 = vector.broadcast %164 : vector<1x16xf32> to vector<256x16xf32>
    %166 = arith.addf %163, %165 : vector<256x16xf32>
    %cst_90 = arith.constant 0.000000e+00 : f32
    %167 = vector.broadcast %cst_90 : f32 to vector<256x16xf32>
    %168 = arith.maximumf %166, %167 : vector<256x16xf32>
    %169 = vector.shape_cast %168 : vector<256x16xf32> to vector<1x16x16x16xf32>
    %c0_91 = arith.constant 0 : index
    %c0_92 = arith.constant 0 : index
    %c0_93 = arith.constant 0 : index
    %c0_94 = arith.constant 0 : index
    %170 = vector.load %arg12[%c0_91, %c0_92, %c0_93, %c0_94] : memref<1x16x16x16xf32, #tpu.memory_space<vmem>>, vector<1x16x16x16xf32>
    tpu.vector_store %arg12[%c0_91, %c0_92, %c0_93, %c0_94], %169 {strides = array<i32>} : memref<1x16x16x16xf32, #tpu.memory_space<vmem>>, vector<1x16x16x16xf32>,
    return
  }
  func.func @transform_0(%arg0: i32) -> (i32, i32, i32, i32) {
    %c0_i32 = arith.constant 0 : i32
    %c0_i32_0 = arith.constant 0 : i32
    %c0_i32_1 = arith.constant 0 : i32
    %c0_i32_2 = arith.constant 0 : i32
    return %arg0, %c0_i32, %c0_i32_0, %c0_i32_1 : i32, i32, i32, i32
  }
  func.func @transform_1(%arg0: i32) -> (i32, i32, i32, i32) {
    %c0_i32 = arith.constant 0 : i32
    %c0_i32_0 = arith.constant 0 : i32
    %c0_i32_1 = arith.constant 0 : i32
    %c0_i32_2 = arith.constant 0 : i32
    return %arg0, %c0_i32, %c0_i32_0, %c0_i32_1 : i32, i32, i32, i32
  }
  func.func @transform_2(%arg0: i32) -> (i32, i32, i32, i32) {
    %c0_i32 = arith.constant 0 : i32
    %c0_i32_0 = arith.constant 0 : i32
    %c0_i32_1 = arith.constant 0 : i32
    %c0_i32_2 = arith.constant 0 : i32
    return %arg0, %c0_i32, %c0_i32_0, %c0_i32_1 : i32, i32, i32, i32
  }
  func.func @transform_3(%arg0: i32) -> (i32, i32, i32, i32) {
    %c0_i32 = arith.constant 0 : i32
    %c0_i32_0 = arith.constant 0 : i32
    %c0_i32_1 = arith.constant 0 : i32
    %c0_i32_2 = arith.constant 0 : i32
    return %arg0, %c0_i32, %c0_i32_0, %c0_i32_1 : i32, i32, i32, i32
  }
  func.func @transform_4(%arg0: i32) -> (i32, i32, i32) {
    %c0_i32 = arith.constant 0 : i32
    %c0_i32_0 = arith.constant 0 : i32
    %c0_i32_1 = arith.constant 0 : i32
    %c0_i32_2 = arith.constant 0 : i32
    return %c0_i32, %c0_i32_0, %c0_i32_1 : i32, i32, i32
  }
  func.func @transform_5(%arg0: i32) -> (i32, i32) {
    %c0_i32 = arith.constant 0 : i32
    %c0_i32_0 = arith.constant 0 : i32
    %c0_i32_1 = arith.constant 0 : i32
    return %c0_i32, %c0_i32_0 : i32, i32
  }
  func.func @transform_6(%arg0: i32) -> (i32, i32, i32) {
    %c0_i32 = arith.constant 0 : i32
    %c0_i32_0 = arith.constant 0 : i32
    %c0_i32_1 = arith.constant 0 : i32
    %c0_i32_2 = arith.constant 0 : i32
    return %c0_i32, %c0_i32_0, %c0_i32_1 : i32, i32, i32
  }
  func.func @transform_7(%arg0: i32) -> (i32, i32) {
    %c0_i32 = arith.constant 0 : i32
    %c0_i32_0 = arith.constant 0 : i32
    %c0_i32_1 = arith.constant 0 : i32
    return %c0_i32, %c0_i32_0 : i32, i32
  }
  func.func @transform_8(%arg0: i32) -> (i32, i32) {
    %c0_i32 = arith.constant 0 : i32
    %c0_i32_0 = arith.constant 0 : i32
    %c0_i32_1 = arith.constant 0 : i32
    return %c0_i32, %c0_i32_0 : i32, i32
  }
  func.func @transform_9(%arg0: i32) -> (i32, i32) {
    %c0_i32 = arith.constant 0 : i32
    %c0_i32_0 = arith.constant 0 : i32
    %c0_i32_1 = arith.constant 0 : i32
    return %c0_i32, %c0_i32_0 : i32, i32
  }
  func.func @transform_10(%arg0: i32) -> (i32, i32, i32, i32) {
    %c0_i32 = arith.constant 0 : i32
    %c0_i32_0 = arith.constant 0 : i32
    %c0_i32_1 = arith.constant 0 : i32
    %c0_i32_2 = arith.constant 0 : i32
    return %arg0, %c0_i32, %c0_i32_0, %c0_i32_1 : i32, i32, i32, i32
  }
  func.func @transform_11(%arg0: i32) -> (i32, i32, i32, i32) {
    %c0_i32 = arith.constant 0 : i32
    %c0_i32_0 = arith.constant 0 : i32
    %c0_i32_1 = arith.constant 0 : i32
    %c0_i32_2 = arith.constant 0 : i32
    return %arg0, %c0_i32, %c0_i32_0, %c0_i32_1 : i32, i32, i32, i32
  }
}

</mosaic_0001>

<llo_original>
// kernel: tpu_custom_call.1
$region0: #{tpu_custom_call.1}
  #allocation0 [shape = 'u32[]', space=smem, size = 0x4, offset = 0x4, fixed_abs, tag = 'smem constant byte address 0x4 - core index']
  #allocation1 [shape = 'u32[144,128]{1,0:T(1,128)}', space=vmem, size = 0x12000, scoped, tag = 'internal scratch']
  %s0 = inlined_call_operand.vmem [shape: f32[2,17,17,3], index: 0, kind: input, shape index: {}]
  %s1 = inlined_call_operand.vmem [shape: f32[2,17,17,3], index: 1, kind: input, shape index: {}]
  %s2 = inlined_call_operand.vmem [shape: f32[2,17,17,3], index: 2, kind: input, shape index: {}]
  %s3 = inlined_call_operand.vmem [shape: f32[2,17,17,3], index: 3, kind: input, shape index: {}]
  %s4 = inlined_call_operand.vmem [shape: bf16[9,3,16], index: 4, kind: input, shape index: {}]
  %s5 = inlined_call_operand.vmem [shape: f32[1,16], index: 5, kind: input, shape index: {}]
  %s6 = inlined_call_operand.vmem [shape: f32[9,1,16], index: 6, kind: input, shape index: {}]
  %s7 = inlined_call_operand.vmem [shape: f32[1,16], index: 7, kind: input, shape index: {}]
  %s8 = inlined_call_operand.vmem [shape: bf16[16,16], index: 8, kind: input, shape index: {}]
  %s9 = inlined_call_operand.vmem [shape: f32[1,16], index: 9, kind: input, shape index: {}]
  %s10 = inlined_call_operand.hbm [shape: f32[2,16,16,16], index: 10, kind: output, shape index: {0}]
  %s11 = inlined_call_operand.hbm [shape: f32[2,16,16,16], index: 11, kind: output, shape index: {1}]
  %12 = xla_tuple %s10, %s11
  %s13 = sld [smem:[#allocation0]]
  $region81: #{tpu_custom_call.1} parent=0
    _
  %s15 = ssub.s32 1, %s13
  %s16 = scalar_select 0, %s15, %s13
  $region1: #{tpu_custom_call.1} parent=0
    #allocation2 [shape = 'u8[262144]{0}', space=vmem, size = 0x40000, scoped, tag = 'output window, operand 0']
    #allocation3 [shape = 's32[2]{0}', space=sflag, size = 0x8, scoped, tag = 'scoped memory for tpu_custom_call.1']
    #allocation4 [shape = 'u8[262144]{0}', space=vmem, size = 0x40000, scoped, tag = 'output window, operand 1']
    #allocation5 [shape = 's32[2]{0}', space=sflag, size = 0x8, scoped, tag = 'scoped memory for tpu_custom_call.1']
    %17 = vsyncpa [#allocation3], 0
    %s18 = scalar_lea.sflag [#allocation3], 1
    %19 = vsyncpa %s18, 0
    %20 = vsyncpa [#allocation5], 0
    %s21 = scalar_lea.sflag [#allocation5], 1
    %22 = vsyncpa %s21, 0
    loop: start=0, step=1, limit=4
    $region2: #{tpu_custom_call.1} parent=1 // loop_pre_header
      _
    $region3: #{tpu_custom_call.1} parent=1 // loop_header
      %s24 = sphi 0, %s28
      %p25 = scmp.ge.s32.totalorder %s24, 4
      %s34 = sphi 0, %s36
      %s37 = sphi 0, %s34
      %s38 = sphi 0, %s37
      %s54 = sphi 0, %s38
      %s60 = sphi 0, %s62
      %s63 = sphi 0, %s60
      %s64 = sphi 0, %s63
      %s80 = sphi 0, %s64
      %s86 = sphi 0, %s88
      %s89 = sphi 0, %s86
      %s90 = sphi 0, %s89
      %s106 = sphi 0, %s90
      %s112 = sphi 0, %s114
      %s115 = sphi 0, %s112
      %s116 = sphi 0, %s115
      %s132 = sphi 0, %s116
      %s136 = sphi 0, %s136
      %s138 = sphi 0, %s136
      %s139 = sphi 0, %s138
      %s153 = sphi 0, %s139
      %s157 = sphi 0, %s157
      %s159 = sphi 0, %s157
      %s160 = sphi 0, %s159
      %s174 = sphi 0, %s160
      %s178 = sphi 0, %s178
      %s180 = sphi 0, %s178
      %s181 = sphi 0, %s180
      %s195 = sphi 0, %s181
      %s199 = sphi 0, %s199
      %s201 = sphi 0, %s199
      %s202 = sphi 0, %s201
      %s216 = sphi 0, %s202
      %s220 = sphi 0, %s220
      %s222 = sphi 0, %s220
      %s223 = sphi 0, %s222
      %s237 = sphi 0, %s223
      %s241 = sphi 0, %s241
      %s243 = sphi 0, %s241
      %s244 = sphi 0, %s243
      %s258 = sphi 0, %s244
      %s264 = sphi 0, %s266
      %s267 = sphi 0, %s264
      %s268 = sphi 0, %s267
      %s284 = sphi 0, %s268
      %s290 = sphi 0, %s292
      %s293 = sphi 0, %s290
      %s294 = sphi 0, %s293
      %s310 = sphi 0, %s294
    $region4: #{tpu_custom_call.1} parent=1 // loop_header_branch
      %27 = sbr.rel (%p25) target = $region8
    $region5: #{tpu_custom_call.1} parent=1 // loop_body
      %s29 = ssub.s32 %s24, 1
      %s30 = ssub.s32 %s24, 2
      %s31 = sadd.s32 %s24, 1
      %s32 = ssub.s32 %s24, %s31
      %p33 = scmp.eq.s32.totalorder %s32, 0
      %s35 = sadd.s32 %s34, 1
      %s36 = scalar_select %p33, %s34, %s35
      %p39 = pneg %p33
      %p40 = scmp.eq.s32.totalorder %s24, 1
      %p41 = por %p39, %p40
      %p42 = scmp.ne.s32.totalorder %s34, %s37
      %p43 = scmp.eq.s32.totalorder %s24, 0
      %p44 = por %p42, %p43
      %p45 = scmp.ne.s32.totalorder %s34, %s37
      %p46 = scmp.eq.s32.totalorder %s29, 1
      %p47 = por %p45, %p46
      %p48 = scmp.ne.s32.totalorder %s37, %s38
      %p49 = scmp.eq.s32.totalorder %s29, 0
      %p50 = por %p48, %p49
      %p51 = scmp.ne.s32.totalorder %s37, %s38
      %p52 = scmp.eq.s32.totalorder %s30, 1
      %p53 = por %p51, %p52
      %p55 = scmp.ne.s32.totalorder %s38, %s54
      %p56 = scmp.eq.s32.totalorder %s30, 0
      %p57 = por %p55, %p56
      %s58 = ssub.s32 %s24, %s31
      %p59 = scmp.eq.s32.totalorder %s58, 0
      %s61 = sadd.s32 %s60, 1
      %s62 = scalar_select %p59, %s60, %s61
      %p65 = pneg %p59
      %p66 = scmp.eq.s32.totalorder %s24, 1
      %p67 = por %p65, %p66
      %p68 = scmp.ne.s32.totalorder %s60, %s63
      %p69 = scmp.eq.s32.totalorder %s24, 0
      %p70 = por %p68, %p69
      %p71 = scmp.ne.s32.totalorder %s60, %s63
      %p72 = scmp.eq.s32.totalorder %s29, 1
      %p73 = por %p71, %p72
      %p74 = scmp.ne.s32.totalorder %s63, %s64
      %p75 = scmp.eq.s32.totalorder %s29, 0
      %p76 = por %p74, %p75
      %p77 = scmp.ne.s32.totalorder %s63, %s64
      %p78 = scmp.eq.s32.totalorder %s30, 1
      %p79 = por %p77, %p78
      %p81 = scmp.ne.s32.totalorder %s64, %s80
      %p82 = scmp.eq.s32.totalorder %s30, 0
      %p83 = por %p81, %p82
      %s84 = ssub.s32 %s24, %s31
      %p85 = scmp.eq.s32.totalorder %s84, 0
      %s87 = sadd.s32 %s86, 1
      %s88 = scalar_select %p85, %s86, %s87
      %p91 = pneg %p85
      %p92 = scmp.eq.s32.totalorder %s24, 1
      %p93 = por %p91, %p92
      %p94 = scmp.ne.s32.totalorder %s86, %s89
      %p95 = scmp.eq.s32.totalorder %s24, 0
      %p96 = por %p94, %p95
      %p97 = scmp.ne.s32.totalorder %s86, %s89
      %p98 = scmp.eq.s32.totalorder %s29, 1
      %p99 = por %p97, %p98
      %p100 = scmp.ne.s32.totalorder %s89, %s90
      %p101 = scmp.eq.s32.totalorder %s29, 0
      %p102 = por %p100, %p101
      %p103 = scmp.ne.s32.totalorder %s89, %s90
      %p104 = scmp.eq.s32.totalorder %s30, 1
      %p105 = por %p103, %p104
      %p107 = scmp.ne.s32.totalorder %s90, %s106
      %p108 = scmp.eq.s32.totalorder %s30, 0
      %p109 = por %p107, %p108
      %s110 = ssub.s32 %s24, %s31
      %p111 = scmp.eq.s32.totalorder %s110, 0
      %s113 = sadd.s32 %s112, 1
      %s114 = scalar_select %p111, %s112, %s113
      %p117 = pneg %p111
      %p118 = scmp.eq.s32.totalorder %s24, 1
      %p119 = por %p117, %p118
      %p120 = scmp.ne.s32.totalorder %s112, %s115
      %p121 = scmp.eq.s32.totalorder %s24, 0
      %p122 = por %p120, %p121
      %p123 = scmp.ne.s32.totalorder %s112, %s115
      %p124 = scmp.eq.s32.totalorder %s29, 1
      %p125 = por %p123, %p124
      %p126 = scmp.ne.s32.totalorder %s115, %s116
      %p127 = scmp.eq.s32.totalorder %s29, 0
      %p128 = por %p126, %p127
      %p129 = scmp.ne.s32.totalorder %s115, %s116
      %p130 = scmp.eq.s32.totalorder %s30, 1
      %p131 = por %p129, %p130
      %p133 = scmp.ne.s32.totalorder %s116, %s132
      %p134 = scmp.eq.s32.totalorder %s30, 0
      %p135 = por %p133, %p134
      %s137 = sadd.s32 %s136, 1
      %p140 = scmp.eq.s32.totalorder %s24, 1
      %p141 = scmp.ne.s32.totalorder %s136, %s138
      %p142 = scmp.eq.s32.totalorder %s24, 0
      %p143 = por %p141, %p142
      %p144 = scmp.ne.s32.totalorder %s136, %s138
      %p145 = scmp.eq.s32.totalorder %s29, 1
      %p146 = por %p144, %p145
      %p147 = scmp.ne.s32.totalorder %s138, %s139
      %p148 = scmp.eq.s32.totalorder %s29, 0
      %p149 = por %p147, %p148
      %p150 = scmp.ne.s32.totalorder %s138, %s139
      %p151 = scmp.eq.s32.totalorder %s30, 1
      %p152 = por %p150, %p151
      %p154 = scmp.ne.s32.totalorder %s139, %s153
      %p155 = scmp.eq.s32.totalorder %s30, 0
      %p156 = por %p154, %p155
      %s158 = sadd.s32 %s157, 1
      %p161 = scmp.eq.s32.totalorder %s24, 1
      %p162 = scmp.ne.s32.totalorder %s157, %s159
      %p163 = scmp.eq.s32.totalorder %s24, 0
      %p164 = por %p162, %p163
      %p165 = scmp.ne.s32.totalorder %s157, %s159
      %p166 = scmp.eq.s32.totalorder %s29, 1
      %p167 = por %p165, %p166
      %p168 = scmp.ne.s32.totalorder %s159, %s160
      %p169 = scmp.eq.s32.totalorder %s29, 0
      %p170 = por %p168, %p169
      %p171 = scmp.ne.s32.totalorder %s159, %s160
      %p172 = scmp.eq.s32.totalorder %s30, 1
      %p173 = por %p171, %p172
      %p175 = scmp.ne.s32.totalorder %s160, %s174
      %p176 = scmp.eq.s32.totalorder %s30, 0
      %p177 = por %p175, %p176
      %s179 = sadd.s32 %s178, 1
      %p182 = scmp.eq.s32.totalorder %s24, 1
      %p183 = scmp.ne.s32.totalorder %s178, %s180
      %p184 = scmp.eq.s32.totalorder %s24, 0
      %p185 = por %p183, %p184
      %p186 = scmp.ne.s32.totalorder %s178, %s180
      %p187 = scmp.eq.s32.totalorder %s29, 1
      %p188 = por %p186, %p187
      %p189 = scmp.ne.s32.totalorder %s180, %s181
      %p190 = scmp.eq.s32.totalorder %s29, 0
      %p191 = por %p189, %p190
      %p192 = scmp.ne.s32.totalorder %s180, %s181
      %p193 = scmp.eq.s32.totalorder %s30, 1
      %p194 = por %p192, %p193
      %p196 = scmp.ne.s32.totalorder %s181, %s195
      %p197 = scmp.eq.s32.totalorder %s30, 0
      %p198 = por %p196, %p197
      %s200 = sadd.s32 %s199, 1
      %p203 = scmp.eq.s32.totalorder %s24, 1
      %p204 = scmp.ne.s32.totalorder %s199, %s201
      %p205 = scmp.eq.s32.totalorder %s24, 0
      %p206 = por %p204, %p205
      %p207 = scmp.ne.s32.totalorder %s199, %s201
      %p208 = scmp.eq.s32.totalorder %s29, 1
      %p209 = por %p207, %p208
      %p210 = scmp.ne.s32.totalorder %s201, %s202
      %p211 = scmp.eq.s32.totalorder %s29, 0
      %p212 = por %p210, %p211
      %p213 = scmp.ne.s32.totalorder %s201, %s202
      %p214 = scmp.eq.s32.totalorder %s30, 1
      %p215 = por %p213, %p214
      %p217 = scmp.ne.s32.totalorder %s202, %s216
      %p218 = scmp.eq.s32.totalorder %s30, 0
      %p219 = por %p217, %p218
      %s221 = sadd.s32 %s220, 1
      %p224 = scmp.eq.s32.totalorder %s24, 1
      %p225 = scmp.ne.s32.totalorder %s220, %s222
      %p226 = scmp.eq.s32.totalorder %s24, 0
      %p227 = por %p225, %p226
      %p228 = scmp.ne.s32.totalorder %s220, %s222
      %p229 = scmp.eq.s32.totalorder %s29, 1
      %p230 = por %p228, %p229
      %p231 = scmp.ne.s32.totalorder %s222, %s223
      %p232 = scmp.eq.s32.totalorder %s29, 0
      %p233 = por %p231, %p232
      %p234 = scmp.ne.s32.totalorder %s222, %s223
      %p235 = scmp.eq.s32.totalorder %s30, 1
      %p236 = por %p234, %p235
      %p238 = scmp.ne.s32.totalorder %s223, %s237
      %p239 = scmp.eq.s32.totalorder %s30, 0
      %p240 = por %p238, %p239
      %s242 = sadd.s32 %s241, 1
      %p245 = scmp.eq.s32.totalorder %s24, 1
      %p246 = scmp.ne.s32.totalorder %s241, %s243
      %p247 = scmp.eq.s32.totalorder %s24, 0
      %p248 = por %p246, %p247
      %p249 = scmp.ne.s32.totalorder %s241, %s243
      %p250 = scmp.eq.s32.totalorder %s29, 1
      %p251 = por %p249, %p250
      %p252 = scmp.ne.s32.totalorder %s243, %s244
      %p253 = scmp.eq.s32.totalorder %s29, 0
      %p254 = por %p252, %p253
      %p255 = scmp.ne.s32.totalorder %s243, %s244
      %p256 = scmp.eq.s32.totalorder %s30, 1
      %p257 = por %p255, %p256
      %p259 = scmp.ne.s32.totalorder %s244, %s258
      %p260 = scmp.eq.s32.totalorder %s30, 0
      %p261 = por %p259, %p260
      %s262 = ssub.s32 %s24, %s31
      %p263 = scmp.eq.s32.totalorder %s262, 0
      %s265 = sadd.s32 %s264, 1
      %s266 = scalar_select %p263, %s264, %s265
      %p269 = pneg %p263
      %p270 = scmp.eq.s32.totalorder %s24, 1
      %p271 = por %p269, %p270
      %p272 = scmp.ne.s32.totalorder %s264, %s267
      %p273 = scmp.eq.s32.totalorder %s24, 0
      %p274 = por %p272, %p273
      %p275 = scmp.ne.s32.totalorder %s264, %s267
      %p276 = scmp.eq.s32.totalorder %s29, 1
      %p277 = por %p275, %p276
      %p278 = scmp.ne.s32.totalorder %s267, %s268
      %p279 = scmp.eq.s32.totalorder %s29, 0
      %p280 = por %p278, %p279
      %p281 = scmp.ne.s32.totalorder %s267, %s268
      %p282 = scmp.eq.s32.totalorder %s30, 1
      %p283 = por %p281, %p282
      %p285 = scmp.ne.s32.totalorder %s268, %s284
      %p286 = scmp.eq.s32.totalorder %s30, 0
      %p287 = por %p285, %p286
      %s288 = ssub.s32 %s24, %s31
      %p289 = scmp.eq.s32.totalorder %s288, 0
      %s291 = sadd.s32 %s290, 1
      %s292 = scalar_select %p289, %s290, %s291
      %p295 = pneg %p289
      %p296 = scmp.eq.s32.totalorder %s24, 1
      %p297 = por %p295, %p296
      %p298 = scmp.ne.s32.totalorder %s290, %s293
      %p299 = scmp.eq.s32.totalorder %s24, 0
      %p300 = por %p298, %p299
      %p301 = scmp.ne.s32.totalorder %s290, %s293
      %p302 = scmp.eq.s32.totalorder %s29, 1
      %p303 = por %p301, %p302
      %p304 = scmp.ne.s32.totalorder %s293, %s294
      %p305 = scmp.eq.s32.totalorder %s29, 0
      %p306 = por %p304, %p305
      %p307 = scmp.ne.s32.totalorder %s293, %s294
      %p308 = scmp.eq.s32.totalorder %s30, 1
      %p309 = por %p307, %p308
      %p311 = scmp.ne.s32.totalorder %s294, %s310
      %p312 = scmp.eq.s32.totalorder %s30, 0
      %p313 = por %p311, %p312
      %p314 = scmp.le.s32.totalorder 1, %s24
      %p315 = scmp.lt.s32.totalorder %s24, 3
      %p316 = pnand %p314, %p315
      %p317 = pneg %p316
      // Predicated region
      $region9: #{tpu_custom_call.1} parent=5 // pred_check
        _
      $region10: #{tpu_custom_call.1} parent=5 // pred_check_branch
        %319 = sbr.rel (%p316) target = $region12
      $region11: #{tpu_custom_call.1} parent=5 // pred_region
        %s320 = ssub.s32 %s24, 1
        // Predicated region
        $region13: #{tpu_custom_call.1} parent=11 // pred_check
          %p321 = pneg %p149
        $region14: #{tpu_custom_call.1} parent=11 // pred_check_branch
          %323 = sbr.rel (%p321) target = $region16
        $region15: #{tpu_custom_call.1} parent=11 // pred_region
          _
        $region16: #{tpu_custom_call.1} parent=11 // pred_fallthru
          _
        // Predicated region
        $region17: #{tpu_custom_call.1} parent=11 // pred_check
          %p324 = pneg %p170
        $region18: #{tpu_custom_call.1} parent=11 // pred_check_branch
          %326 = sbr.rel (%p324) target = $region20
        $region19: #{tpu_custom_call.1} parent=11 // pred_region
          _
        $region20: #{tpu_custom_call.1} parent=11 // pred_fallthru
          _
        // Predicated region
        $region21: #{tpu_custom_call.1} parent=11 // pred_check
          %p327 = pneg %p191
        $region22: #{tpu_custom_call.1} parent=11 // pred_check_branch
          %329 = sbr.rel (%p327) target = $region24
        $region23: #{tpu_custom_call.1} parent=11 // pred_region
          _
        $region24: #{tpu_custom_call.1} parent=11 // pred_fallthru
          _
        // Predicated region
        $region25: #{tpu_custom_call.1} parent=11 // pred_check
          %p330 = pneg %p212
        $region26: #{tpu_custom_call.1} parent=11 // pred_check_branch
          %332 = sbr.rel (%p330) target = $region28
        $region27: #{tpu_custom_call.1} parent=11 // pred_region
          _
        $region28: #{tpu_custom_call.1} parent=11 // pred_fallthru
          _
        // Predicated region
        $region29: #{tpu_custom_call.1} parent=11 // pred_check
          %p333 = pneg %p233
        $region30: #{tpu_custom_call.1} parent=11 // pred_check_branch
          %335 = sbr.rel (%p333) target = $region32
        $region31: #{tpu_custom_call.1} parent=11 // pred_region
          _
        $region32: #{tpu_custom_call.1} parent=11 // pred_fallthru
          _
        // Predicated region
        $region33: #{tpu_custom_call.1} parent=11 // pred_check
          %p336 = pneg %p254
        $region34: #{tpu_custom_call.1} parent=11 // pred_check_branch
          %338 = sbr.rel (%p336) target = $region36
        $region35: #{tpu_custom_call.1} parent=11 // pred_region
          _
        $region36: #{tpu_custom_call.1} parent=11 // pred_fallthru
          _
      $region12: #{tpu_custom_call.1} parent=5 // pred_fallthru
        _
      %p339 = scmp.lt.s32.totalorder %s24, 2
      // Predicated region
      $region37: #{tpu_custom_call.1} parent=5 // pred_check
        %p340 = pneg %p339
      $region38: #{tpu_custom_call.1} parent=5 // pred_check_branch
        %342 = sbr.rel (%p340) target = $region40
      $region39: #{tpu_custom_call.1} parent=5 // pred_region
        // Predicated region
        $region41: #{tpu_custom_call.1} parent=39 // pred_check
          %p343 = pneg %p44
        $region42: #{tpu_custom_call.1} parent=39 // pred_check_branch
          %345 = sbr.rel (%p343) target = $region44
        $region43: #{tpu_custom_call.1} parent=39 // pred_region
          %p346 = scmp.lt.s32.totalorder %s24, 1
          %s347 = scalar_select %p346, %s24, 1
          %s348 = smul.addr %s347, 51
          %s349 = smul.addr %s348, 8
          %s350 = scalar_lea.vmem %s0, %s349
        $region44: #{tpu_custom_call.1} parent=39 // pred_fallthru
          _
        // Predicated region
        $region45: #{tpu_custom_call.1} parent=39 // pred_check
          %p351 = pneg %p70
        $region46: #{tpu_custom_call.1} parent=39 // pred_check_branch
          %353 = sbr.rel (%p351) target = $region48
        $region47: #{tpu_custom_call.1} parent=39 // pred_region
          %p354 = scmp.lt.s32.totalorder %s24, 1
          %s355 = scalar_select %p354, %s24, 1
          %s356 = smul.addr %s355, 51
          %s357 = smul.addr %s356, 8
          %s358 = scalar_lea.vmem %s1, %s357
        $region48: #{tpu_custom_call.1} parent=39 // pred_fallthru
          _
        // Predicated region
        $region49: #{tpu_custom_call.1} parent=39 // pred_check
          %p359 = pneg %p96
        $region50: #{tpu_custom_call.1} parent=39 // pred_check_branch
          %361 = sbr.rel (%p359) target = $region52
        $region51: #{tpu_custom_call.1} parent=39 // pred_region
          %p362 = scmp.lt.s32.totalorder %s24, 1
          %s363 = scalar_select %p362, %s24, 1
          %s364 = smul.addr %s363, 51
          %s365 = smul.addr %s364, 8
          %s366 = scalar_lea.vmem %s2, %s365
        $region52: #{tpu_custom_call.1} parent=39 // pred_fallthru
          _
        // Predicated region
        $region53: #{tpu_custom_call.1} parent=39 // pred_check
          %p367 = pneg %p122
        $region54: #{tpu_custom_call.1} parent=39 // pred_check_branch
          %369 = sbr.rel (%p367) target = $region56
        $region55: #{tpu_custom_call.1} parent=39 // pred_region
          %p370 = scmp.lt.s32.totalorder %s24, 1
          %s371 = scalar_select %p370, %s24, 1
          %s372 = smul.addr %s371, 51
          %s373 = smul.addr %s372, 8
          %s374 = scalar_lea.vmem %s3, %s373
        $region56: #{tpu_custom_call.1} parent=39 // pred_fallthru
          _
      $region40: #{tpu_custom_call.1} parent=5 // pred_fallthru
        _
      %p375 = scmp.le.s32.totalorder 1, %s24
      %p376 = scmp.lt.s32.totalorder %s24, 3
      %p377 = pnand %p375, %p376
      %p378 = pneg %p377
      // Predicated region
      $region57: #{tpu_custom_call.1} parent=5 // pred_check
        _
      $region58: #{tpu_custom_call.1} parent=5 // pred_check_branch
        %380 = sbr.rel (%p377) target = $region60
      $region59: #{tpu_custom_call.1} parent=5 // pred_region
        %s381 = ssub.s32 %s24, 1
        %p382 = scmp.lt.s32.totalorder %s29, 1
        %s383 = scalar_select %p382, %s29, 1
        %s384 = smul.addr %s383, 51
        %s385 = smul.addr %s384, 8
        %s386 = scalar_lea.vmem %s0, %s385
        %p387 = pneg %p50
        %p388 = pneg %p47
        %p389 = scmp.lt.s32.totalorder %s29, 1
        %s390 = scalar_select %p389, %s29, 1
        %s391 = smul.addr %s390, 51
        %s392 = smul.addr %s391, 8
        %s393 = scalar_lea.vmem %s1, %s392
        %p394 = pneg %p76
        %p395 = pneg %p73
        %p396 = scmp.lt.s32.totalorder %s29, 1
        %s397 = scalar_select %p396, %s29, 1
        %s398 = smul.addr %s397, 51
        %s399 = smul.addr %s398, 8
        %s400 = scalar_lea.vmem %s2, %s399
        %p401 = pneg %p102
        %p402 = pneg %p99
        %p403 = scmp.lt.s32.totalorder %s29, 1
        %s404 = scalar_select %p403, %s29, 1
        %s405 = smul.addr %s404, 51
        %s406 = smul.addr %s405, 8
        %s407 = scalar_lea.vmem %s3, %s406
        %p408 = pneg %p128
        %p409 = pneg %p125
        %p410 = pneg %p149
        %p411 = pneg %p146
        %p412 = pneg %p170
        %p413 = pneg %p167
        %p414 = pneg %p191
        %p415 = pneg %p188
        %p416 = pneg %p212
        %p417 = pneg %p209
        %p418 = pneg %p233
        %p419 = pneg %p230
        %p420 = pneg %p254
        %p421 = pneg %p251
        %p422 = pneg %p280
        %p423 = pneg %p277
        %s424 = sand.u32 %s267, 1
        %s425 = scalar_lea.sflag [#allocation3], %s424
        %s426 = sand.u32 %s267, 1
        %s427 = smul.addr %s426, 256
        %s428 = scalar_lea.vmem [#allocation2], %s427
        %p429 = pneg %p306
        %p430 = pneg %p303
        %s431 = sand.u32 %s293, 1
        %s432 = scalar_lea.sflag [#allocation5], %s431
        %s433 = sand.u32 %s293, 1
        %s434 = smul.addr %s433, 256
        %s435 = scalar_lea.vmem [#allocation4], %s434
        %p436 = scmp.lt.s32.totalorder %s29, 1
        %s437 = scalar_select %p436, %s29, 1
        %s438 = smul.addr %s437, 51
        %s439 = smul.addr %s438, 8
        %s440 = scalar_lea.vmem %s0, %s439
        %p441 = scmp.lt.s32.totalorder %s29, 1
        %s442 = scalar_select %p441, %s29, 1
        %s443 = smul.addr %s442, 51
        %s444 = smul.addr %s443, 8
        %s445 = scalar_lea.vmem %s1, %s444
        %p446 = scmp.lt.s32.totalorder %s29, 1
        %s447 = scalar_select %p446, %s29, 1
        %s448 = smul.addr %s447, 51
        %s449 = smul.addr %s448, 8
        %s450 = scalar_lea.vmem %s2, %s449
        %p451 = scmp.lt.s32.totalorder %s29, 1
        %s452 = scalar_select %p451, %s29, 1
        %s453 = smul.addr %s452, 51
        %s454 = smul.addr %s453, 8
        %s455 = scalar_lea.vmem %s3, %s454
        %v457 = vld [vmem:[%s440] sm:$0xff]
        %v458 = vld [vmem:[%s440 + $0x8] sm:$0xff]
        %v459 = vld [vmem:[%s440 + $0x10] sm:$0x1]
        %v460 = vld [vmem:[%s440 + $0x18] sm:$0xff]
        %v461 = vld [vmem:[%s440 + $0x20] sm:$0xff]
        %v462 = vld [vmem:[%s440 + $0x28] sm:$0x1]
        %v463 = vld [vmem:[%s440 + $0x30] sm:$0xff]
        %v464 = vld [vmem:[%s440 + $0x38] sm:$0xff]
        %v465 = vld [vmem:[%s440 + $0x40] sm:$0x1]
        %v466 = vld [vmem:[%s440 + $0x48] sm:$0xff]
        %v467 = vld [vmem:[%s440 + $0x50] sm:$0xff]
        %v468 = vld [vmem:[%s440 + $0x58] sm:$0x1]
        %v469 = vld [vmem:[%s440 + $0x60] sm:$0xff]
        %v470 = vld [vmem:[%s440 + $0x68] sm:$0xff]
        %v471 = vld [vmem:[%s440 + $0x70] sm:$0x1]
        %v472 = vld [vmem:[%s440 + $0x78] sm:$0xff]
        %v473 = vld [vmem:[%s440 + $0x80] sm:$0xff]
        %v474 = vld [vmem:[%s440 + $0x88] sm:$0x1]
        %v475 = vld [vmem:[%s440 + $0x90] sm:$0xff]
        %v476 = vld [vmem:[%s440 + $0x98] sm:$0xff]
        %v477 = vld [vmem:[%s440 + $0xa0] sm:$0x1]
        %v478 = vld [vmem:[%s440 + $0xa8] sm:$0xff]
        %v479 = vld [vmem:[%s440 + $0xb0] sm:$0xff]
        %v480 = vld [vmem:[%s440 + $0xb8] sm:$0x1]
        %v481 = vld [vmem:[%s440 + $0xc0] sm:$0xff]
        %v482 = vld [vmem:[%s440 + $0xc8] sm:$0xff]
        %v483 = vld [vmem:[%s440 + $0xd0] sm:$0x1]
        %v484 = vld [vmem:[%s440 + $0xd8] sm:$0xff]
        %v485 = vld [vmem:[%s440 + $0xe0] sm:$0xff]
        %v486 = vld [vmem:[%s440 + $0xe8] sm:$0x1]
        %v487 = vld [vmem:[%s440 + $0xf0] sm:$0xff]
        %v488 = vld [vmem:[%s440 + $0xf8] sm:$0xff]
        %v489 = vld [vmem:[%s440 + $0x100] sm:$0x1]
        %v490 = vld [vmem:[%s440 + $0x108] sm:$0xff]
        %v491 = vld [vmem:[%s440 + $0x110] sm:$0xff]
        %v492 = vld [vmem:[%s440 + $0x118] sm:$0x1]
        %v493 = vld [vmem:[%s440 + $0x120] sm:$0xff]
        %v494 = vld [vmem:[%s440 + $0x128] sm:$0xff]
        %v495 = vld [vmem:[%s440 + $0x130] sm:$0x1]
        %v496 = vld [vmem:[%s440 + $0x138] sm:$0xff]
        %v497 = vld [vmem:[%s440 + $0x140] sm:$0xff]
        %v498 = vld [vmem:[%s440 + $0x148] sm:$0x1]
        %v499 = vld [vmem:[%s440 + $0x150] sm:$0xff]
        %v500 = vld [vmem:[%s440 + $0x158] sm:$0xff]
        %v501 = vld [vmem:[%s440 + $0x160] sm:$0x1]
        %v502 = vld [vmem:[%s440 + $0x168] sm:$0xff]
        %v503 = vld [vmem:[%s440 + $0x170] sm:$0xff]
        %v504 = vld [vmem:[%s440 + $0x178] sm:$0x1]
        %v505 = vld [vmem:[%s440 + $0x180] sm:$0xff]
        %v506 = vld [vmem:[%s440 + $0x188] sm:$0xff]
        %v507 = vld [vmem:[%s440 + $0x190] sm:$0x1]
        %v508 = vld [vmem:[%s445] sm:$0xff]
        %v509 = vld [vmem:[%s445 + $0x8] sm:$0xff]
        %v510 = vld [vmem:[%s445 + $0x18] sm:$0xff]
        %v511 = vld [vmem:[%s445 + $0x20] sm:$0xff]
        %v512 = vld [vmem:[%s445 + $0x30] sm:$0xff]
        %v513 = vld [vmem:[%s445 + $0x38] sm:$0xff]
        %v514 = vld [vmem:[%s445 + $0x48] sm:$0xff]
        %v515 = vld [vmem:[%s445 + $0x50] sm:$0xff]
        %v516 = vld [vmem:[%s445 + $0x60] sm:$0xff]
        %v517 = vld [vmem:[%s445 + $0x68] sm:$0xff]
        %v518 = vld [vmem:[%s445 + $0x78] sm:$0xff]
        %v519 = vld [vmem:[%s445 + $0x80] sm:$0xff]
        %v520 = vld [vmem:[%s445 + $0x90] sm:$0xff]
        %v521 = vld [vmem:[%s445 + $0x98] sm:$0xff]
        %v522 = vld [vmem:[%s445 + $0xa8] sm:$0xff]
        %v523 = vld [vmem:[%s445 + $0xb0] sm:$0xff]
        %v524 = vld [vmem:[%s445 + $0xc0] sm:$0xff]
        %v525 = vld [vmem:[%s445 + $0xc8] sm:$0xff]
        %v526 = vld [vmem:[%s445 + $0xd8] sm:$0xff]
        %v527 = vld [vmem:[%s445 + $0xe0] sm:$0xff]
        %v528 = vld [vmem:[%s445 + $0xf0] sm:$0xff]
        %v529 = vld [vmem:[%s445 + $0xf8] sm:$0xff]
        %v530 = vld [vmem:[%s445 + $0x108] sm:$0xff]
        %v531 = vld [vmem:[%s445 + $0x110] sm:$0xff]
        %v532 = vld [vmem:[%s445 + $0x120] sm:$0xff]
        %v533 = vld [vmem:[%s445 + $0x128] sm:$0xff]
        %v534 = vld [vmem:[%s445 + $0x138] sm:$0xff]
        %v535 = vld [vmem:[%s445 + $0x140] sm:$0xff]
        %v536 = vld [vmem:[%s445 + $0x150] sm:$0xff]
        %v537 = vld [vmem:[%s445 + $0x158] sm:$0xff]
        %v538 = vld [vmem:[%s445 + $0x168] sm:$0xff]
        %v539 = vld [vmem:[%s445 + $0x170] sm:$0xff]
        %v540 = vld [vmem:[%s445 + $0x180] sm:$0xff]
        %v541 = vld [vmem:[%s445 + $0x188] sm:$0xff]
        %v542 = vld [vmem:[%s450] sm:$0xff]
        %v543 = vld [vmem:[%s450 + $0x8] sm:$0xff]
        %v544 = vld [vmem:[%s450 + $0x10] sm:$0x1]
        %v545 = vld [vmem:[%s450 + $0x18] sm:$0xff]
        %v546 = vld [vmem:[%s450 + $0x20] sm:$0xff]
        %v547 = vld [vmem:[%s450 + $0x28] sm:$0x1]
        %v548 = vld [vmem:[%s450 + $0x30] sm:$0xff]
        %v549 = vld [vmem:[%s450 + $0x38] sm:$0xff]
        %v550 = vld [vmem:[%s450 + $0x40] sm:$0x1]
        %v551 = vld [vmem:[%s450 + $0x48] sm:$0xff]
        %v552 = vld [vmem:[%s450 + $0x50] sm:$0xff]
        %v553 = vld [vmem:[%s450 + $0x58] sm:$0x1]
        %v554 = vld [vmem:[%s450 + $0x60] sm:$0xff]
        %v555 = vld [vmem:[%s450 + $0x68] sm:$0xff]
        %v556 = vld [vmem:[%s450 + $0x70] sm:$0x1]
        %v557 = vld [vmem:[%s450 + $0x78] sm:$0xff]
        %v558 = vld [vmem:[%s450 + $0x80] sm:$0xff]
        %v559 = vld [vmem:[%s450 + $0x88] sm:$0x1]
        %v560 = vld [vmem:[%s450 + $0x90] sm:$0xff]
        %v561 = vld [vmem:[%s450 + $0x98] sm:$0xff]
        %v562 = vld [vmem:[%s450 + $0xa0] sm:$0x1]
        %v563 = vld [vmem:[%s450 + $0xa8] sm:$0xff]
        %v564 = vld [vmem:[%s450 + $0xb0] sm:$0xff]
        %v565 = vld [vmem:[%s450 + $0xb8] sm:$0x1]
        %v566 = vld [vmem:[%s450 + $0xc0] sm:$0xff]
        %v567 = vld [vmem:[%s450 + $0xc8] sm:$0xff]
        %v568 = vld [vmem:[%s450 + $0xd0] sm:$0x1]
        %v569 = vld [vmem:[%s450 + $0xd8] sm:$0xff]
        %v570 = vld [vmem:[%s450 + $0xe0] sm:$0xff]
        %v571 = vld [vmem:[%s450 + $0xe8] sm:$0x1]
        %v572 = vld [vmem:[%s450 + $0xf0] sm:$0xff]
        %v573 = vld [vmem:[%s450 + $0xf8] sm:$0xff]
        %v574 = vld [vmem:[%s450 + $0x100] sm:$0x1]
        %v575 = vld [vmem:[%s450 + $0x108] sm:$0xff]
        %v576 = vld [vmem:[%s450 + $0x110] sm:$0xff]
        %v577 = vld [vmem:[%s450 + $0x118] sm:$0x1]
        %v578 = vld [vmem:[%s450 + $0x120] sm:$0xff]
        %v579 = vld [vmem:[%s450 + $0x128] sm:$0xff]
        %v580 = vld [vmem:[%s450 + $0x130] sm:$0x1]
        %v581 = vld [vmem:[%s450 + $0x138] sm:$0xff]
        %v582 = vld [vmem:[%s450 + $0x140] sm:$0xff]
        %v583 = vld [vmem:[%s450 + $0x148] sm:$0x1]
        %v584 = vld [vmem:[%s450 + $0x150] sm:$0xff]
        %v585 = vld [vmem:[%s450 + $0x158] sm:$0xff]
        %v586 = vld [vmem:[%s450 + $0x160] sm:$0x1]
        %v587 = vld [vmem:[%s450 + $0x168] sm:$0xff]
        %v588 = vld [vmem:[%s450 + $0x170] sm:$0xff]
        %v589 = vld [vmem:[%s450 + $0x178] sm:$0x1]
        %v590 = vld [vmem:[%s455] sm:$0xff]
        %v591 = vld [vmem:[%s455 + $0x8] sm:$0xff]
        %v592 = vld [vmem:[%s455 + $0x18] sm:$0xff]
        %v593 = vld [vmem:[%s455 + $0x20] sm:$0xff]
        %v594 = vld [vmem:[%s455 + $0x30] sm:$0xff]
        %v595 = vld [vmem:[%s455 + $0x38] sm:$0xff]
        %v596 = vld [vmem:[%s455 + $0x48] sm:$0xff]
        %v597 = vld [vmem:[%s455 + $0x50] sm:$0xff]
        %v598 = vld [vmem:[%s455 + $0x60] sm:$0xff]
        %v599 = vld [vmem:[%s455 + $0x68] sm:$0xff]
        %v600 = vld [vmem:[%s455 + $0x78] sm:$0xff]
        %v601 = vld [vmem:[%s455 + $0x80] sm:$0xff]
        %v602 = vld [vmem:[%s455 + $0x90] sm:$0xff]
        %v603 = vld [vmem:[%s455 + $0x98] sm:$0xff]
        %v604 = vld [vmem:[%s455 + $0xa8] sm:$0xff]
        %v605 = vld [vmem:[%s455 + $0xb0] sm:$0xff]
        %v606 = vld [vmem:[%s455 + $0xc0] sm:$0xff]
        %v607 = vld [vmem:[%s455 + $0xc8] sm:$0xff]
        %v608 = vld [vmem:[%s455 + $0xd8] sm:$0xff]
        %v609 = vld [vmem:[%s455 + $0xe0] sm:$0xff]
        %v610 = vld [vmem:[%s455 + $0xf0] sm:$0xff]
        %v611 = vld [vmem:[%s455 + $0xf8] sm:$0xff]
        %v612 = vld [vmem:[%s455 + $0x108] sm:$0xff]
        %v613 = vld [vmem:[%s455 + $0x110] sm:$0xff]
        %v614 = vld [vmem:[%s455 + $0x120] sm:$0xff]
        %v615 = vld [vmem:[%s455 + $0x128] sm:$0xff]
        %v616 = vld [vmem:[%s455 + $0x138] sm:$0xff]
        %v617 = vld [vmem:[%s455 + $0x140] sm:$0xff]
        %v618 = vld [vmem:[%s455 + $0x150] sm:$0xff]
        %v619 = vld [vmem:[%s455 + $0x158] sm:$0xff]
        %v620 = vld [vmem:[%s455 + $0x168] sm:$0xff]
        %v621 = vld [vmem:[%s455 + $0x170] sm:$0xff]
        %v622 = vpack.c.bf16 %v458, %v457
        %v623 = vpack.c.bf16 %v461, %v460
        %v624 = vpack.c.bf16 %v464, %v463
        %v625 = vpack.c.bf16 %v467, %v466
        %v626 = vpack.c.bf16 %v470, %v469
        %v627 = vpack.c.bf16 %v473, %v472
        %v628 = vpack.c.bf16 %v476, %v475
        %v629 = vpack.c.bf16 %v479, %v478
        %v630 = vpack.c.bf16 %v482, %v481
        %v631 = vpack.c.bf16 %v485, %v484
        %v632 = vpack.c.bf16 %v488, %v487
        %v633 = vpack.c.bf16 %v491, %v490
        %v634 = vpack.c.bf16 %v494, %v493
        %v635 = vpack.c.bf16 %v497, %v496
        %v636 = vpack.c.bf16 %v500, %v499
        %v637 = vpack.c.bf16 %v503, %v502
        %v638 = vld [vmem:[%s4] sm:$0x3]
        %v639 = vpack.c.bf16 %v509, %v508
        %v640 = vpack.c.bf16 %v511, %v510
        %v641 = vpack.c.bf16 %v513, %v512
        %v642 = vpack.c.bf16 %v515, %v514
        %v643 = vpack.c.bf16 %v517, %v516
        %v644 = vpack.c.bf16 %v519, %v518
        %v645 = vpack.c.bf16 %v521, %v520
        %v646 = vpack.c.bf16 %v523, %v522
        %v647 = vpack.c.bf16 %v525, %v524
        %v648 = vpack.c.bf16 %v527, %v526
        %v649 = vpack.c.bf16 %v529, %v528
        %v650 = vpack.c.bf16 %v531, %v530
        %v651 = vpack.c.bf16 %v533, %v532
        %v652 = vpack.c.bf16 %v535, %v534
        %v653 = vpack.c.bf16 %v537, %v536
        %v654 = vpack.c.bf16 %v539, %v538
        %s655 = scalar_lea.vmem %s4, 2
        %v656 = vld [vmem:[%s655] sm:$0x3]
        %vm657 = vcmask 23552
        %v659 = vsel %vm657, %v639, 0
        %v662 = vsel %vm657, %v640, 0
        %v665 = vsel %vm657, %v641, 0
        %v668 = vsel %vm657, %v642, 0
        %v671 = vsel %vm657, %v643, 0
        %v674 = vsel %vm657, %v644, 0
        %v677 = vsel %vm657, %v645, 0
        %v680 = vsel %vm657, %v646, 0
        %v683 = vsel %vm657, %v647, 0
        %v686 = vsel %vm657, %v648, 0
        %v689 = vsel %vm657, %v649, 0
        %v692 = vsel %vm657, %v650, 0
        %v695 = vsel %vm657, %v651, 0
        %v698 = vsel %vm657, %v652, 0
        %v701 = vsel %vm657, %v653, 0
        %v704 = vsel %vm657, %v654, 0
        %vm706 = vcmask 1040384
        %vm707 = vcmask 1041408
        %v708 = vsel %vm706, 4294967295, 65535
        %v709 = vsel %vm707, %v708, 0
        %v711 = vand.u32 %v656, %v709
        %713 = vmatprep.subr.bf16.mxu0 0
        %714 = vmatpush1.bf16.msra.mxu0 %v711
        %715 = vmatprep.subr.bf16.mxu0 0
        %716 = vmatpush1.bf16.msra.mxu0 0
        %717 = vmatprep.subr.bf16.mxu0 0
        %718 = vmatpush1.bf16.msra.mxu0 0
        %719 = vmatprep.subr.bf16.mxu0 0
        %720 = vmatpush1.bf16.msra.mxu0 0
        %721 = vmatprep.subr.bf16.mxu0 0
        %722 = vmatpush1.bf16.msra.mxu0 0
        %723 = vmatprep.subr.bf16.mxu0 0
        %724 = vmatpush1.bf16.msra.mxu0 0
        %725 = vmatprep.subr.bf16.mxu0 0
        %726 = vmatpush1.bf16.msra.mxu0 0
        %727 = vmatprep.subr.bf16.mxu0 0
        %728 = vmatpush1.bf16.msra.mxu0 0
        %729 = vmatprep.subr.bf16.mxu0 0
        %730 = vmatpush1.bf16.msra.mxu0 0
        %731 = vmatprep.subr.bf16.mxu0 0
        %732 = vmatpush1.bf16.msra.mxu0 0
        %733 = vmatprep.subr.bf16.mxu0 0
        %734 = vmatpush1.bf16.msra.mxu0 0
        %735 = vmatprep.subr.bf16.mxu0 0
        %736 = vmatpush1.bf16.msra.mxu0 0
        %737 = vmatprep.subr.bf16.mxu0 0
        %738 = vmatpush1.bf16.msra.mxu0 0
        %739 = vmatprep.subr.bf16.mxu0 0
        %740 = vmatpush1.bf16.msra.mxu0 0
        %741 = vmatprep.subr.bf16.mxu0 0
        %742 = vmatpush1.bf16.msra.mxu0 0
        %743 = vmatprep.subr.bf16.mxu0 0
        %744 = vmatpush1.bf16.msra.mxu0 0
        %745 = vmatprep.mubr.bf16.mxu0 0
        %746 = vmatmul.mubr.bf16.gmra.mrb[0].mxu0 %v659
        %v747 = vpop.f32.mrb[0].mxu0
        %v748 = vadd.f32 0.0, %v747
        %v749 = vpop.f32.mrb[0].mxu0
        %v750 = vpop.f32.mrb[0].mxu0
        %v751 = vadd.f32 0.0, %v750
        %v752 = vpop.f32.mrb[0].mxu0
        %753 = vmatprep.mubr.bf16.mxu0 0
        %754 = vmatmul.mubr.bf16.gmra.mrb[0].mxu0 %v662
        %v755 = vpop.f32.mrb[0].mxu0
        %v756 = vadd.f32 0.0, %v755
        %v757 = vpop.f32.mrb[0].mxu0
        %v758 = vpop.f32.mrb[0].mxu0
        %v759 = vadd.f32 0.0, %v758
        %v760 = vpop.f32.mrb[0].mxu0
        %761 = vmatprep.mubr.bf16.mxu0 0
        %762 = vmatmul.mubr.bf16.gmra.mrb[0].mxu0 %v665
        %v763 = vpop.f32.mrb[0].mxu0
        %v764 = vadd.f32 0.0, %v763
        %v765 = vpop.f32.mrb[0].mxu0
        %v766 = vpop.f32.mrb[0].mxu0
        %v767 = vadd.f32 0.0, %v766
        %v768 = vpop.f32.mrb[0].mxu0
        %769 = vmatprep.mubr.bf16.mxu0 0
        %770 = vmatmul.mubr.bf16.gmra.mrb[0].mxu0 %v668
        %v771 = vpop.f32.mrb[0].mxu0
        %v772 = vadd.f32 0.0, %v771
        %v773 = vpop.f32.mrb[0].mxu0
        %v774 = vpop.f32.mrb[0].mxu0
        %v775 = vadd.f32 0.0, %v774
        %v776 = vpop.f32.mrb[0].mxu0
        %777 = vmatprep.mubr.bf16.mxu0 0
        %778 = vmatmul.mubr.bf16.gmra.mrb[0].mxu0 %v671
        %v779 = vpop.f32.mrb[0].mxu0
        %v780 = vadd.f32 0.0, %v779
        %v781 = vpop.f32.mrb[0].mxu0
        %v782 = vpop.f32.mrb[0].mxu0
        %v783 = vadd.f32 0.0, %v782
        %v784 = vpop.f32.mrb[0].mxu0
        %785 = vmatprep.mubr.bf16.mxu0 0
        %786 = vmatmul.mubr.bf16.gmra.mrb[0].mxu0 %v674
        %v787 = vpop.f32.mrb[0].mxu0
        %v788 = vadd.f32 0.0, %v787
        %v789 = vpop.f32.mrb[0].mxu0
        %v790 = vpop.f32.mrb[0].mxu0
        %v791 = vadd.f32 0.0, %v790
        %v792 = vpop.f32.mrb[0].mxu0
        %793 = vmatprep.mubr.bf16.mxu0 0
        %794 = vmatmul.mubr.bf16.gmra.mrb[0].mxu0 %v677
        %v795 = vpop.f32.mrb[0].mxu0
        %v796 = vadd.f32 0.0, %v795
        %v797 = vpop.f32.mrb[0].mxu0
        %v798 = vpop.f32.mrb[0].mxu0
        %v799 = vadd.f32 0.0, %v798
        %v800 = vpop.f32.mrb[0].mxu0
        %801 = vmatprep.mubr.bf16.mxu0 0
        %802 = vmatmul.mubr.bf16.gmra.mrb[0].mxu0 %v680
        %v803 = vpop.f32.mrb[0].mxu0
        %v804 = vadd.f32 0.0, %v803
        %v805 = vpop.f32.mrb[0].mxu0
        %v806 = vpop.f32.mrb[0].mxu0
        %v807 = vadd.f32 0.0, %v806
        %v808 = vpop.f32.mrb[0].mxu0
        %809 = vmatprep.mubr.bf16.mxu0 0
        %810 = vmatmul.mubr.bf16.gmra.mrb[0].mxu0 %v683
        %v811 = vpop.f32.mrb[0].mxu0
        %v812 = vadd.f32 0.0, %v811
        %v813 = vpop.f32.mrb[0].mxu0
        %v814 = vpop.f32.mrb[0].mxu0
        %v815 = vadd.f32 0.0, %v814
        %v816 = vpop.f32.mrb[0].mxu0
        %817 = vmatprep.mubr.bf16.mxu0 0
        %818 = vmatmul.mubr.bf16.gmra.mrb[0].mxu0 %v686
        %v819 = vpop.f32.mrb[0].mxu0
        %v820 = vadd.f32 0.0, %v819
        %v821 = vpop.f32.mrb[0].mxu0
        %v822 = vpop.f32.mrb[0].mxu0
        %v823 = vadd.f32 0.0, %v822
        %v824 = vpop.f32.mrb[0].mxu0
        %825 = vmatprep.mubr.bf16.mxu0 0
        %826 = vmatmul.mubr.bf16.gmra.mrb[0].mxu0 %v689
        %v827 = vpop.f32.mrb[0].mxu0
        %v828 = vadd.f32 0.0, %v827
        %v829 = vpop.f32.mrb[0].mxu0
        %v830 = vpop.f32.mrb[0].mxu0
        %v831 = vadd.f32 0.0, %v830
        %v832 = vpop.f32.mrb[0].mxu0
        %833 = vmatprep.mubr.bf16.mxu0 0
        %834 = vmatmul.mubr.bf16.gmra.mrb[0].mxu0 %v692
        %v835 = vpop.f32.mrb[0].mxu0
        %v836 = vadd.f32 0.0, %v835
        %v837 = vpop.f32.mrb[0].mxu0
        %v838 = vpop.f32.mrb[0].mxu0
        %v839 = vadd.f32 0.0, %v838
        %v840 = vpop.f32.mrb[0].mxu0
        %841 = vmatprep.mubr.bf16.mxu0 0
        %842 = vmatmul.mubr.bf16.gmra.mrb[0].mxu0 %v695
        %v843 = vpop.f32.mrb[0].mxu0
        %v844 = vadd.f32 0.0, %v843
        %v845 = vpop.f32.mrb[0].mxu0
        %v846 = vpop.f32.mrb[0].mxu0
        %v847 = vadd.f32 0.0, %v846
        %v848 = vpop.f32.mrb[0].mxu0
        %849 = vmatprep.mubr.bf16.mxu0 0
        %850 = vmatmul.mubr.bf16.gmra.mrb[0].mxu0 %v698
        %v851 = vpop.f32.mrb[0].mxu0
        %v852 = vadd.f32 0.0, %v851
        %v853 = vpop.f32.mrb[0].mxu0
        %v854 = vpop.f32.mrb[0].mxu0
        %v855 = vadd.f32 0.0, %v854
        %v856 = vpop.f32.mrb[0].mxu0
        %857 = vmatprep.mubr.bf16.mxu0 0
        %858 = vmatmul.mubr.bf16.gmra.mrb[0].mxu0 %v701
        %v859 = vpop.f32.mrb[0].mxu0
        %v860 = vadd.f32 0.0, %v859
        %v861 = vpop.f32.mrb[0].mxu0
        %v862 = vpop.f32.mrb[0].mxu0
        %v863 = vadd.f32 0.0, %v862
        %v864 = vpop.f32.mrb[0].mxu0
        %865 = vmatprep.mubr.bf16.mxu0 0
        %866 = vmatmul.mubr.bf16.gmra.mrb[0].mxu0 %v704
        %v867 = vpop.f32.mrb[0].mxu0
        %v868 = vadd.f32 0.0, %v867
        %v869 = vpop.f32.mrb[0].mxu0
        %v870 = vpop.f32.mrb[0].mxu0
        %v871 = vadd.f32 0.0, %v870
        %v872 = vpop.f32.mrb[0].mxu0
        %873 = vdwg.mxu0
        %v875 = vsel %vm657, %v622, 0
        %v878 = vsel %vm657, %v623, 0
        %v881 = vsel %vm657, %v624, 0
        %v884 = vsel %vm657, %v625, 0
        %v887 = vsel %vm657, %v626, 0
        %v890 = vsel %vm657, %v627, 0
        %v893 = vsel %vm657, %v628, 0
        %v896 = vsel %vm657, %v629, 0
        %v899 = vsel %vm657, %v630, 0
        %v902 = vsel %vm657, %v631, 0
        %v905 = vsel %vm657, %v632, 0
        %v908 = vsel %vm657, %v633, 0
        %v911 = vsel %vm657, %v634, 0
        %v914 = vsel %vm657, %v635, 0
        %v917 = vsel %vm657, %v636, 0
        %v920 = vsel %vm657, %v637, 0
        %v923 = vand.u32 %v638, %v709
        %925 = vmatprep.subr.bf16.mxu0 0
        %926 = vmatpush1.bf16.msra.mxu0 %v923
        %927 = vmatprep.subr.bf16.mxu0 0
        %928 = vmatpush1.bf16.msra.mxu0 0
        %929 = vmatprep.subr.bf16.mxu0 0
        %930 = vmatpush1.bf16.msra.mxu0 0
        %931 = vmatprep.subr.bf16.mxu0 0
        %932 = vmatpush1.bf16.msra.mxu0 0
        %933 = vmatprep.subr.bf16.mxu0 0
        %934 = vmatpush1.bf16.msra.mxu0 0
        %935 = vmatprep.subr.bf16.mxu0 0
        %936 = vmatpush1.bf16.msra.mxu0 0
        %937 = vmatprep.subr.bf16.mxu0 0
        %938 = vmatpush1.bf16.msra.mxu0 0
        %939 = vmatprep.subr.bf16.mxu0 0
        %940 = vmatpush1.bf16.msra.mxu0 0
        %941 = vmatprep.subr.bf16.mxu0 0
        %942 = vmatpush1.bf16.msra.mxu0 0
        %943 = vmatprep.subr.bf16.mxu0 0
        %944 = vmatpush1.bf16.msra.mxu0 0
        %945 = vmatprep.subr.bf16.mxu0 0
        %946 = vmatpush1.bf16.msra.mxu0 0
        %947 = vmatprep.subr.bf16.mxu0 0
        %948 = vmatpush1.bf16.msra.mxu0 0
        %949 = vmatprep.subr.bf16.mxu0 0
        %950 = vmatpush1.bf16.msra.mxu0 0
        %951 = vmatprep.subr.bf16.mxu0 0
        %952 = vmatpush1.bf16.msra.mxu0 0
        %953 = vmatprep.subr.bf16.mxu0 0
        %954 = vmatpush1.bf16.msra.mxu0 0
        %955 = vmatprep.subr.bf16.mxu0 0
        %956 = vmatpush1.bf16.msra.mxu0 0
        %957 = vmatprep.mubr.bf16.mxu0 0
        %958 = vmatmul.mubr.bf16.gmra.mrb[0].mxu0 %v875
        %v959 = vpop.f32.mrb[0].mxu0
        %v960 = vadd.f32 %v748, %v959
        %v961 = vpop.f32.mrb[0].mxu0
        %v962 = vpop.f32.mrb[0].mxu0
        %v963 = vadd.f32 %v751, %v962
        %v964 = vpop.f32.mrb[0].mxu0
        %965 = vmatprep.mubr.bf16.mxu0 0
        %966 = vmatmul.mubr.bf16.gmra.mrb[0].mxu0 %v878
        %v967 = vpop.f32.mrb[0].mxu0
        %v968 = vadd.f32 %v756, %v967
        %v969 = vpop.f32.mrb[0].mxu0
        %v970 = vpop.f32.mrb[0].mxu0
        %v971 = vadd.f32 %v759, %v970
        %v972 = vpop.f32.mrb[0].mxu0
        %973 = vmatprep.mubr.bf16.mxu0 0
        %974 = vmatmul.mubr.bf16.gmra.mrb[0].mxu0 %v881
        %v975 = vpop.f32.mrb[0].mxu0
        %v976 = vadd.f32 %v764, %v975
        %v977 = vpop.f32.mrb[0].mxu0
        %v978 = vpop.f32.mrb[0].mxu0
        %v979 = vadd.f32 %v767, %v978
        %v980 = vpop.f32.mrb[0].mxu0
        %981 = vmatprep.mubr.bf16.mxu0 0
        %982 = vmatmul.mubr.bf16.gmra.mrb[0].mxu0 %v884
        %v983 = vpop.f32.mrb[0].mxu0
        %v984 = vadd.f32 %v772, %v983
        %v985 = vpop.f32.mrb[0].mxu0
        %v986 = vpop.f32.mrb[0].mxu0
        %v987 = vadd.f32 %v775, %v986
        %v988 = vpop.f32.mrb[0].mxu0
        %989 = vmatprep.mubr.bf16.mxu0 0
        %990 = vmatmul.mubr.bf16.gmra.mrb[0].mxu0 %v887
        %v991 = vpop.f32.mrb[0].mxu0
        %v992 = vadd.f32 %v780, %v991
        %v993 = vpop.f32.mrb[0].mxu0
        %v994 = vpop.f32.mrb[0].mxu0
        %v995 = vadd.f32 %v783, %v994
        %v996 = vpop.f32.mrb[0].mxu0
        %997 = vmatprep.mubr.bf16.mxu0 0
        %998 = vmatmul.mubr.bf16.gmra.mrb[0].mxu0 %v890
        %v999 = vpop.f32.mrb[0].mxu0
        %v1000 = vadd.f32 %v788, %v999
        %v1001 = vpop.f32.mrb[0].mxu0
        %v1002 = vpop.f32.mrb[0].mxu0
        %v1003 = vadd.f32 %v791, %v1002
        %v1004 = vpop.f32.mrb[0].mxu0
        %1005 = vmatprep.mubr.bf16.mxu0 0
        %1006 = vmatmul.mubr.bf16.gmra.mrb[0].mxu0 %v893
        %v1007 = vpop.f32.mrb[0].mxu0
        %v1008 = vadd.f32 %v796, %v1007
        %v1009 = vpop.f32.mrb[0].mxu0
        %v1010 = vpop.f32.mrb[0].mxu0
        %v1011 = vadd.f32 %v799, %v1010
        %v1012 = vpop.f32.mrb[0].mxu0
        %1013 = vmatprep.mubr.bf16.mxu0 0
        %1014 = vmatmul.mubr.bf16.gmra.mrb[0].mxu0 %v896
        %v1015 = vpop.f32.mrb[0].mxu0
        %v1016 = vadd.f32 %v804, %v1015
        %v1017 = vpop.f32.mrb[0].mxu0
        %v1018 = vpop.f32.mrb[0].mxu0
        %v1019 = vadd.f32 %v807, %v1018
        %v1020 = vpop.f32.mrb[0].mxu0
        %1021 = vmatprep.mubr.bf16.mxu0 0
        %1022 = vmatmul.mubr.bf16.gmra.mrb[0].mxu0 %v899
        %v1023 = vpop.f32.mrb[0].mxu0
        %v1024 = vadd.f32 %v812, %v1023
        %v1025 = vpop.f32.mrb[0].mxu0
        %v1026 = vpop.f32.mrb[0].mxu0
        %v1027 = vadd.f32 %v815, %v1026
        %v1028 = vpop.f32.mrb[0].mxu0
        %1029 = vmatprep.mubr.bf16.mxu0 0
        %1030 = vmatmul.mubr.bf16.gmra.mrb[0].mxu0 %v902
        %v1031 = vpop.f32.mrb[0].mxu0
        %v1032 = vadd.f32 %v820, %v1031
        %v1033 = vpop.f32.mrb[0].mxu0
        %v1034 = vpop.f32.mrb[0].mxu0
        %v1035 = vadd.f32 %v823, %v1034
        %v1036 = vpop.f32.mrb[0].mxu0
        %1037 = vmatprep.mubr.bf16.mxu0 0
        %1038 = vmatmul.mubr.bf16.gmra.mrb[0].mxu0 %v905
        %v1039 = vpop.f32.mrb[0].mxu0
        %v1040 = vadd.f32 %v828, %v1039
        %v1041 = vpop.f32.mrb[0].mxu0
        %v1042 = vpop.f32.mrb[0].mxu0
        %v1043 = vadd.f32 %v831, %v1042
        %v1044 = vpop.f32.mrb[0].mxu0
        %1045 = vmatprep.mubr.bf16.mxu0 0
        %1046 = vmatmul.mubr.bf16.gmra.mrb[0].mxu0 %v908
        %v1047 = vpop.f32.mrb[0].mxu0
        %v1048 = vadd.f32 %v836, %v1047
        %v1049 = vpop.f32.mrb[0].mxu0
        %v1050 = vpop.f32.mrb[0].mxu0
        %v1051 = vadd.f32 %v839, %v1050
        %v1052 = vpop.f32.mrb[0].mxu0
        %1053 = vmatprep.mubr.bf16.mxu0 0
        %1054 = vmatmul.mubr.bf16.gmra.mrb[0].mxu0 %v911
        %v1055 = vpop.f32.mrb[0].mxu0
        %v1056 = vadd.f32 %v844, %v1055
        %v1057 = vpop.f32.mrb[0].mxu0
        %v1058 = vpop.f32.mrb[0].mxu0
        %v1059 = vadd.f32 %v847, %v1058
        %v1060 = vpop.f32.mrb[0].mxu0
        %1061 = vmatprep.mubr.bf16.mxu0 0
        %1062 = vmatmul.mubr.bf16.gmra.mrb[0].mxu0 %v914
        %v1063 = vpop.f32.mrb[0].mxu0
        %v1064 = vadd.f32 %v852, %v1063
        %v1065 = vpop.f32.mrb[0].mxu0
        %v1066 = vpop.f32.mrb[0].mxu0
        %v1067 = vadd.f32 %v855, %v1066
        %v1068 = vpop.f32.mrb[0].mxu0
        %1069 = vmatprep.mubr.bf16.mxu0 0
        %1070 = vmatmul.mubr.bf16.gmra.mrb[0].mxu0 %v917
        %v1071 = vpop.f32.mrb[0].mxu0
        %v1072 = vadd.f32 %v860, %v1071
        %v1073 = vpop.f32.mrb[0].mxu0
        %v1074 = vpop.f32.mrb[0].mxu0
        %v1075 = vadd.f32 %v863, %v1074
        %v1076 = vpop.f32.mrb[0].mxu0
        %1077 = vmatprep.mubr.bf16.mxu0 0
        %1078 = vmatmul.mubr.bf16.gmra.mrb[0].mxu0 %v920
        %v1079 = vpop.f32.mrb[0].mxu0
        %v1080 = vadd.f32 %v868, %v1079
        %v1081 = vpop.f32.mrb[0].mxu0
        %v1082 = vpop.f32.mrb[0].mxu0
        %v1083 = vadd.f32 %v871, %v1082
        %v1084 = vpop.f32.mrb[0].mxu0
        %1085 = vdwg.mxu0
        %vm1134 = vcmask 1046528
        %v1135 = vrot.slane %v457, 1
        %v1136 = vrot.slane %v458, 1
        %v1137 = vsel %vm1134, %v1135, %v1136
        %v1138 = vrot.slane %v459, 1
        %v1139 = vsel %vm1134, %v1136, %v1138
        %v1140 = vrot.slane %v460, 1
        %v1141 = vrot.slane %v461, 1
        %v1142 = vsel %vm1134, %v1140, %v1141
        %v1143 = vrot.slane %v462, 1
        %v1144 = vsel %vm1134, %v1141, %v1143
        %v1145 = vrot.slane %v463, 1
        %v1146 = vrot.slane %v464, 1
        %v1147 = vsel %vm1134, %v1145, %v1146
        %v1148 = vrot.slane %v465, 1
        %v1149 = vsel %vm1134, %v1146, %v1148
        %v1150 = vrot.slane %v466, 1
        %v1151 = vrot.slane %v467, 1
        %v1152 = vsel %vm1134, %v1150, %v1151
        %v1153 = vrot.slane %v468, 1
        %v1154 = vsel %vm1134, %v1151, %v1153
        %v1155 = vrot.slane %v469, 1
        %v1156 = vrot.slane %v470, 1
        %v1157 = vsel %vm1134, %v1155, %v1156
        %v1158 = vrot.slane %v471, 1
        %v1159 = vsel %vm1134, %v1156, %v1158
        %v1160 = vrot.slane %v472, 1
        %v1161 = vrot.slane %v473, 1
        %v1162 = vsel %vm1134, %v1160, %v1161
        %v1163 = vrot.slane %v474, 1
        %v1164 = vsel %vm1134, %v1161, %v1163
        %v1165 = vrot.slane %v475, 1
        %v1166 = vrot.slane %v476, 1
        %v1167 = vsel %vm1134, %v1165, %v1166
        %v1168 = vrot.slane %v477, 1
        %v1169 = vsel %vm1134, %v1166, %v1168
        %v1170 = vrot.slane %v478, 1
        %v1171 = vrot.slane %v479, 1
        %v1172 = vsel %vm1134, %v1170, %v1171
        %v1173 = vrot.slane %v480, 1
        %v1174 = vsel %vm1134, %v1171, %v1173
        %v1175 = vrot.slane %v481, 1
        %v1176 = vrot.slane %v482, 1
        %v1177 = vsel %vm1134, %v1175, %v1176
        %v1178 = vrot.slane %v483, 1
        %v1179 = vsel %vm1134, %v1176, %v1178
        %v1180 = vrot.slane %v484, 1
        %v1181 = vrot.slane %v485, 1
        %v1182 = vsel %vm1134, %v1180, %v1181
        %v1183 = vrot.slane %v486, 1
        %v1184 = vsel %vm1134, %v1181, %v1183
        %v1185 = vrot.slane %v487, 1
        %v1186 = vrot.slane %v488, 1
        %v1187 = vsel %vm1134, %v1185, %v1186
        %v1188 = vrot.slane %v489, 1
        %v1189 = vsel %vm1134, %v1186, %v1188
        %v1190 = vrot.slane %v490, 1
        %v1191 = vrot.slane %v491, 1
        %v1192 = vsel %vm1134, %v1190, %v1191
        %v1193 = vrot.slane %v492, 1
        %v1194 = vsel %vm1134, %v1191, %v1193
        %v1195 = vrot.slane %v493, 1
        %v1196 = vrot.slane %v494, 1
        %v1197 = vsel %vm1134, %v1195, %v1196
        %v1198 = vrot.slane %v495, 1
        %v1199 = vsel %vm1134, %v1196, %v1198
        %v1200 = vrot.slane %v496, 1
        %v1201 = vrot.slane %v497, 1
        %v1202 = vsel %vm1134, %v1200, %v1201
        %v1203 = vrot.slane %v498, 1
        %v1204 = vsel %vm1134, %v1201, %v1203
        %v1205 = vrot.slane %v499, 1
        %v1206 = vrot.slane %v500, 1
        %v1207 = vsel %vm1134, %v1205, %v1206
        %v1208 = vrot.slane %v501, 1
        %v1209 = vsel %vm1134, %v1206, %v1208
        %v1210 = vrot.slane %v502, 1
        %v1211 = vrot.slane %v503, 1
        %v1212 = vsel %vm1134, %v1210, %v1211
        %v1213 = vrot.slane %v504, 1
        %v1214 = vsel %vm1134, %v1211, %v1213
        %v1247 = vpack.c.bf16 %v1139, %v1137
        %v1248 = vpack.c.bf16 %v1144, %v1142
        %v1249 = vpack.c.bf16 %v1149, %v1147
        %v1250 = vpack.c.bf16 %v1154, %v1152
        %v1251 = vpack.c.bf16 %v1159, %v1157
        %v1252 = vpack.c.bf16 %v1164, %v1162
        %v1253 = vpack.c.bf16 %v1169, %v1167
        %v1254 = vpack.c.bf16 %v1174, %v1172
        %v1255 = vpack.c.bf16 %v1179, %v1177
        %v1256 = vpack.c.bf16 %v1184, %v1182
        %v1257 = vpack.c.bf16 %v1189, %v1187
        %v1258 = vpack.c.bf16 %v1194, %v1192
        %v1259 = vpack.c.bf16 %v1199, %v1197
        %v1260 = vpack.c.bf16 %v1204, %v1202
        %v1261 = vpack.c.bf16 %v1209, %v1207
        %v1262 = vpack.c.bf16 %v1214, %v1212
        %s1263 = scalar_lea.vmem %s4, 4
        %v1264 = vld [vmem:[%s1263] sm:$0x3]
        %v1266 = vsel %vm657, %v1247, 0
        %v1269 = vsel %vm657, %v1248, 0
        %v1272 = vsel %vm657, %v1249, 0
        %v1275 = vsel %vm657, %v1250, 0
        %v1278 = vsel %vm657, %v1251, 0
        %v1281 = vsel %vm657, %v1252, 0
        %v1284 = vsel %vm657, %v1253, 0
        %v1287 = vsel %vm657, %v1254, 0
        %v1290 = vsel %vm657, %v1255, 0
        %v1293 = vsel %vm657, %v1256, 0
        %v1296 = vsel %vm657, %v1257, 0
        %v1299 = vsel %vm657, %v1258, 0
        %v1302 = vsel %vm657, %v1259, 0
        %v1305 = vsel %vm657, %v1260, 0
        %v1308 = vsel %vm657, %v1261, 0
        %v1311 = vsel %vm657, %v1262, 0
        %v1314 = vand.u32 %v1264, %v709
        %1316 = vmatprep.subr.bf16.mxu0 0
        %1317 = vmatpush1.bf16.msra.mxu0 %v1314
        %1318 = vmatprep.subr.bf16.mxu0 0
        %1319 = vmatpush1.bf16.msra.mxu0 0
        %1320 = vmatprep.subr.bf16.mxu0 0
        %1321 = vmatpush1.bf16.msra.mxu0 0
        %1322 = vmatprep.subr.bf16.mxu0 0
        %1323 = vmatpush1.bf16.msra.mxu0 0
        %1324 = vmatprep.subr.bf16.mxu0 0
        %1325 = vmatpush1.bf16.msra.mxu0 0
        %1326 = vmatprep.subr.bf16.mxu0 0
        %1327 = vmatpush1.bf16.msra.mxu0 0
        %1328 = vmatprep.subr.bf16.mxu0 0
        %1329 = vmatpush1.bf16.msra.mxu0 0
        %1330 = vmatprep.subr.bf16.mxu0 0
        %1331 = vmatpush1.bf16.msra.mxu0 0
        %1332 = vmatprep.subr.bf16.mxu0 0
        %1333 = vmatpush1.bf16.msra.mxu0 0
        %1334 = vmatprep.subr.bf16.mxu0 0
        %1335 = vmatpush1.bf16.msra.mxu0 0
        %1336 = vmatprep.subr.bf16.mxu0 0
        %1337 = vmatpush1.bf16.msra.mxu0 0
        %1338 = vmatprep.subr.bf16.mxu0 0
        %1339 = vmatpush1.bf16.msra.mxu0 0
        %1340 = vmatprep.subr.bf16.mxu0 0
        %1341 = vmatpush1.bf16.msra.mxu0 0
        %1342 = vmatprep.subr.bf16.mxu0 0
        %1343 = vmatpush1.bf16.msra.mxu0 0
        %1344 = vmatprep.subr.bf16.mxu0 0
        %1345 = vmatpush1.bf16.msra.mxu0 0
        %1346 = vmatprep.subr.bf16.mxu0 0
        %1347 = vmatpush1.bf16.msra.mxu0 0
        %1348 = vmatprep.mubr.bf16.mxu0 0
        %1349 = vmatmul.mubr.bf16.gmra.mrb[0].mxu0 %v1266
        %v1350 = vpop.f32.mrb[0].mxu0
        %v1351 = vadd.f32 0.0, %v1350
        %v1352 = vpop.f32.mrb[0].mxu0
        %v1353 = vpop.f32.mrb[0].mxu0
        %v1354 = vadd.f32 0.0, %v1353
        %v1355 = vpop.f32.mrb[0].mxu0
        %1356 = vmatprep.mubr.bf16.mxu0 0
        %1357 = vmatmul.mubr.bf16.gmra.mrb[0].mxu0 %v1269
        %v1358 = vpop.f32.mrb[0].mxu0
        %v1359 = vadd.f32 0.0, %v1358
        %v1360 = vpop.f32.mrb[0].mxu0
        %v1361 = vpop.f32.mrb[0].mxu0
        %v1362 = vadd.f32 0.0, %v1361
        %v1363 = vpop.f32.mrb[0].mxu0
        %1364 = vmatprep.mubr.bf16.mxu0 0
        %1365 = vmatmul.mubr.bf16.gmra.mrb[0].mxu0 %v1272
        %v1366 = vpop.f32.mrb[0].mxu0
        %v1367 = vadd.f32 0.0, %v1366
        %v1368 = vpop.f32.mrb[0].mxu0
        %v1369 = vpop.f32.mrb[0].mxu0
        %v1370 = vadd.f32 0.0, %v1369
        %v1371 = vpop.f32.mrb[0].mxu0
        %1372 = vmatprep.mubr.bf16.mxu0 0
        %1373 = vmatmul.mubr.bf16.gmra.mrb[0].mxu0 %v1275
        %v1374 = vpop.f32.mrb[0].mxu0
        %v1375 = vadd.f32 0.0, %v1374
        %v1376 = vpop.f32.mrb[0].mxu0
        %v1377 = vpop.f32.mrb[0].mxu0
        %v1378 = vadd.f32 0.0, %v1377
        %v1379 = vpop.f32.mrb[0].mxu0
        %1380 = vmatprep.mubr.bf16.mxu0 0
        %1381 = vmatmul.mubr.bf16.gmra.mrb[0].mxu0 %v1278
        %v1382 = vpop.f32.mrb[0].mxu0
        %v1383 = vadd.f32 0.0, %v1382
        %v1384 = vpop.f32.mrb[0].mxu0
        %v1385 = vpop.f32.mrb[0].mxu0
        %v1386 = vadd.f32 0.0, %v1385
        %v1387 = vpop.f32.mrb[0].mxu0
        %1388 = vmatprep.mubr.bf16.mxu0 0
        %1389 = vmatmul.mubr.bf16.gmra.mrb[0].mxu0 %v1281
        %v1390 = vpop.f32.mrb[0].mxu0
        %v1391 = vadd.f32 0.0, %v1390
        %v1392 = vpop.f32.mrb[0].mxu0
        %v1393 = vpop.f32.mrb[0].mxu0
        %v1394 = vadd.f32 0.0, %v1393
        %v1395 = vpop.f32.mrb[0].mxu0
        %1396 = vmatprep.mubr.bf16.mxu0 0
        %1397 = vmatmul.mubr.bf16.gmra.mrb[0].mxu0 %v1284
        %v1398 = vpop.f32.mrb[0].mxu0
        %v1399 = vadd.f32 0.0, %v1398
        %v1400 = vpop.f32.mrb[0].mxu0
        %v1401 = vpop.f32.mrb[0].mxu0
        %v1402 = vadd.f32 0.0, %v1401
        %v1403 = vpop.f32.mrb[0].mxu0
        %1404 = vmatprep.mubr.bf16.mxu0 0
        %1405 = vmatmul.mubr.bf16.gmra.mrb[0].mxu0 %v1287
        %v1406 = vpop.f32.mrb[0].mxu0
        %v1407 = vadd.f32 0.0, %v1406
        %v1408 = vpop.f32.mrb[0].mxu0
        %v1409 = vpop.f32.mrb[0].mxu0
        %v1410 = vadd.f32 0.0, %v1409
        %v1411 = vpop.f32.mrb[0].mxu0
        %1412 = vmatprep.mubr.bf16.mxu0 0
        %1413 = vmatmul.mubr.bf16.gmra.mrb[0].mxu0 %v1290
        %v1414 = vpop.f32.mrb[0].mxu0
        %v1415 = vadd.f32 0.0, %v1414
        %v1416 = vpop.f32.mrb[0].mxu0
        %v1417 = vpop.f32.mrb[0].mxu0
        %v1418 = vadd.f32 0.0, %v1417
        %v1419 = vpop.f32.mrb[0].mxu0
        %1420 = vmatprep.mubr.bf16.mxu0 0
        %1421 = vmatmul.mubr.bf16.gmra.mrb[0].mxu0 %v1293
        %v1422 = vpop.f32.mrb[0].mxu0
        %v1423 = vadd.f32 0.0, %v1422
        %v1424 = vpop.f32.mrb[0].mxu0
        %v1425 = vpop.f32.mrb[0].mxu0
        %v1426 = vadd.f32 0.0, %v1425
        %v1427 = vpop.f32.mrb[0].mxu0
        %1428 = vmatprep.mubr.bf16.mxu0 0
        %1429 = vmatmul.mubr.bf16.gmra.mrb[0].mxu0 %v1296
        %v1430 = vpop.f32.mrb[0].mxu0
        %v1431 = vadd.f32 0.0, %v1430
        %v1432 = vpop.f32.mrb[0].mxu0
        %v1433 = vpop.f32.mrb[0].mxu0
        %v1434 = vadd.f32 0.0, %v1433
        %v1435 = vpop.f32.mrb[0].mxu0
        %1436 = vmatprep.mubr.bf16.mxu0 0
        %1437 = vmatmul.mubr.bf16.gmra.mrb[0].mxu0 %v1299
        %v1438 = vpop.f32.mrb[0].mxu0
        %v1439 = vadd.f32 0.0, %v1438
        %v1440 = vpop.f32.mrb[0].mxu0
        %v1441 = vpop.f32.mrb[0].mxu0
        %v1442 = vadd.f32 0.0, %v1441
        %v1443 = vpop.f32.mrb[0].mxu0
        %1444 = vmatprep.mubr.bf16.mxu0 0
        %1445 = vmatmul.mubr.bf16.gmra.mrb[0].mxu0 %v1302
        %v1446 = vpop.f32.mrb[0].mxu0
        %v1447 = vadd.f32 0.0, %v1446
        %v1448 = vpop.f32.mrb[0].mxu0
        %v1449 = vpop.f32.mrb[0].mxu0
        %v1450 = vadd.f32 0.0, %v1449
        %v1451 = vpop.f32.mrb[0].mxu0
        %1452 = vmatprep.mubr.bf16.mxu0 0
        %1453 = vmatmul.mubr.bf16.gmra.mrb[0].mxu0 %v1305
        %v1454 = vpop.f32.mrb[0].mxu0
        %v1455 = vadd.f32 0.0, %v1454
        %v1456 = vpop.f32.mrb[0].mxu0
        %v1457 = vpop.f32.mrb[0].mxu0
        %v1458 = vadd.f32 0.0, %v1457
        %v1459 = vpop.f32.mrb[0].mxu0
        %1460 = vmatprep.mubr.bf16.mxu0 0
        %1461 = vmatmul.mubr.bf16.gmra.mrb[0].mxu0 %v1308
        %v1462 = vpop.f32.mrb[0].mxu0
        %v1463 = vadd.f32 0.0, %v1462
        %v1464 = vpop.f32.mrb[0].mxu0
        %v1465 = vpop.f32.mrb[0].mxu0
        %v1466 = vadd.f32 0.0, %v1465
        %v1467 = vpop.f32.mrb[0].mxu0
        %1468 = vmatprep.mubr.bf16.mxu0 0
        %1469 = vmatmul.mubr.bf16.gmra.mrb[0].mxu0 %v1311
        %v1470 = vpop.f32.mrb[0].mxu0
        %v1471 = vadd.f32 0.0, %v1470
        %v1472 = vpop.f32.mrb[0].mxu0
        %v1473 = vpop.f32.mrb[0].mxu0
        %v1474 = vadd.f32 0.0, %v1473
        %v1475 = vpop.f32.mrb[0].mxu0
        %1476 = vdwg.mxu0
        %v1477 = vadd.f32 %v960, %v1351
        %v1478 = vadd.f32 %v963, %v1354
        %v1479 = vadd.f32 %v968, %v1359
        %v1480 = vadd.f32 %v971, %v1362
        %v1481 = vadd.f32 %v976, %v1367
        %v1482 = vadd.f32 %v979, %v1370
        %v1483 = vadd.f32 %v984, %v1375
        %v1484 = vadd.f32 %v987, %v1378
        %v1485 = vadd.f32 %v992, %v1383
        %v1486 = vadd.f32 %v995, %v1386
        %v1487 = vadd.f32 %v1000, %v1391
        %v1488 = vadd.f32 %v1003, %v1394
        %v1489 = vadd.f32 %v1008, %v1399
        %v1490 = vadd.f32 %v1011, %v1402
        %v1491 = vadd.f32 %v1016, %v1407
        %v1492 = vadd.f32 %v1019, %v1410
        %v1493 = vadd.f32 %v1024, %v1415
        %v1494 = vadd.f32 %v1027, %v1418
        %v1495 = vadd.f32 %v1032, %v1423
        %v1496 = vadd.f32 %v1035, %v1426
        %v1497 = vadd.f32 %v1040, %v1431
        %v1498 = vadd.f32 %v1043, %v1434
        %v1499 = vadd.f32 %v1048, %v1439
        %v1500 = vadd.f32 %v1051, %v1442
        %v1501 = vadd.f32 %v1056, %v1447
        %v1502 = vadd.f32 %v1059, %v1450
        %v1503 = vadd.f32 %v1064, %v1455
        %v1504 = vadd.f32 %v1067, %v1458
        %v1505 = vadd.f32 %v1072, %v1463
        %v1506 = vadd.f32 %v1075, %v1466
        %v1507 = vadd.f32 %v1080, %v1471
        %v1508 = vadd.f32 %v1083, %v1474
        %v1509 = vpack.c.bf16 %v543, %v542
        %v1510 = vpack.c.bf16 %v546, %v545
        %v1511 = vpack.c.bf16 %v549, %v548
        %v1512 = vpack.c.bf16 %v552, %v551
        %v1513 = vpack.c.bf16 %v555, %v554
        %v1514 = vpack.c.bf16 %v558, %v557
        %v1515 = vpack.c.bf16 %v561, %v560
        %v1516 = vpack.c.bf16 %v564, %v563
        %v1517 = vpack.c.bf16 %v567, %v566
        %v1518 = vpack.c.bf16 %v570, %v569
        %v1519 = vpack.c.bf16 %v573, %v572
        %v1520 = vpack.c.bf16 %v576, %v575
        %v1521 = vpack.c.bf16 %v579, %v578
        %v1522 = vpack.c.bf16 %v582, %v581
        %v1523 = vpack.c.bf16 %v585, %v584
        %v1524 = vpack.c.bf16 %v588, %v587
        %s1525 = scalar_lea.vmem %s4, 6
        %v1526 = vld [vmem:[%s1525] sm:$0x3]
        %v1528 = vsel %vm657, %v1509, 0
        %v1531 = vsel %vm657, %v1510, 0
        %v1534 = vsel %vm657, %v1511, 0
        %v1537 = vsel %vm657, %v1512, 0
        %v1540 = vsel %vm657, %v1513, 0
        %v1543 = vsel %vm657, %v1514, 0
        %v1546 = vsel %vm657, %v1515, 0
        %v1549 = vsel %vm657, %v1516, 0
        %v1552 = vsel %vm657, %v1517, 0
        %v1555 = vsel %vm657, %v1518, 0
        %v1558 = vsel %vm657, %v1519, 0
        %v1561 = vsel %vm657, %v1520, 0
        %v1564 = vsel %vm657, %v1521, 0
        %v1567 = vsel %vm657, %v1522, 0
        %v1570 = vsel %vm657, %v1523, 0
        %v1573 = vsel %vm657, %v1524, 0
        %v1576 = vand.u32 %v1526, %v709
        %1578 = vmatprep.subr.bf16.mxu0 0
        %1579 = vmatpush1.bf16.msra.mxu0 %v1576
        %1580 = vmatprep.subr.bf16.mxu0 0
        %1581 = vmatpush1.bf16.msra.mxu0 0
        %1582 = vmatprep.subr.bf16.mxu0 0
        %1583 = vmatpush1.bf16.msra.mxu0 0
        %1584 = vmatprep.subr.bf16.mxu0 0
        %1585 = vmatpush1.bf16.msra.mxu0 0
        %1586 = vmatprep.subr.bf16.mxu0 0
        %1587 = vmatpush1.bf16.msra.mxu0 0
        %1588 = vmatprep.subr.bf16.mxu0 0
        %1589 = vmatpush1.bf16.msra.mxu0 0
        %1590 = vmatprep.subr.bf16.mxu0 0
        %1591 = vmatpush1.bf16.msra.mxu0 0
        %1592 = vmatprep.subr.bf16.mxu0 0
        %1593 = vmatpush1.bf16.msra.mxu0 0
        %1594 = vmatprep.subr.bf16.mxu0 0
        %1595 = vmatpush1.bf16.msra.mxu0 0
        %1596 = vmatprep.subr.bf16.mxu0 0
        %1597 = vmatpush1.bf16.msra.mxu0 0
        %1598 = vmatprep.subr.bf16.mxu0 0
        %1599 = vmatpush1.bf16.msra.mxu0 0
        %1600 = vmatprep.subr.bf16.mxu0 0
        %1601 = vmatpush1.bf16.msra.mxu0 0
        %1602 = vmatprep.subr.bf16.mxu0 0
        %1603 = vmatpush1.bf16.msra.mxu0 0
        %1604 = vmatprep.subr.bf16.mxu0 0
        %1605 = vmatpush1.bf16.msra.mxu0 0
        %1606 = vmatprep.subr.bf16.mxu0 0
        %1607 = vmatpush1.bf16.msra.mxu0 0
        %1608 = vmatprep.subr.bf16.mxu0 0
        %1609 = vmatpush1.bf16.msra.mxu0 0
        %1610 = vmatprep.mubr.bf16.mxu0 0
        %1611 = vmatmul.mubr.bf16.gmra.mrb[0].mxu0 %v1528
        %v1612 = vpop.f32.mrb[0].mxu0
        %v1613 = vadd.f32 0.0, %v1612
        %v1614 = vpop.f32.mrb[0].mxu0
        %v1615 = vpop.f32.mrb[0].mxu0
        %v1616 = vadd.f32 0.0, %v1615
        %v1617 = vpop.f32.mrb[0].mxu0
        %1618 = vmatprep.mubr.bf16.mxu0 0
        %1619 = vmatmul.mubr.bf16.gmra.mrb[0].mxu0 %v1531
        %v1620 = vpop.f32.mrb[0].mxu0
        %v1621 = vadd.f32 0.0, %v1620
        %v1622 = vpop.f32.mrb[0].mxu0
        %v1623 = vpop.f32.mrb[0].mxu0
        %v1624 = vadd.f32 0.0, %v1623
        %v1625 = vpop.f32.mrb[0].mxu0
        %1626 = vmatprep.mubr.bf16.mxu0 0
        %1627 = vmatmul.mubr.bf16.gmra.mrb[0].mxu0 %v1534
        %v1628 = vpop.f32.mrb[0].mxu0
        %v1629 = vadd.f32 0.0, %v1628
        %v1630 = vpop.f32.mrb[0].mxu0
        %v1631 = vpop.f32.mrb[0].mxu0
        %v1632 = vadd.f32 0.0, %v1631
        %v1633 = vpop.f32.mrb[0].mxu0
        %1634 = vmatprep.mubr.bf16.mxu0 0
        %1635 = vmatmul.mubr.bf16.gmra.mrb[0].mxu0 %v1537
        %v1636 = vpop.f32.mrb[0].mxu0
        %v1637 = vadd.f32 0.0, %v1636
        %v1638 = vpop.f32.mrb[0].mxu0
        %v1639 = vpop.f32.mrb[0].mxu0
        %v1640 = vadd.f32 0.0, %v1639
        %v1641 = vpop.f32.mrb[0].mxu0
        %1642 = vmatprep.mubr.bf16.mxu0 0
        %1643 = vmatmul.mubr.bf16.gmra.mrb[0].mxu0 %v1540
        %v1644 = vpop.f32.mrb[0].mxu0
        %v1645 = vadd.f32 0.0, %v1644
        %v1646 = vpop.f32.mrb[0].mxu0
        %v1647 = vpop.f32.mrb[0].mxu0
        %v1648 = vadd.f32 0.0, %v1647
        %v1649 = vpop.f32.mrb[0].mxu0
        %1650 = vmatprep.mubr.bf16.mxu0 0
        %1651 = vmatmul.mubr.bf16.gmra.mrb[0].mxu0 %v1543
        %v1652 = vpop.f32.mrb[0].mxu0
        %v1653 = vadd.f32 0.0, %v1652
        %v1654 = vpop.f32.mrb[0].mxu0
        %v1655 = vpop.f32.mrb[0].mxu0
        %v1656 = vadd.f32 0.0, %v1655
        %v1657 = vpop.f32.mrb[0].mxu0
        %1658 = vmatprep.mubr.bf16.mxu0 0
        %1659 = vmatmul.mubr.bf16.gmra.mrb[0].mxu0 %v1546
        %v1660 = vpop.f32.mrb[0].mxu0
        %v1661 = vadd.f32 0.0, %v1660
        %v1662 = vpop.f32.mrb[0].mxu0
        %v1663 = vpop.f32.mrb[0].mxu0
        %v1664 = vadd.f32 0.0, %v1663
        %v1665 = vpop.f32.mrb[0].mxu0
        %1666 = vmatprep.mubr.bf16.mxu0 0
        %1667 = vmatmul.mubr.bf16.gmra.mrb[0].mxu0 %v1549
        %v1668 = vpop.f32.mrb[0].mxu0
        %v1669 = vadd.f32 0.0, %v1668
        %v1670 = vpop.f32.mrb[0].mxu0
        %v1671 = vpop.f32.mrb[0].mxu0
        %v1672 = vadd.f32 0.0, %v1671
        %v1673 = vpop.f32.mrb[0].mxu0
        %1674 = vmatprep.mubr.bf16.mxu0 0
        %1675 = vmatmul.mubr.bf16.gmra.mrb[0].mxu0 %v1552
        %v1676 = vpop.f32.mrb[0].mxu0
        %v1677 = vadd.f32 0.0, %v1676
        %v1678 = vpop.f32.mrb[0].mxu0
        %v1679 = vpop.f32.mrb[0].mxu0
        %v1680 = vadd.f32 0.0, %v1679
        %v1681 = vpop.f32.mrb[0].mxu0
        %1682 = vmatprep.mubr.bf16.mxu0 0
        %1683 = vmatmul.mubr.bf16.gmra.mrb[0].mxu0 %v1555
        %v1684 = vpop.f32.mrb[0].mxu0
        %v1685 = vadd.f32 0.0, %v1684
        %v1686 = vpop.f32.mrb[0].mxu0
        %v1687 = vpop.f32.mrb[0].mxu0
        %v1688 = vadd.f32 0.0, %v1687
        %v1689 = vpop.f32.mrb[0].mxu0
        %1690 = vmatprep.mubr.bf16.mxu0 0
        %1691 = vmatmul.mubr.bf16.gmra.mrb[0].mxu0 %v1558
        %v1692 = vpop.f32.mrb[0].mxu0
        %v1693 = vadd.f32 0.0, %v1692
        %v1694 = vpop.f32.mrb[0].mxu0
        %v1695 = vpop.f32.mrb[0].mxu0
        %v1696 = vadd.f32 0.0, %v1695
        %v1697 = vpop.f32.mrb[0].mxu0
        %1698 = vmatprep.mubr.bf16.mxu0 0
        %1699 = vmatmul.mubr.bf16.gmra.mrb[0].mxu0 %v1561
        %v1700 = vpop.f32.mrb[0].mxu0
        %v1701 = vadd.f32 0.0, %v1700
        %v1702 = vpop.f32.mrb[0].mxu0
        %v1703 = vpop.f32.mrb[0].mxu0
        %v1704 = vadd.f32 0.0, %v1703
        %v1705 = vpop.f32.mrb[0].mxu0
        %1706 = vmatprep.mubr.bf16.mxu0 0
        %1707 = vmatmul.mubr.bf16.gmra.mrb[0].mxu0 %v1564
        %v1708 = vpop.f32.mrb[0].mxu0
        %v1709 = vadd.f32 0.0, %v1708
        %v1710 = vpop.f32.mrb[0].mxu0
        %v1711 = vpop.f32.mrb[0].mxu0
        %v1712 = vadd.f32 0.0, %v1711
        %v1713 = vpop.f32.mrb[0].mxu0
        %1714 = vmatprep.mubr.bf16.mxu0 0
        %1715 = vmatmul.mubr.bf16.gmra.mrb[0].mxu0 %v1567
        %v1716 = vpop.f32.mrb[0].mxu0
        %v1717 = vadd.f32 0.0, %v1716
        %v1718 = vpop.f32.mrb[0].mxu0
        %v1719 = vpop.f32.mrb[0].mxu0
        %v1720 = vadd.f32 0.0, %v1719
        %v1721 = vpop.f32.mrb[0].mxu0
        %1722 = vmatprep.mubr.bf16.mxu0 0
        %1723 = vmatmul.mubr.bf16.gmra.mrb[0].mxu0 %v1570
        %v1724 = vpop.f32.mrb[0].mxu0
        %v1725 = vadd.f32 0.0, %v1724
        %v1726 = vpop.f32.mrb[0].mxu0
        %v1727 = vpop.f32.mrb[0].mxu0
        %v1728 = vadd.f32 0.0, %v1727
        %v1729 = vpop.f32.mrb[0].mxu0
        %1730 = vmatprep.mubr.bf16.mxu0 0
        %1731 = vmatmul.mubr.bf16.gmra.mrb[0].mxu0 %v1573
        %v1732 = vpop.f32.mrb[0].mxu0
        %v1733 = vadd.f32 0.0, %v1732
        %v1734 = vpop.f32.mrb[0].mxu0
        %v1735 = vpop.f32.mrb[0].mxu0
        %v1736 = vadd.f32 0.0, %v1735
        %v1737 = vpop.f32.mrb[0].mxu0
        %1738 = vdwg.mxu0
        %v1739 = vadd.f32 %v1477, %v1613
        %v1740 = vadd.f32 %v1478, %v1616
        %v1741 = vadd.f32 %v1479, %v1621
        %v1742 = vadd.f32 %v1480, %v1624
        %v1743 = vadd.f32 %v1481, %v1629
        %v1744 = vadd.f32 %v1482, %v1632
        %v1745 = vadd.f32 %v1483, %v1637
        %v1746 = vadd.f32 %v1484, %v1640
        %v1747 = vadd.f32 %v1485, %v1645
        %v1748 = vadd.f32 %v1486, %v1648
        %v1749 = vadd.f32 %v1487, %v1653
        %v1750 = vadd.f32 %v1488, %v1656
        %v1751 = vadd.f32 %v1489, %v1661
        %v1752 = vadd.f32 %v1490, %v1664
        %v1753 = vadd.f32 %v1491, %v1669
        %v1754 = vadd.f32 %v1492, %v1672
        %v1755 = vadd.f32 %v1493, %v1677
        %v1756 = vadd.f32 %v1494, %v1680
        %v1757 = vadd.f32 %v1495, %v1685
        %v1758 = vadd.f32 %v1496, %v1688
        %v1759 = vadd.f32 %v1497, %v1693
        %v1760 = vadd.f32 %v1498, %v1696
        %v1761 = vadd.f32 %v1499, %v1701
        %v1762 = vadd.f32 %v1500, %v1704
        %v1763 = vadd.f32 %v1501, %v1709
        %v1764 = vadd.f32 %v1502, %v1712
        %v1765 = vadd.f32 %v1503, %v1717
        %v1766 = vadd.f32 %v1504, %v1720
        %v1767 = vadd.f32 %v1505, %v1725
        %v1768 = vadd.f32 %v1506, %v1728
        %v1769 = vadd.f32 %v1507, %v1733
        %v1770 = vadd.f32 %v1508, %v1736
        %v1771 = vpack.c.bf16 %v591, %v590
        %v1772 = vpack.c.bf16 %v593, %v592
        %v1773 = vpack.c.bf16 %v595, %v594
        %v1774 = vpack.c.bf16 %v597, %v596
        %v1775 = vpack.c.bf16 %v599, %v598
        %v1776 = vpack.c.bf16 %v601, %v600
        %v1777 = vpack.c.bf16 %v603, %v602
        %v1778 = vpack.c.bf16 %v605, %v604
        %v1779 = vpack.c.bf16 %v607, %v606
        %v1780 = vpack.c.bf16 %v609, %v608
        %v1781 = vpack.c.bf16 %v611, %v610
        %v1782 = vpack.c.bf16 %v613, %v612
        %v1783 = vpack.c.bf16 %v615, %v614
        %v1784 = vpack.c.bf16 %v617, %v616
        %v1785 = vpack.c.bf16 %v619, %v618
        %v1786 = vpack.c.bf16 %v621, %v620
        %s1787 = scalar_lea.vmem %s4, 8
        %v1788 = vld [vmem:[%s1787] sm:$0x3]
        %v1790 = vsel %vm657, %v1771, 0
        %v1793 = vsel %vm657, %v1772, 0
        %v1796 = vsel %vm657, %v1773, 0
        %v1799 = vsel %vm657, %v1774, 0
        %v1802 = vsel %vm657, %v1775, 0
        %v1805 = vsel %vm657, %v1776, 0
        %v1808 = vsel %vm657, %v1777, 0
        %v1811 = vsel %vm657, %v1778, 0
        %v1814 = vsel %vm657, %v1779, 0
        %v1817 = vsel %vm657, %v1780, 0
        %v1820 = vsel %vm657, %v1781, 0
        %v1823 = vsel %vm657, %v1782, 0
        %v1826 = vsel %vm657, %v1783, 0
        %v1829 = vsel %vm657, %v1784, 0
        %v1832 = vsel %vm657, %v1785, 0
        %v1835 = vsel %vm657, %v1786, 0
        %v1838 = vand.u32 %v1788, %v709
        %1840 = vmatprep.subr.bf16.mxu0 0
        %1841 = vmatpush1.bf16.msra.mxu0 %v1838
        %1842 = vmatprep.subr.bf16.mxu0 0
        %1843 = vmatpush1.bf16.msra.mxu0 0
        %1844 = vmatprep.subr.bf16.mxu0 0
        %1845 = vmatpush1.bf16.msra.mxu0 0
        %1846 = vmatprep.subr.bf16.mxu0 0
        %1847 = vmatpush1.bf16.msra.mxu0 0
        %1848 = vmatprep.subr.bf16.mxu0 0
        %1849 = vmatpush1.bf16.msra.mxu0 0
        %1850 = vmatprep.subr.bf16.mxu0 0
        %1851 = vmatpush1.bf16.msra.mxu0 0
        %1852 = vmatprep.subr.bf16.mxu0 0
        %1853 = vmatpush1.bf16.msra.mxu0 0
        %1854 = vmatprep.subr.bf16.mxu0 0
        %1855 = vmatpush1.bf16.msra.mxu0 0
        %1856 = vmatprep.subr.bf16.mxu0 0
        %1857 = vmatpush1.bf16.msra.mxu0 0
        %1858 = vmatprep.subr.bf16.mxu0 0
        %1859 = vmatpush1.bf16.msra.mxu0 0
        %1860 = vmatprep.subr.bf16.mxu0 0
        %1861 = vmatpush1.bf16.msra.mxu0 0
        %1862 = vmatprep.subr.bf16.mxu0 0
        %1863 = vmatpush1.bf16.msra.mxu0 0
        %1864 = vmatprep.subr.bf16.mxu0 0
        %1865 = vmatpush1.bf16.msra.mxu0 0
        %1866 = vmatprep.subr.bf16.mxu0 0
        %1867 = vmatpush1.bf16.msra.mxu0 0
        %1868 = vmatprep.subr.bf16.mxu0 0
        %1869 = vmatpush1.bf16.msra.mxu0 0
        %1870 = vmatprep.subr.bf16.mxu0 0
        %1871 = vmatpush1.bf16.msra.mxu0 0
        %1872 = vmatprep.mubr.bf16.mxu0 0
        %1873 = vmatmul.mubr.bf16.gmra.mrb[0].mxu0 %v1790
        %v1874 = vpop.f32.mrb[0].mxu0
        %v1875 = vadd.f32 0.0, %v1874
        %v1876 = vpop.f32.mrb[0].mxu0
        %v1877 = vpop.f32.mrb[0].mxu0
        %v1878 = vadd.f32 0.0, %v1877
        %v1879 = vpop.f32.mrb[0].mxu0
        %1880 = vmatprep.mubr.bf16.mxu0 0
        %1881 = vmatmul.mubr.bf16.gmra.mrb[0].mxu0 %v1793
        %v1882 = vpop.f32.mrb[0].mxu0
        %v1883 = vadd.f32 0.0, %v1882
        %v1884 = vpop.f32.mrb[0].mxu0
        %v1885 = vpop.f32.mrb[0].mxu0
        %v1886 = vadd.f32 0.0, %v1885
        %v1887 = vpop.f32.mrb[0].mxu0
        %1888 = vmatprep.mubr.bf16.mxu0 0
        %1889 = vmatmul.mubr.bf16.gmra.mrb[0].mxu0 %v1796
        %v1890 = vpop.f32.mrb[0].mxu0
        %v1891 = vadd.f32 0.0, %v1890
        %v1892 = vpop.f32.mrb[0].mxu0
        %v1893 = vpop.f32.mrb[0].mxu0
        %v1894 = vadd.f32 0.0, %v1893
        %v1895 = vpop.f32.mrb[0].mxu0
        %1896 = vmatprep.mubr.bf16.mxu0 0
        %1897 = vmatmul.mubr.bf16.gmra.mrb[0].mxu0 %v1799
        %v1898 = vpop.f32.mrb[0].mxu0
        %v1899 = vadd.f32 0.0, %v1898
        %v1900 = vpop.f32.mrb[0].mxu0
        %v1901 = vpop.f32.mrb[0].mxu0
        %v1902 = vadd.f32 0.0, %v1901
        %v1903 = vpop.f32.mrb[0].mxu0
        %1904 = vmatprep.mubr.bf16.mxu0 0
        %1905 = vmatmul.mubr.bf16.gmra.mrb[0].mxu0 %v1802
        %v1906 = vpop.f32.mrb[0].mxu0
        %v1907 = vadd.f32 0.0, %v1906
        %v1908 = vpop.f32.mrb[0].mxu0
        %v1909 = vpop.f32.mrb[0].mxu0
        %v1910 = vadd.f32 0.0, %v1909
        %v1911 = vpop.f32.mrb[0].mxu0
        %1912 = vmatprep.mubr.bf16.mxu0 0
        %1913 = vmatmul.mubr.bf16.gmra.mrb[0].mxu0 %v1805
        %v1914 = vpop.f32.mrb[0].mxu0
        %v1915 = vadd.f32 0.0, %v1914
        %v1916 = vpop.f32.mrb[0].mxu0
        %v1917 = vpop.f32.mrb[0].mxu0
        %v1918 = vadd.f32 0.0, %v1917
        %v1919 = vpop.f32.mrb[0].mxu0
        %1920 = vmatprep.mubr.bf16.mxu0 0
        %1921 = vmatmul.mubr.bf16.gmra.mrb[0].mxu0 %v1808
        %v1922 = vpop.f32.mrb[0].mxu0
        %v1923 = vadd.f32 0.0, %v1922
        %v1924 = vpop.f32.mrb[0].mxu0
        %v1925 = vpop.f32.mrb[0].mxu0
        %v1926 = vadd.f32 0.0, %v1925
        %v1927 = vpop.f32.mrb[0].mxu0
        %1928 = vmatprep.mubr.bf16.mxu0 0
        %1929 = vmatmul.mubr.bf16.gmra.mrb[0].mxu0 %v1811
        %v1930 = vpop.f32.mrb[0].mxu0
        %v1931 = vadd.f32 0.0, %v1930
        %v1932 = vpop.f32.mrb[0].mxu0
        %v1933 = vpop.f32.mrb[0].mxu0
        %v1934 = vadd.f32 0.0, %v1933
        %v1935 = vpop.f32.mrb[0].mxu0
        %1936 = vmatprep.mubr.bf16.mxu0 0
        %1937 = vmatmul.mubr.bf16.gmra.mrb[0].mxu0 %v1814
        %v1938 = vpop.f32.mrb[0].mxu0
        %v1939 = vadd.f32 0.0, %v1938
        %v1940 = vpop.f32.mrb[0].mxu0
        %v1941 = vpop.f32.mrb[0].mxu0
        %v1942 = vadd.f32 0.0, %v1941
        %v1943 = vpop.f32.mrb[0].mxu0
        %1944 = vmatprep.mubr.bf16.mxu0 0
        %1945 = vmatmul.mubr.bf16.gmra.mrb[0].mxu0 %v1817
        %v1946 = vpop.f32.mrb[0].mxu0
        %v1947 = vadd.f32 0.0, %v1946
        %v1948 = vpop.f32.mrb[0].mxu0
        %v1949 = vpop.f32.mrb[0].mxu0
        %v1950 = vadd.f32 0.0, %v1949
        %v1951 = vpop.f32.mrb[0].mxu0
        %1952 = vmatprep.mubr.bf16.mxu0 0
        %1953 = vmatmul.mubr.bf16.gmra.mrb[0].mxu0 %v1820
        %v1954 = vpop.f32.mrb[0].mxu0
        %v1955 = vadd.f32 0.0, %v1954
        %v1956 = vpop.f32.mrb[0].mxu0
        %v1957 = vpop.f32.mrb[0].mxu0
        %v1958 = vadd.f32 0.0, %v1957
        %v1959 = vpop.f32.mrb[0].mxu0
        %1960 = vmatprep.mubr.bf16.mxu0 0
        %1961 = vmatmul.mubr.bf16.gmra.mrb[0].mxu0 %v1823
        %v1962 = vpop.f32.mrb[0].mxu0
        %v1963 = vadd.f32 0.0, %v1962
        %v1964 = vpop.f32.mrb[0].mxu0
        %v1965 = vpop.f32.mrb[0].mxu0
        %v1966 = vadd.f32 0.0, %v1965
        %v1967 = vpop.f32.mrb[0].mxu0
        %1968 = vmatprep.mubr.bf16.mxu0 0
        %1969 = vmatmul.mubr.bf16.gmra.mrb[0].mxu0 %v1826
        %v1970 = vpop.f32.mrb[0].mxu0
        %v1971 = vadd.f32 0.0, %v1970
        %v1972 = vpop.f32.mrb[0].mxu0
        %v1973 = vpop.f32.mrb[0].mxu0
        %v1974 = vadd.f32 0.0, %v1973
        %v1975 = vpop.f32.mrb[0].mxu0
        %1976 = vmatprep.mubr.bf16.mxu0 0
        %1977 = vmatmul.mubr.bf16.gmra.mrb[0].mxu0 %v1829
        %v1978 = vpop.f32.mrb[0].mxu0
        %v1979 = vadd.f32 0.0, %v1978
        %v1980 = vpop.f32.mrb[0].mxu0
        %v1981 = vpop.f32.mrb[0].mxu0
        %v1982 = vadd.f32 0.0, %v1981
        %v1983 = vpop.f32.mrb[0].mxu0
        %1984 = vmatprep.mubr.bf16.mxu0 0
        %1985 = vmatmul.mubr.bf16.gmra.mrb[0].mxu0 %v1832
        %v1986 = vpop.f32.mrb[0].mxu0
        %v1987 = vadd.f32 0.0, %v1986
        %v1988 = vpop.f32.mrb[0].mxu0
        %v1989 = vpop.f32.mrb[0].mxu0
        %v1990 = vadd.f32 0.0, %v1989
        %v1991 = vpop.f32.mrb[0].mxu0
        %1992 = vmatprep.mubr.bf16.mxu0 0
        %1993 = vmatmul.mubr.bf16.gmra.mrb[0].mxu0 %v1835
        %v1994 = vpop.f32.mrb[0].mxu0
        %v1995 = vadd.f32 0.0, %v1994
        %v1996 = vpop.f32.mrb[0].mxu0
        %v1997 = vpop.f32.mrb[0].mxu0
        %v1998 = vadd.f32 0.0, %v1997
        %v1999 = vpop.f32.mrb[0].mxu0
        %2000 = vdwg.mxu0
        %v2001 = vadd.f32 %v1739, %v1875
        %v2002 = vadd.f32 %v1740, %v1878
        %v2003 = vadd.f32 %v1741, %v1883
        %v2004 = vadd.f32 %v1742, %v1886
        %v2005 = vadd.f32 %v1743, %v1891
        %v2006 = vadd.f32 %v1744, %v1894
        %v2007 = vadd.f32 %v1745, %v1899
        %v2008 = vadd.f32 %v1746, %v1902
        %v2009 = vadd.f32 %v1747, %v1907
        %v2010 = vadd.f32 %v1748, %v1910
        %v2011 = vadd.f32 %v1749, %v1915
        %v2012 = vadd.f32 %v1750, %v1918
        %v2013 = vadd.f32 %v1751, %v1923
        %v2014 = vadd.f32 %v1752, %v1926
        %v2015 = vadd.f32 %v1753, %v1931
        %v2016 = vadd.f32 %v1754, %v1934
        %v2017 = vadd.f32 %v1755, %v1939
        %v2018 = vadd.f32 %v1756, %v1942
        %v2019 = vadd.f32 %v1757, %v1947
        %v2020 = vadd.f32 %v1758, %v1950
        %v2021 = vadd.f32 %v1759, %v1955
        %v2022 = vadd.f32 %v1760, %v1958
        %v2023 = vadd.f32 %v1761, %v1963
        %v2024 = vadd.f32 %v1762, %v1966
        %v2025 = vadd.f32 %v1763, %v1971
        %v2026 = vadd.f32 %v1764, %v1974
        %v2027 = vadd.f32 %v1765, %v1979
        %v2028 = vadd.f32 %v1766, %v1982
        %v2029 = vadd.f32 %v1767, %v1987
        %v2030 = vadd.f32 %v1768, %v1990
        %v2031 = vadd.f32 %v1769, %v1995
        %v2032 = vadd.f32 %v1770, %v1998
        %v2081 = vrot.slane %v542, 1
        %v2082 = vrot.slane %v543, 1
        %v2083 = vsel %vm1134, %v2081, %v2082
        %v2084 = vrot.slane %v544, 1
        %v2085 = vsel %vm1134, %v2082, %v2084
        %v2086 = vrot.slane %v545, 1
        %v2087 = vrot.slane %v546, 1
        %v2088 = vsel %vm1134, %v2086, %v2087
        %v2089 = vrot.slane %v547, 1
        %v2090 = vsel %vm1134, %v2087, %v2089
        %v2091 = vrot.slane %v548, 1
        %v2092 = vrot.slane %v549, 1
        %v2093 = vsel %vm1134, %v2091, %v2092
        %v2094 = vrot.slane %v550, 1
        %v2095 = vsel %vm1134, %v2092, %v2094
        %v2096 = vrot.slane %v551, 1
        %v2097 = vrot.slane %v552, 1
        %v2098 = vsel %vm1134, %v2096, %v2097
        %v2099 = vrot.slane %v553, 1
        %v2100 = vsel %vm1134, %v2097, %v2099
        %v2101 = vrot.slane %v554, 1
        %v2102 = vrot.slane %v555, 1
        %v2103 = vsel %vm1134, %v2101, %v2102
        %v2104 = vrot.slane %v556, 1
        %v2105 = vsel %vm1134, %v2102, %v2104
        %v2106 = vrot.slane %v557, 1
        %v2107 = vrot.slane %v558, 1
        %v2108 = vsel %vm1134, %v2106, %v2107
        %v2109 = vrot.slane %v559, 1
        %v2110 = vsel %vm1134, %v2107, %v2109
        %v2111 = vrot.slane %v560, 1
        %v2112 = vrot.slane %v561, 1
        %v2113 = vsel %vm1134, %v2111, %v2112
        %v2114 = vrot.slane %v562, 1
        %v2115 = vsel %vm1134, %v2112, %v2114
        %v2116 = vrot.slane %v563, 1
        %v2117 = vrot.slane %v564, 1
        %v2118 = vsel %vm1134, %v2116, %v2117
        %v2119 = vrot.slane %v565, 1
        %v2120 = vsel %vm1134, %v2117, %v2119
        %v2121 = vrot.slane %v566, 1
        %v2122 = vrot.slane %v567, 1
        %v2123 = vsel %vm1134, %v2121, %v2122
        %v2124 = vrot.slane %v568, 1
        %v2125 = vsel %vm1134, %v2122, %v2124
        %v2126 = vrot.slane %v569, 1
        %v2127 = vrot.slane %v570, 1
        %v2128 = vsel %vm1134, %v2126, %v2127
        %v2129 = vrot.slane %v571, 1
        %v2130 = vsel %vm1134, %v2127, %v2129
        %v2131 = vrot.slane %v572, 1
        %v2132 = vrot.slane %v573, 1
        %v2133 = vsel %vm1134, %v2131, %v2132
        %v2134 = vrot.slane %v574, 1
        %v2135 = vsel %vm1134, %v2132, %v2134
        %v2136 = vrot.slane %v575, 1
        %v2137 = vrot.slane %v576, 1
        %v2138 = vsel %vm1134, %v2136, %v2137
        %v2139 = vrot.slane %v577, 1
        %v2140 = vsel %vm1134, %v2137, %v2139
        %v2141 = vrot.slane %v578, 1
        %v2142 = vrot.slane %v579, 1
        %v2143 = vsel %vm1134, %v2141, %v2142
        %v2144 = vrot.slane %v580, 1
        %v2145 = vsel %vm1134, %v2142, %v2144
        %v2146 = vrot.slane %v581, 1
        %v2147 = vrot.slane %v582, 1
        %v2148 = vsel %vm1134, %v2146, %v2147
        %v2149 = vrot.slane %v583, 1
        %v2150 = vsel %vm1134, %v2147, %v2149
        %v2151 = vrot.slane %v584, 1
        %v2152 = vrot.slane %v585, 1
        %v2153 = vsel %vm1134, %v2151, %v2152
        %v2154 = vrot.slane %v586, 1
        %v2155 = vsel %vm1134, %v2152, %v2154
        %v2156 = vrot.slane %v587, 1
        %v2157 = vrot.slane %v588, 1
        %v2158 = vsel %vm1134, %v2156, %v2157
        %v2159 = vrot.slane %v589, 1
        %v2160 = vsel %vm1134, %v2157, %v2159
        %v2193 = vpack.c.bf16 %v2085, %v2083
        %v2194 = vpack.c.bf16 %v2090, %v2088
        %v2195 = vpack.c.bf16 %v2095, %v2093
        %v2196 = vpack.c.bf16 %v2100, %v2098
        %v2197 = vpack.c.bf16 %v2105, %v2103
        %v2198 = vpack.c.bf16 %v2110, %v2108
        %v2199 = vpack.c.bf16 %v2115, %v2113
        %v2200 = vpack.c.bf16 %v2120, %v2118
        %v2201 = vpack.c.bf16 %v2125, %v2123
        %v2202 = vpack.c.bf16 %v2130, %v2128
        %v2203 = vpack.c.bf16 %v2135, %v2133
        %v2204 = vpack.c.bf16 %v2140, %v2138
        %v2205 = vpack.c.bf16 %v2145, %v2143
        %v2206 = vpack.c.bf16 %v2150, %v2148
        %v2207 = vpack.c.bf16 %v2155, %v2153
        %v2208 = vpack.c.bf16 %v2160, %v2158
        %s2209 = scalar_lea.vmem %s4, 10
        %v2210 = vld [vmem:[%s2209] sm:$0x3]
        %v2212 = vsel %vm657, %v2193, 0
        %v2215 = vsel %vm657, %v2194, 0
        %v2218 = vsel %vm657, %v2195, 0
        %v2221 = vsel %vm657, %v2196, 0
        %v2224 = vsel %vm657, %v2197, 0
        %v2227 = vsel %vm657, %v2198, 0
        %v2230 = vsel %vm657, %v2199, 0
        %v2233 = vsel %vm657, %v2200, 0
        %v2236 = vsel %vm657, %v2201, 0
        %v2239 = vsel %vm657, %v2202, 0
        %v2242 = vsel %vm657, %v2203, 0
        %v2245 = vsel %vm657, %v2204, 0
        %v2248 = vsel %vm657, %v2205, 0
        %v2251 = vsel %vm657, %v2206, 0
        %v2254 = vsel %vm657, %v2207, 0
        %v2257 = vsel %vm657, %v2208, 0
        %v2260 = vand.u32 %v2210, %v709
        %2262 = vmatprep.subr.bf16.mxu0 0
        %2263 = vmatpush1.bf16.msra.mxu0 %v2260
        %2264 = vmatprep.subr.bf16.mxu0 0
        %2265 = vmatpush1.bf16.msra.mxu0 0
        %2266 = vmatprep.subr.bf16.mxu0 0
        %2267 = vmatpush1.bf16.msra.mxu0 0
        %2268 = vmatprep.subr.bf16.mxu0 0
        %2269 = vmatpush1.bf16.msra.mxu0 0
        %2270 = vmatprep.subr.bf16.mxu0 0
        %2271 = vmatpush1.bf16.msra.mxu0 0
        %2272 = vmatprep.subr.bf16.mxu0 0
        %2273 = vmatpush1.bf16.msra.mxu0 0
        %2274 = vmatprep.subr.bf16.mxu0 0
        %2275 = vmatpush1.bf16.msra.mxu0 0
        %2276 = vmatprep.subr.bf16.mxu0 0
        %2277 = vmatpush1.bf16.msra.mxu0 0
        %2278 = vmatprep.subr.bf16.mxu0 0
        %2279 = vmatpush1.bf16.msra.mxu0 0
        %2280 = vmatprep.subr.bf16.mxu0 0
        %2281 = vmatpush1.bf16.msra.mxu0 0
        %2282 = vmatprep.subr.bf16.mxu0 0
        %2283 = vmatpush1.bf16.msra.mxu0 0
        %2284 = vmatprep.subr.bf16.mxu0 0
        %2285 = vmatpush1.bf16.msra.mxu0 0
        %2286 = vmatprep.subr.bf16.mxu0 0
        %2287 = vmatpush1.bf16.msra.mxu0 0
        %2288 = vmatprep.subr.bf16.mxu0 0
        %2289 = vmatpush1.bf16.msra.mxu0 0
        %2290 = vmatprep.subr.bf16.mxu0 0
        %2291 = vmatpush1.bf16.msra.mxu0 0
        %2292 = vmatprep.subr.bf16.mxu0 0
        %2293 = vmatpush1.bf16.msra.mxu0 0
        %2294 = vmatprep.mubr.bf16.mxu0 0
        %2295 = vmatmul.mubr.bf16.gmra.mrb[0].mxu0 %v2212
        %v2296 = vpop.f32.mrb[0].mxu0
        %v2297 = vadd.f32 0.0, %v2296
        %v2298 = vpop.f32.mrb[0].mxu0
        %v2299 = vpop.f32.mrb[0].mxu0
        %v2300 = vadd.f32 0.0, %v2299
        %v2301 = vpop.f32.mrb[0].mxu0
        %2302 = vmatprep.mubr.bf16.mxu0 0
        %2303 = vmatmul.mubr.bf16.gmra.mrb[0].mxu0 %v2215
        %v2304 = vpop.f32.mrb[0].mxu0
        %v2305 = vadd.f32 0.0, %v2304
        %v2306 = vpop.f32.mrb[0].mxu0
        %v2307 = vpop.f32.mrb[0].mxu0
        %v2308 = vadd.f32 0.0, %v2307
        %v2309 = vpop.f32.mrb[0].mxu0
        %2310 = vmatprep.mubr.bf16.mxu0 0
        %2311 = vmatmul.mubr.bf16.gmra.mrb[0].mxu0 %v2218
        %v2312 = vpop.f32.mrb[0].mxu0
        %v2313 = vadd.f32 0.0, %v2312
        %v2314 = vpop.f32.mrb[0].mxu0
        %v2315 = vpop.f32.mrb[0].mxu0
        %v2316 = vadd.f32 0.0, %v2315
        %v2317 = vpop.f32.mrb[0].mxu0
        %2318 = vmatprep.mubr.bf16.mxu0 0
        %2319 = vmatmul.mubr.bf16.gmra.mrb[0].mxu0 %v2221
        %v2320 = vpop.f32.mrb[0].mxu0
        %v2321 = vadd.f32 0.0, %v2320
        %v2322 = vpop.f32.mrb[0].mxu0
        %v2323 = vpop.f32.mrb[0].mxu0
        %v2324 = vadd.f32 0.0, %v2323
        %v2325 = vpop.f32.mrb[0].mxu0
        %2326 = vmatprep.mubr.bf16.mxu0 0
        %2327 = vmatmul.mubr.bf16.gmra.mrb[0].mxu0 %v2224
        %v2328 = vpop.f32.mrb[0].mxu0
        %v2329 = vadd.f32 0.0, %v2328
        %v2330 = vpop.f32.mrb[0].mxu0
        %v2331 = vpop.f32.mrb[0].mxu0
        %v2332 = vadd.f32 0.0, %v2331
        %v2333 = vpop.f32.mrb[0].mxu0
        %2334 = vmatprep.mubr.bf16.mxu0 0
        %2335 = vmatmul.mubr.bf16.gmra.mrb[0].mxu0 %v2227
        %v2336 = vpop.f32.mrb[0].mxu0
        %v2337 = vadd.f32 0.0, %v2336
        %v2338 = vpop.f32.mrb[0].mxu0
        %v2339 = vpop.f32.mrb[0].mxu0
        %v2340 = vadd.f32 0.0, %v2339
        %v2341 = vpop.f32.mrb[0].mxu0
        %2342 = vmatprep.mubr.bf16.mxu0 0
        %2343 = vmatmul.mubr.bf16.gmra.mrb[0].mxu0 %v2230
        %v2344 = vpop.f32.mrb[0].mxu0
        %v2345 = vadd.f32 0.0, %v2344
        %v2346 = vpop.f32.mrb[0].mxu0
        %v2347 = vpop.f32.mrb[0].mxu0
        %v2348 = vadd.f32 0.0, %v2347
        %v2349 = vpop.f32.mrb[0].mxu0
        %2350 = vmatprep.mubr.bf16.mxu0 0
        %2351 = vmatmul.mubr.bf16.gmra.mrb[0].mxu0 %v2233
        %v2352 = vpop.f32.mrb[0].mxu0
        %v2353 = vadd.f32 0.0, %v2352
        %v2354 = vpop.f32.mrb[0].mxu0
        %v2355 = vpop.f32.mrb[0].mxu0
        %v2356 = vadd.f32 0.0, %v2355
        %v2357 = vpop.f32.mrb[0].mxu0
        %2358 = vmatprep.mubr.bf16.mxu0 0
        %2359 = vmatmul.mubr.bf16.gmra.mrb[0].mxu0 %v2236
        %v2360 = vpop.f32.mrb[0].mxu0
        %v2361 = vadd.f32 0.0, %v2360
        %v2362 = vpop.f32.mrb[0].mxu0
        %v2363 = vpop.f32.mrb[0].mxu0
        %v2364 = vadd.f32 0.0, %v2363
        %v2365 = vpop.f32.mrb[0].mxu0
        %2366 = vmatprep.mubr.bf16.mxu0 0
        %2367 = vmatmul.mubr.bf16.gmra.mrb[0].mxu0 %v2239
        %v2368 = vpop.f32.mrb[0].mxu0
        %v2369 = vadd.f32 0.0, %v2368
        %v2370 = vpop.f32.mrb[0].mxu0
        %v2371 = vpop.f32.mrb[0].mxu0
        %v2372 = vadd.f32 0.0, %v2371
        %v2373 = vpop.f32.mrb[0].mxu0
        %2374 = vmatprep.mubr.bf16.mxu0 0
        %2375 = vmatmul.mubr.bf16.gmra.mrb[0].mxu0 %v2242
        %v2376 = vpop.f32.mrb[0].mxu0
        %v2377 = vadd.f32 0.0, %v2376
        %v2378 = vpop.f32.mrb[0].mxu0
        %v2379 = vpop.f32.mrb[0].mxu0
        %v2380 = vadd.f32 0.0, %v2379
        %v2381 = vpop.f32.mrb[0].mxu0
        %2382 = vmatprep.mubr.bf16.mxu0 0
        %2383 = vmatmul.mubr.bf16.gmra.mrb[0].mxu0 %v2245
        %v2384 = vpop.f32.mrb[0].mxu0
        %v2385 = vadd.f32 0.0, %v2384
        %v2386 = vpop.f32.mrb[0].mxu0
        %v2387 = vpop.f32.mrb[0].mxu0
        %v2388 = vadd.f32 0.0, %v2387
        %v2389 = vpop.f32.mrb[0].mxu0
        %2390 = vmatprep.mubr.bf16.mxu0 0
        %2391 = vmatmul.mubr.bf16.gmra.mrb[0].mxu0 %v2248
        %v2392 = vpop.f32.mrb[0].mxu0
        %v2393 = vadd.f32 0.0, %v2392
        %v2394 = vpop.f32.mrb[0].mxu0
        %v2395 = vpop.f32.mrb[0].mxu0
        %v2396 = vadd.f32 0.0, %v2395
        %v2397 = vpop.f32.mrb[0].mxu0
        %2398 = vmatprep.mubr.bf16.mxu0 0
        %2399 = vmatmul.mubr.bf16.gmra.mrb[0].mxu0 %v2251
        %v2400 = vpop.f32.mrb[0].mxu0
        %v2401 = vadd.f32 0.0, %v2400
        %v2402 = vpop.f32.mrb[0].mxu0
        %v2403 = vpop.f32.mrb[0].mxu0
        %v2404 = vadd.f32 0.0, %v2403
        %v2405 = vpop.f32.mrb[0].mxu0
        %2406 = vmatprep.mubr.bf16.mxu0 0
        %2407 = vmatmul.mubr.bf16.gmra.mrb[0].mxu0 %v2254
        %v2408 = vpop.f32.mrb[0].mxu0
        %v2409 = vadd.f32 0.0, %v2408
        %v2410 = vpop.f32.mrb[0].mxu0
        %v2411 = vpop.f32.mrb[0].mxu0
        %v2412 = vadd.f32 0.0, %v2411
        %v2413 = vpop.f32.mrb[0].mxu0
        %2414 = vmatprep.mubr.bf16.mxu0 0
        %2415 = vmatmul.mubr.bf16.gmra.mrb[0].mxu0 %v2257
        %v2416 = vpop.f32.mrb[0].mxu0
        %v2417 = vadd.f32 0.0, %v2416
        %v2418 = vpop.f32.mrb[0].mxu0
        %v2419 = vpop.f32.mrb[0].mxu0
        %v2420 = vadd.f32 0.0, %v2419
        %v2421 = vpop.f32.mrb[0].mxu0
        %2422 = vdwg.mxu0
        %v2423 = vadd.f32 %v2001, %v2297
        %v2424 = vadd.f32 %v2002, %v2300
        %v2425 = vadd.f32 %v2003, %v2305
        %v2426 = vadd.f32 %v2004, %v2308
        %v2427 = vadd.f32 %v2005, %v2313
        %v2428 = vadd.f32 %v2006, %v2316
        %v2429 = vadd.f32 %v2007, %v2321
        %v2430 = vadd.f32 %v2008, %v2324
        %v2431 = vadd.f32 %v2009, %v2329
        %v2432 = vadd.f32 %v2010, %v2332
        %v2433 = vadd.f32 %v2011, %v2337
        %v2434 = vadd.f32 %v2012, %v2340
        %v2435 = vadd.f32 %v2013, %v2345
        %v2436 = vadd.f32 %v2014, %v2348
        %v2437 = vadd.f32 %v2015, %v2353
        %v2438 = vadd.f32 %v2016, %v2356
        %v2439 = vadd.f32 %v2017, %v2361
        %v2440 = vadd.f32 %v2018, %v2364
        %v2441 = vadd.f32 %v2019, %v2369
        %v2442 = vadd.f32 %v2020, %v2372
        %v2443 = vadd.f32 %v2021, %v2377
        %v2444 = vadd.f32 %v2022, %v2380
        %v2445 = vadd.f32 %v2023, %v2385
        %v2446 = vadd.f32 %v2024, %v2388
        %v2447 = vadd.f32 %v2025, %v2393
        %v2448 = vadd.f32 %v2026, %v2396
        %v2449 = vadd.f32 %v2027, %v2401
        %v2450 = vadd.f32 %v2028, %v2404
        %v2451 = vadd.f32 %v2029, %v2409
        %v2452 = vadd.f32 %v2030, %v2412
        %v2453 = vadd.f32 %v2031, %v2417
        %v2454 = vadd.f32 %v2032, %v2420
        %v2455 = vpack.c.bf16 %v506, %v505
        %s2456 = scalar_lea.vmem %s4, 12
        %v2457 = vld [vmem:[%s2456] sm:$0x3]
        %v2459 = vsel %vm657, %v2455, 0
        %v2462 = vand.u32 %v2457, %v709
        %2464 = vmatprep.subr.bf16.mxu0 0
        %2465 = vmatpush1.bf16.msra.mxu0 %v2462
        %2466 = vmatprep.subr.bf16.mxu0 0
        %2467 = vmatpush1.bf16.msra.mxu0 0
        %2468 = vmatprep.subr.bf16.mxu0 0
        %2469 = vmatpush1.bf16.msra.mxu0 0
        %2470 = vmatprep.subr.bf16.mxu0 0
        %2471 = vmatpush1.bf16.msra.mxu0 0
        %2472 = vmatprep.subr.bf16.mxu0 0
        %2473 = vmatpush1.bf16.msra.mxu0 0
        %2474 = vmatprep.subr.bf16.mxu0 0
        %2475 = vmatpush1.bf16.msra.mxu0 0
        %2476 = vmatprep.subr.bf16.mxu0 0
        %2477 = vmatpush1.bf16.msra.mxu0 0
        %2478 = vmatprep.subr.bf16.mxu0 0
        %2479 = vmatpush1.bf16.msra.mxu0 0
        %2480 = vmatprep.subr.bf16.mxu0 0
        %2481 = vmatpush1.bf16.msra.mxu0 0
        %2482 = vmatprep.subr.bf16.mxu0 0
        %2483 = vmatpush1.bf16.msra.mxu0 0
        %2484 = vmatprep.subr.bf16.mxu0 0
        %2485 = vmatpush1.bf16.msra.mxu0 0
        %2486 = vmatprep.subr.bf16.mxu0 0
        %2487 = vmatpush1.bf16.msra.mxu0 0
        %2488 = vmatprep.subr.bf16.mxu0 0
        %2489 = vmatpush1.bf16.msra.mxu0 0
        %2490 = vmatprep.subr.bf16.mxu0 0
        %2491 = vmatpush1.bf16.msra.mxu0 0
        %2492 = vmatprep.subr.bf16.mxu0 0
        %2493 = vmatpush1.bf16.msra.mxu0 0
        %2494 = vmatprep.subr.bf16.mxu0 0
        %2495 = vmatpush1.bf16.msra.mxu0 0
        %2496 = vmatprep.mubr.bf16.mxu0 0
        %2497 = vmatmul.mubr.bf16.gmra.mrb[0].mxu0 %v878
        %v2498 = vpop.f32.mrb[0].mxu0
        %v2499 = vadd.f32 0.0, %v2498
        %v2500 = vpop.f32.mrb[0].mxu0
        %v2501 = vpop.f32.mrb[0].mxu0
        %v2502 = vadd.f32 0.0, %v2501
        %v2503 = vpop.f32.mrb[0].mxu0
        %2504 = vmatprep.mubr.bf16.mxu0 0
        %2505 = vmatmul.mubr.bf16.gmra.mrb[0].mxu0 %v881
        %v2506 = vpop.f32.mrb[0].mxu0
        %v2507 = vadd.f32 0.0, %v2506
        %v2508 = vpop.f32.mrb[0].mxu0
        %v2509 = vpop.f32.mrb[0].mxu0
        %v2510 = vadd.f32 0.0, %v2509
        %v2511 = vpop.f32.mrb[0].mxu0
        %2512 = vmatprep.mubr.bf16.mxu0 0
        %2513 = vmatmul.mubr.bf16.gmra.mrb[0].mxu0 %v884
        %v2514 = vpop.f32.mrb[0].mxu0
        %v2515 = vadd.f32 0.0, %v2514
        %v2516 = vpop.f32.mrb[0].mxu0
        %v2517 = vpop.f32.mrb[0].mxu0
        %v2518 = vadd.f32 0.0, %v2517
        %v2519 = vpop.f32.mrb[0].mxu0
        %2520 = vmatprep.mubr.bf16.mxu0 0
        %2521 = vmatmul.mubr.bf16.gmra.mrb[0].mxu0 %v887
        %v2522 = vpop.f32.mrb[0].mxu0
        %v2523 = vadd.f32 0.0, %v2522
        %v2524 = vpop.f32.mrb[0].mxu0
        %v2525 = vpop.f32.mrb[0].mxu0
        %v2526 = vadd.f32 0.0, %v2525
        %v2527 = vpop.f32.mrb[0].mxu0
        %2528 = vmatprep.mubr.bf16.mxu0 0
        %2529 = vmatmul.mubr.bf16.gmra.mrb[0].mxu0 %v890
        %v2530 = vpop.f32.mrb[0].mxu0
        %v2531 = vadd.f32 0.0, %v2530
        %v2532 = vpop.f32.mrb[0].mxu0
        %v2533 = vpop.f32.mrb[0].mxu0
        %v2534 = vadd.f32 0.0, %v2533
        %v2535 = vpop.f32.mrb[0].mxu0
        %2536 = vmatprep.mubr.bf16.mxu0 0
        %2537 = vmatmul.mubr.bf16.gmra.mrb[0].mxu0 %v893
        %v2538 = vpop.f32.mrb[0].mxu0
        %v2539 = vadd.f32 0.0, %v2538
        %v2540 = vpop.f32.mrb[0].mxu0
        %v2541 = vpop.f32.mrb[0].mxu0
        %v2542 = vadd.f32 0.0, %v2541
        %v2543 = vpop.f32.mrb[0].mxu0
        %2544 = vmatprep.mubr.bf16.mxu0 0
        %2545 = vmatmul.mubr.bf16.gmra.mrb[0].mxu0 %v896
        %v2546 = vpop.f32.mrb[0].mxu0
        %v2547 = vadd.f32 0.0, %v2546
        %v2548 = vpop.f32.mrb[0].mxu0
        %v2549 = vpop.f32.mrb[0].mxu0
        %v2550 = vadd.f32 0.0, %v2549
        %v2551 = vpop.f32.mrb[0].mxu0
        %2552 = vmatprep.mubr.bf16.mxu0 0
        %2553 = vmatmul.mubr.bf16.gmra.mrb[0].mxu0 %v899
        %v2554 = vpop.f32.mrb[0].mxu0
        %v2555 = vadd.f32 0.0, %v2554
        %v2556 = vpop.f32.mrb[0].mxu0
        %v2557 = vpop.f32.mrb[0].mxu0
        %v2558 = vadd.f32 0.0, %v2557
        %v2559 = vpop.f32.mrb[0].mxu0
        %2560 = vmatprep.mubr.bf16.mxu0 0
        %2561 = vmatmul.mubr.bf16.gmra.mrb[0].mxu0 %v902
        %v2562 = vpop.f32.mrb[0].mxu0
        %v2563 = vadd.f32 0.0, %v2562
        %v2564 = vpop.f32.mrb[0].mxu0
        %v2565 = vpop.f32.mrb[0].mxu0
        %v2566 = vadd.f32 0.0, %v2565
        %v2567 = vpop.f32.mrb[0].mxu0
        %2568 = vmatprep.mubr.bf16.mxu0 0
        %2569 = vmatmul.mubr.bf16.gmra.mrb[0].mxu0 %v905
        %v2570 = vpop.f32.mrb[0].mxu0
        %v2571 = vadd.f32 0.0, %v2570
        %v2572 = vpop.f32.mrb[0].mxu0
        %v2573 = vpop.f32.mrb[0].mxu0
        %v2574 = vadd.f32 0.0, %v2573
        %v2575 = vpop.f32.mrb[0].mxu0
        %2576 = vmatprep.mubr.bf16.mxu0 0
        %2577 = vmatmul.mubr.bf16.gmra.mrb[0].mxu0 %v908
        %v2578 = vpop.f32.mrb[0].mxu0
        %v2579 = vadd.f32 0.0, %v2578
        %v2580 = vpop.f32.mrb[0].mxu0
        %v2581 = vpop.f32.mrb[0].mxu0
        %v2582 = vadd.f32 0.0, %v2581
        %v2583 = vpop.f32.mrb[0].mxu0
        %2584 = vmatprep.mubr.bf16.mxu0 0
        %2585 = vmatmul.mubr.bf16.gmra.mrb[0].mxu0 %v911
        %v2586 = vpop.f32.mrb[0].mxu0
        %v2587 = vadd.f32 0.0, %v2586
        %v2588 = vpop.f32.mrb[0].mxu0
        %v2589 = vpop.f32.mrb[0].mxu0
        %v2590 = vadd.f32 0.0, %v2589
        %v2591 = vpop.f32.mrb[0].mxu0
        %2592 = vmatprep.mubr.bf16.mxu0 0
        %2593 = vmatmul.mubr.bf16.gmra.mrb[0].mxu0 %v914
        %v2594 = vpop.f32.mrb[0].mxu0
        %v2595 = vadd.f32 0.0, %v2594
        %v2596 = vpop.f32.mrb[0].mxu0
        %v2597 = vpop.f32.mrb[0].mxu0
        %v2598 = vadd.f32 0.0, %v2597
        %v2599 = vpop.f32.mrb[0].mxu0
        %2600 = vmatprep.mubr.bf16.mxu0 0
        %2601 = vmatmul.mubr.bf16.gmra.mrb[0].mxu0 %v917
        %v2602 = vpop.f32.mrb[0].mxu0
        %v2603 = vadd.f32 0.0, %v2602
        %v2604 = vpop.f32.mrb[0].mxu0
        %v2605 = vpop.f32.mrb[0].mxu0
        %v2606 = vadd.f32 0.0, %v2605
        %v2607 = vpop.f32.mrb[0].mxu0
        %2608 = vmatprep.mubr.bf16.mxu0 0
        %2609 = vmatmul.mubr.bf16.gmra.mrb[0].mxu0 %v920
        %v2610 = vpop.f32.mrb[0].mxu0
        %v2611 = vadd.f32 0.0, %v2610
        %v2612 = vpop.f32.mrb[0].mxu0
        %v2613 = vpop.f32.mrb[0].mxu0
        %v2614 = vadd.f32 0.0, %v2613
        %v2615 = vpop.f32.mrb[0].mxu0
        %2616 = vmatprep.mubr.bf16.mxu0 0
        %2617 = vmatmul.mubr.bf16.gmra.mrb[0].mxu0 %v2459
        %v2618 = vpop.f32.mrb[0].mxu0
        %v2619 = vadd.f32 0.0, %v2618
        %v2620 = vpop.f32.mrb[0].mxu0
        %v2621 = vpop.f32.mrb[0].mxu0
        %v2622 = vadd.f32 0.0, %v2621
        %v2623 = vpop.f32.mrb[0].mxu0
        %2624 = vdwg.mxu0
        %v2625 = vadd.f32 %v2423, %v2499
        %v2626 = vadd.f32 %v2424, %v2502
        %v2627 = vadd.f32 %v2425, %v2507
        %v2628 = vadd.f32 %v2426, %v2510
        %v2629 = vadd.f32 %v2427, %v2515
        %v2630 = vadd.f32 %v2428, %v2518
        %v2631 = vadd.f32 %v2429, %v2523
        %v2632 = vadd.f32 %v2430, %v2526
        %v2633 = vadd.f32 %v2431, %v2531
        %v2634 = vadd.f32 %v2432, %v2534
        %v2635 = vadd.f32 %v2433, %v2539
        %v2636 = vadd.f32 %v2434, %v2542
        %v2637 = vadd.f32 %v2435, %v2547
        %v2638 = vadd.f32 %v2436, %v2550
        %v2639 = vadd.f32 %v2437, %v2555
        %v2640 = vadd.f32 %v2438, %v2558
        %v2641 = vadd.f32 %v2439, %v2563
        %v2642 = vadd.f32 %v2440, %v2566
        %v2643 = vadd.f32 %v2441, %v2571
        %v2644 = vadd.f32 %v2442, %v2574
        %v2645 = vadd.f32 %v2443, %v2579
        %v2646 = vadd.f32 %v2444, %v2582
        %v2647 = vadd.f32 %v2445, %v2587
        %v2648 = vadd.f32 %v2446, %v2590
        %v2649 = vadd.f32 %v2447, %v2595
        %v2650 = vadd.f32 %v2448, %v2598
        %v2651 = vadd.f32 %v2449, %v2603
        %v2652 = vadd.f32 %v2450, %v2606
        %v2653 = vadd.f32 %v2451, %v2611
        %v2654 = vadd.f32 %v2452, %v2614
        %v2655 = vadd.f32 %v2453, %v2619
        %v2656 = vadd.f32 %v2454, %v2622
        %v2657 = vpack.c.bf16 %v541, %v540
        %s2658 = scalar_lea.vmem %s4, 14
        %v2659 = vld [vmem:[%s2658] sm:$0x3]
        %v2661 = vsel %vm657, %v2657, 0
        %v2664 = vand.u32 %v2659, %v709
        %2666 = vmatprep.subr.bf16.mxu0 0
        %2667 = vmatpush1.bf16.msra.mxu0 %v2664
        %2668 = vmatprep.subr.bf16.mxu0 0
        %2669 = vmatpush1.bf16.msra.mxu0 0
        %2670 = vmatprep.subr.bf16.mxu0 0
        %2671 = vmatpush1.bf16.msra.mxu0 0
        %2672 = vmatprep.subr.bf16.mxu0 0
        %2673 = vmatpush1.bf16.msra.mxu0 0
        %2674 = vmatprep.subr.bf16.mxu0 0
        %2675 = vmatpush1.bf16.msra.mxu0 0
        %2676 = vmatprep.subr.bf16.mxu0 0
        %2677 = vmatpush1.bf16.msra.mxu0 0
        %2678 = vmatprep.subr.bf16.mxu0 0
        %2679 = vmatpush1.bf16.msra.mxu0 0
        %2680 = vmatprep.subr.bf16.mxu0 0
        %2681 = vmatpush1.bf16.msra.mxu0 0
        %2682 = vmatprep.subr.bf16.mxu0 0
        %2683 = vmatpush1.bf16.msra.mxu0 0
        %2684 = vmatprep.subr.bf16.mxu0 0
        %2685 = vmatpush1.bf16.msra.mxu0 0
        %2686 = vmatprep.subr.bf16.mxu0 0
        %2687 = vmatpush1.bf16.msra.mxu0 0
        %2688 = vmatprep.subr.bf16.mxu0 0
        %2689 = vmatpush1.bf16.msra.mxu0 0
        %2690 = vmatprep.subr.bf16.mxu0 0
        %2691 = vmatpush1.bf16.msra.mxu0 0
        %2692 = vmatprep.subr.bf16.mxu0 0
        %2693 = vmatpush1.bf16.msra.mxu0 0
        %2694 = vmatprep.subr.bf16.mxu0 0
        %2695 = vmatpush1.bf16.msra.mxu0 0
        %2696 = vmatprep.subr.bf16.mxu0 0
        %2697 = vmatpush1.bf16.msra.mxu0 0
        %2698 = vmatprep.mubr.bf16.mxu0 0
        %2699 = vmatmul.mubr.bf16.gmra.mrb[0].mxu0 %v662
        %v2700 = vpop.f32.mrb[0].mxu0
        %v2701 = vadd.f32 0.0, %v2700
        %v2702 = vpop.f32.mrb[0].mxu0
        %v2703 = vpop.f32.mrb[0].mxu0
        %v2704 = vadd.f32 0.0, %v2703
        %v2705 = vpop.f32.mrb[0].mxu0
        %2706 = vmatprep.mubr.bf16.mxu0 0
        %2707 = vmatmul.mubr.bf16.gmra.mrb[0].mxu0 %v665
        %v2708 = vpop.f32.mrb[0].mxu0
        %v2709 = vadd.f32 0.0, %v2708
        %v2710 = vpop.f32.mrb[0].mxu0
        %v2711 = vpop.f32.mrb[0].mxu0
        %v2712 = vadd.f32 0.0, %v2711
        %v2713 = vpop.f32.mrb[0].mxu0
        %2714 = vmatprep.mubr.bf16.mxu0 0
        %2715 = vmatmul.mubr.bf16.gmra.mrb[0].mxu0 %v668
        %v2716 = vpop.f32.mrb[0].mxu0
        %v2717 = vadd.f32 0.0, %v2716
        %v2718 = vpop.f32.mrb[0].mxu0
        %v2719 = vpop.f32.mrb[0].mxu0
        %v2720 = vadd.f32 0.0, %v2719
        %v2721 = vpop.f32.mrb[0].mxu0
        %2722 = vmatprep.mubr.bf16.mxu0 0
        %2723 = vmatmul.mubr.bf16.gmra.mrb[0].mxu0 %v671
        %v2724 = vpop.f32.mrb[0].mxu0
        %v2725 = vadd.f32 0.0, %v2724
        %v2726 = vpop.f32.mrb[0].mxu0
        %v2727 = vpop.f32.mrb[0].mxu0
        %v2728 = vadd.f32 0.0, %v2727
        %v2729 = vpop.f32.mrb[0].mxu0
        %2730 = vmatprep.mubr.bf16.mxu0 0
        %2731 = vmatmul.mubr.bf16.gmra.mrb[0].mxu0 %v674
        %v2732 = vpop.f32.mrb[0].mxu0
        %v2733 = vadd.f32 0.0, %v2732
        %v2734 = vpop.f32.mrb[0].mxu0
        %v2735 = vpop.f32.mrb[0].mxu0
        %v2736 = vadd.f32 0.0, %v2735
        %v2737 = vpop.f32.mrb[0].mxu0
        %2738 = vmatprep.mubr.bf16.mxu0 0
        %2739 = vmatmul.mubr.bf16.gmra.mrb[0].mxu0 %v677
        %v2740 = vpop.f32.mrb[0].mxu0
        %v2741 = vadd.f32 0.0, %v2740
        %v2742 = vpop.f32.mrb[0].mxu0
        %v2743 = vpop.f32.mrb[0].mxu0
        %v2744 = vadd.f32 0.0, %v2743
        %v2745 = vpop.f32.mrb[0].mxu0
        %2746 = vmatprep.mubr.bf16.mxu0 0
        %2747 = vmatmul.mubr.bf16.gmra.mrb[0].mxu0 %v680
        %v2748 = vpop.f32.mrb[0].mxu0
        %v2749 = vadd.f32 0.0, %v2748
        %v2750 = vpop.f32.mrb[0].mxu0
        %v2751 = vpop.f32.mrb[0].mxu0
        %v2752 = vadd.f32 0.0, %v2751
        %v2753 = vpop.f32.mrb[0].mxu0
        %2754 = vmatprep.mubr.bf16.mxu0 0
        %2755 = vmatmul.mubr.bf16.gmra.mrb[0].mxu0 %v683
        %v2756 = vpop.f32.mrb[0].mxu0
        %v2757 = vadd.f32 0.0, %v2756
        %v2758 = vpop.f32.mrb[0].mxu0
        %v2759 = vpop.f32.mrb[0].mxu0
        %v2760 = vadd.f32 0.0, %v2759
        %v2761 = vpop.f32.mrb[0].mxu0
        %2762 = vmatprep.mubr.bf16.mxu0 0
        %2763 = vmatmul.mubr.bf16.gmra.mrb[0].mxu0 %v686
        %v2764 = vpop.f32.mrb[0].mxu0
        %v2765 = vadd.f32 0.0, %v2764
        %v2766 = vpop.f32.mrb[0].mxu0
        %v2767 = vpop.f32.mrb[0].mxu0
        %v2768 = vadd.f32 0.0, %v2767
        %v2769 = vpop.f32.mrb[0].mxu0
        %2770 = vmatprep.mubr.bf16.mxu0 0
        %2771 = vmatmul.mubr.bf16.gmra.mrb[0].mxu0 %v689
        %v2772 = vpop.f32.mrb[0].mxu0
        %v2773 = vadd.f32 0.0, %v2772
        %v2774 = vpop.f32.mrb[0].mxu0
        %v2775 = vpop.f32.mrb[0].mxu0
        %v2776 = vadd.f32 0.0, %v2775
        %v2777 = vpop.f32.mrb[0].mxu0
        %2778 = vmatprep.mubr.bf16.mxu0 0
        %2779 = vmatmul.mubr.bf16.gmra.mrb[0].mxu0 %v692
        %v2780 = vpop.f32.mrb[0].mxu0
        %v2781 = vadd.f32 0.0, %v2780
        %v2782 = vpop.f32.mrb[0].mxu0
        %v2783 = vpop.f32.mrb[0].mxu0
        %v2784 = vadd.f32 0.0, %v2783
        %v2785 = vpop.f32.mrb[0].mxu0
        %2786 = vmatprep.mubr.bf16.mxu0 0
        %2787 = vmatmul.mubr.bf16.gmra.mrb[0].mxu0 %v695
        %v2788 = vpop.f32.mrb[0].mxu0
        %v2789 = vadd.f32 0.0, %v2788
        %v2790 = vpop.f32.mrb[0].mxu0
        %v2791 = vpop.f32.mrb[0].mxu0
        %v2792 = vadd.f32 0.0, %v2791
        %v2793 = vpop.f32.mrb[0].mxu0
        %2794 = vmatprep.mubr.bf16.mxu0 0
        %2795 = vmatmul.mubr.bf16.gmra.mrb[0].mxu0 %v698
        %v2796 = vpop.f32.mrb[0].mxu0
        %v2797 = vadd.f32 0.0, %v2796
        %v2798 = vpop.f32.mrb[0].mxu0
        %v2799 = vpop.f32.mrb[0].mxu0
        %v2800 = vadd.f32 0.0, %v2799
        %v2801 = vpop.f32.mrb[0].mxu0
        %2802 = vmatprep.mubr.bf16.mxu0 0
        %2803 = vmatmul.mubr.bf16.gmra.mrb[0].mxu0 %v701
        %v2804 = vpop.f32.mrb[0].mxu0
        %v2805 = vadd.f32 0.0, %v2804
        %v2806 = vpop.f32.mrb[0].mxu0
        %v2807 = vpop.f32.mrb[0].mxu0
        %v2808 = vadd.f32 0.0, %v2807
        %v2809 = vpop.f32.mrb[0].mxu0
        %2810 = vmatprep.mubr.bf16.mxu0 0
        %2811 = vmatmul.mubr.bf16.gmra.mrb[0].mxu0 %v704
        %v2812 = vpop.f32.mrb[0].mxu0
        %v2813 = vadd.f32 0.0, %v2812
        %v2814 = vpop.f32.mrb[0].mxu0
        %v2815 = vpop.f32.mrb[0].mxu0
        %v2816 = vadd.f32 0.0, %v2815
        %v2817 = vpop.f32.mrb[0].mxu0
        %2818 = vmatprep.mubr.bf16.mxu0 0
        %2819 = vmatmul.mubr.bf16.gmra.mrb[0].mxu0 %v2661
        %v2820 = vpop.f32.mrb[0].mxu0
        %v2821 = vadd.f32 0.0, %v2820
        %v2822 = vpop.f32.mrb[0].mxu0
        %v2823 = vpop.f32.mrb[0].mxu0
        %v2824 = vadd.f32 0.0, %v2823
        %v2825 = vpop.f32.mrb[0].mxu0
        %2826 = vdwg.mxu0
        %v2827 = vadd.f32 %v2625, %v2701
        %v2828 = vadd.f32 %v2626, %v2704
        %v2829 = vadd.f32 %v2627, %v2709
        %v2830 = vadd.f32 %v2628, %v2712
        %v2831 = vadd.f32 %v2629, %v2717
        %v2832 = vadd.f32 %v2630, %v2720
        %v2833 = vadd.f32 %v2631, %v2725
        %v2834 = vadd.f32 %v2632, %v2728
        %v2835 = vadd.f32 %v2633, %v2733
        %v2836 = vadd.f32 %v2634, %v2736
        %v2837 = vadd.f32 %v2635, %v2741
        %v2838 = vadd.f32 %v2636, %v2744
        %v2839 = vadd.f32 %v2637, %v2749
        %v2840 = vadd.f32 %v2638, %v2752
        %v2841 = vadd.f32 %v2639, %v2757
        %v2842 = vadd.f32 %v2640, %v2760
        %v2843 = vadd.f32 %v2641, %v2765
        %v2844 = vadd.f32 %v2642, %v2768
        %v2845 = vadd.f32 %v2643, %v2773
        %v2846 = vadd.f32 %v2644, %v2776
        %v2847 = vadd.f32 %v2645, %v2781
        %v2848 = vadd.f32 %v2646, %v2784
        %v2849 = vadd.f32 %v2647, %v2789
        %v2850 = vadd.f32 %v2648, %v2792
        %v2851 = vadd.f32 %v2649, %v2797
        %v2852 = vadd.f32 %v2650, %v2800
        %v2853 = vadd.f32 %v2651, %v2805
        %v2854 = vadd.f32 %v2652, %v2808
        %v2855 = vadd.f32 %v2653, %v2813
        %v2856 = vadd.f32 %v2654, %v2816
        %v2857 = vadd.f32 %v2655, %v2821
        %v2858 = vadd.f32 %v2656, %v2824
        %v2862 = vrot.slane %v505, 1
        %v2863 = vrot.slane %v506, 1
        %v2864 = vsel %vm1134, %v2862, %v2863
        %v2865 = vrot.slane %v507, 1
        %v2866 = vsel %vm1134, %v2863, %v2865
        %v2869 = vpack.c.bf16 %v2866, %v2864
        %s2870 = scalar_lea.vmem %s4, 16
        %v2871 = vld [vmem:[%s2870] sm:$0x3]
        %v2873 = vsel %vm657, %v2869, 0
        %v2876 = vand.u32 %v2871, %v709
        %2878 = vmatprep.subr.bf16.mxu0 0
        %2879 = vmatpush1.bf16.msra.mxu0 %v2876
        %2880 = vmatprep.subr.bf16.mxu0 0
        %2881 = vmatpush1.bf16.msra.mxu0 0
        %2882 = vmatprep.subr.bf16.mxu0 0
        %2883 = vmatpush1.bf16.msra.mxu0 0
        %2884 = vmatprep.subr.bf16.mxu0 0
        %2885 = vmatpush1.bf16.msra.mxu0 0
        %2886 = vmatprep.subr.bf16.mxu0 0
        %2887 = vmatpush1.bf16.msra.mxu0 0
        %2888 = vmatprep.subr.bf16.mxu0 0
        %2889 = vmatpush1.bf16.msra.mxu0 0
        %2890 = vmatprep.subr.bf16.mxu0 0
        %2891 = vmatpush1.bf16.msra.mxu0 0
        %2892 = vmatprep.subr.bf16.mxu0 0
        %2893 = vmatpush1.bf16.msra.mxu0 0
        %2894 = vmatprep.subr.bf16.mxu0 0
        %2895 = vmatpush1.bf16.msra.mxu0 0
        %2896 = vmatprep.subr.bf16.mxu0 0
        %2897 = vmatpush1.bf16.msra.mxu0 0
        %2898 = vmatprep.subr.bf16.mxu0 0
        %2899 = vmatpush1.bf16.msra.mxu0 0
        %2900 = vmatprep.subr.bf16.mxu0 0
        %2901 = vmatpush1.bf16.msra.mxu0 0
        %2902 = vmatprep.subr.bf16.mxu0 0
        %2903 = vmatpush1.bf16.msra.mxu0 0
        %2904 = vmatprep.subr.bf16.mxu0 0
        %2905 = vmatpush1.bf16.msra.mxu0 0
        %2906 = vmatprep.subr.bf16.mxu0 0
        %2907 = vmatpush1.bf16.msra.mxu0 0
        %2908 = vmatprep.subr.bf16.mxu0 0
        %2909 = vmatpush1.bf16.msra.mxu0 0
        %2910 = vmatprep.mubr.bf16.mxu0 0
        %2911 = vmatmul.mubr.bf16.gmra.mrb[0].mxu0 %v1269
        %v2912 = vpop.f32.mrb[0].mxu0
        %v2913 = vadd.f32 0.0, %v2912
        %v2914 = vpop.f32.mrb[0].mxu0
        %v2915 = vpop.f32.mrb[0].mxu0
        %v2916 = vadd.f32 0.0, %v2915
        %v2917 = vpop.f32.mrb[0].mxu0
        %2918 = vmatprep.mubr.bf16.mxu0 0
        %2919 = vmatmul.mubr.bf16.gmra.mrb[0].mxu0 %v1272
        %v2920 = vpop.f32.mrb[0].mxu0
        %v2921 = vadd.f32 0.0, %v2920
        %v2922 = vpop.f32.mrb[0].mxu0
        %v2923 = vpop.f32.mrb[0].mxu0
        %v2924 = vadd.f32 0.0, %v2923
        %v2925 = vpop.f32.mrb[0].mxu0
        %2926 = vmatprep.mubr.bf16.mxu0 0
        %2927 = vmatmul.mubr.bf16.gmra.mrb[0].mxu0 %v1275
        %v2928 = vpop.f32.mrb[0].mxu0
        %v2929 = vadd.f32 0.0, %v2928
        %v2930 = vpop.f32.mrb[0].mxu0
        %v2931 = vpop.f32.mrb[0].mxu0
        %v2932 = vadd.f32 0.0, %v2931
        %v2933 = vpop.f32.mrb[0].mxu0
        %2934 = vmatprep.mubr.bf16.mxu0 0
        %2935 = vmatmul.mubr.bf16.gmra.mrb[0].mxu0 %v1278
        %v2936 = vpop.f32.mrb[0].mxu0
        %v2937 = vadd.f32 0.0, %v2936
        %v2938 = vpop.f32.mrb[0].mxu0
        %v2939 = vpop.f32.mrb[0].mxu0
        %v2940 = vadd.f32 0.0, %v2939
        %v2941 = vpop.f32.mrb[0].mxu0
        %2942 = vmatprep.mubr.bf16.mxu0 0
        %2943 = vmatmul.mubr.bf16.gmra.mrb[0].mxu0 %v1281
        %v2944 = vpop.f32.mrb[0].mxu0
        %v2945 = vadd.f32 0.0, %v2944
        %v2946 = vpop.f32.mrb[0].mxu0
        %v2947 = vpop.f32.mrb[0].mxu0
        %v2948 = vadd.f32 0.0, %v2947
        %v2949 = vpop.f32.mrb[0].mxu0
        %2950 = vmatprep.mubr.bf16.mxu0 0
        %2951 = vmatmul.mubr.bf16.gmra.mrb[0].mxu0 %v1284
        %v2952 = vpop.f32.mrb[0].mxu0
        %v2953 = vadd.f32 0.0, %v2952
        %v2954 = vpop.f32.mrb[0].mxu0
        %v2955 = vpop.f32.mrb[0].mxu0
        %v2956 = vadd.f32 0.0, %v2955
        %v2957 = vpop.f32.mrb[0].mxu0
        %2958 = vmatprep.mubr.bf16.mxu0 0
        %2959 = vmatmul.mubr.bf16.gmra.mrb[0].mxu0 %v1287
        %v2960 = vpop.f32.mrb[0].mxu0
        %v2961 = vadd.f32 0.0, %v2960
        %v2962 = vpop.f32.mrb[0].mxu0
        %v2963 = vpop.f32.mrb[0].mxu0
        %v2964 = vadd.f32 0.0, %v2963
        %v2965 = vpop.f32.mrb[0].mxu0
        %2966 = vmatprep.mubr.bf16.mxu0 0
        %2967 = vmatmul.mubr.bf16.gmra.mrb[0].mxu0 %v1290
        %v2968 = vpop.f32.mrb[0].mxu0
        %v2969 = vadd.f32 0.0, %v2968
        %v2970 = vpop.f32.mrb[0].mxu0
        %v2971 = vpop.f32.mrb[0].mxu0
        %v2972 = vadd.f32 0.0, %v2971
        %v2973 = vpop.f32.mrb[0].mxu0
        %2974 = vmatprep.mubr.bf16.mxu0 0
        %2975 = vmatmul.mubr.bf16.gmra.mrb[0].mxu0 %v1293
        %v2976 = vpop.f32.mrb[0].mxu0
        %v2977 = vadd.f32 0.0, %v2976
        %v2978 = vpop.f32.mrb[0].mxu0
        %v2979 = vpop.f32.mrb[0].mxu0
        %v2980 = vadd.f32 0.0, %v2979
        %v2981 = vpop.f32.mrb[0].mxu0
        %2982 = vmatprep.mubr.bf16.mxu0 0
        %2983 = vmatmul.mubr.bf16.gmra.mrb[0].mxu0 %v1296
        %v2984 = vpop.f32.mrb[0].mxu0
        %v2985 = vadd.f32 0.0, %v2984
        %v2986 = vpop.f32.mrb[0].mxu0
        %v2987 = vpop.f32.mrb[0].mxu0
        %v2988 = vadd.f32 0.0, %v2987
        %v2989 = vpop.f32.mrb[0].mxu0
        %2990 = vmatprep.mubr.bf16.mxu0 0
        %2991 = vmatmul.mubr.bf16.gmra.mrb[0].mxu0 %v1299
        %v2992 = vpop.f32.mrb[0].mxu0
        %v2993 = vadd.f32 0.0, %v2992
        %v2994 = vpop.f32.mrb[0].mxu0
        %v2995 = vpop.f32.mrb[0].mxu0
        %v2996 = vadd.f32 0.0, %v2995
        %v2997 = vpop.f32.mrb[0].mxu0
        %2998 = vmatprep.mubr.bf16.mxu0 0
        %2999 = vmatmul.mubr.bf16.gmra.mrb[0].mxu0 %v1302
        %v3000 = vpop.f32.mrb[0].mxu0
        %v3001 = vadd.f32 0.0, %v3000
        %v3002 = vpop.f32.mrb[0].mxu0
        %v3003 = vpop.f32.mrb[0].mxu0
        %v3004 = vadd.f32 0.0, %v3003
        %v3005 = vpop.f32.mrb[0].mxu0
        %3006 = vmatprep.mubr.bf16.mxu0 0
        %3007 = vmatmul.mubr.bf16.gmra.mrb[0].mxu0 %v1305
        %v3008 = vpop.f32.mrb[0].mxu0
        %v3009 = vadd.f32 0.0, %v3008
        %v3010 = vpop.f32.mrb[0].mxu0
        %v3011 = vpop.f32.mrb[0].mxu0
        %v3012 = vadd.f32 0.0, %v3011
        %v3013 = vpop.f32.mrb[0].mxu0
        %3014 = vmatprep.mubr.bf16.mxu0 0
        %3015 = vmatmul.mubr.bf16.gmra.mrb[0].mxu0 %v1308
        %v3016 = vpop.f32.mrb[0].mxu0
        %v3017 = vadd.f32 0.0, %v3016
        %v3018 = vpop.f32.mrb[0].mxu0
        %v3019 = vpop.f32.mrb[0].mxu0
        %v3020 = vadd.f32 0.0, %v3019
        %v3021 = vpop.f32.mrb[0].mxu0
        %3022 = vmatprep.mubr.bf16.mxu0 0
        %3023 = vmatmul.mubr.bf16.gmra.mrb[0].mxu0 %v1311
        %v3024 = vpop.f32.mrb[0].mxu0
        %v3025 = vadd.f32 0.0, %v3024
        %v3026 = vpop.f32.mrb[0].mxu0
        %v3027 = vpop.f32.mrb[0].mxu0
        %v3028 = vadd.f32 0.0, %v3027
        %v3029 = vpop.f32.mrb[0].mxu0
        %3030 = vmatprep.mubr.bf16.mxu0 0
        %3031 = vmatmul.mubr.bf16.gmra.mrb[0].mxu0 %v2873
        %v3032 = vpop.f32.mrb[0].mxu0
        %v3033 = vadd.f32 0.0, %v3032
        %v3034 = vpop.f32.mrb[0].mxu0
        %v3035 = vpop.f32.mrb[0].mxu0
        %v3036 = vadd.f32 0.0, %v3035
        %v3037 = vpop.f32.mrb[0].mxu0
        %3038 = vdwg.mxu0
        %v3039 = vadd.f32 %v2827, %v2913
        %v3040 = vadd.f32 %v2828, %v2916
        %v3041 = vadd.f32 %v2829, %v2921
        %v3042 = vadd.f32 %v2830, %v2924
        %v3043 = vadd.f32 %v2831, %v2929
        %v3044 = vadd.f32 %v2832, %v2932
        %v3045 = vadd.f32 %v2833, %v2937
        %v3046 = vadd.f32 %v2834, %v2940
        %v3047 = vadd.f32 %v2835, %v2945
        %v3048 = vadd.f32 %v2836, %v2948
        %v3049 = vadd.f32 %v2837, %v2953
        %v3050 = vadd.f32 %v2838, %v2956
        %v3051 = vadd.f32 %v2839, %v2961
        %v3052 = vadd.f32 %v2840, %v2964
        %v3053 = vadd.f32 %v2841, %v2969
        %v3054 = vadd.f32 %v2842, %v2972
        %v3055 = vadd.f32 %v2843, %v2977
        %v3056 = vadd.f32 %v2844, %v2980
        %v3057 = vadd.f32 %v2845, %v2985
        %v3058 = vadd.f32 %v2846, %v2988
        %v3059 = vadd.f32 %v2847, %v2993
        %v3060 = vadd.f32 %v2848, %v2996
        %v3061 = vadd.f32 %v2849, %v3001
        %v3062 = vadd.f32 %v2850, %v3004
        %v3063 = vadd.f32 %v2851, %v3009
        %v3064 = vadd.f32 %v2852, %v3012
        %v3065 = vadd.f32 %v2853, %v3017
        %v3066 = vadd.f32 %v2854, %v3020
        %v3067 = vadd.f32 %v2855, %v3025
        %v3068 = vadd.f32 %v2856, %v3028
        %v3069 = vadd.f32 %v2857, %v3033
        %v3070 = vadd.f32 %v2858, %v3036
        %v3071 = vld [vmem:[%s5] sm:$0x1]
        %v3073 = vlaneseq
        %v3074 = vshrl.u32 %v3073, 7
        %v3075 = vsub.s32 0, %v3074
        %v3076 = vrot.slane %v3071, %v3075
        %v3078 = vadd.f32 %v3039, %v3076
        %v3079 = vadd.f32 %v3040, %v3076
        %v3080 = vadd.f32 %v3041, %v3076
        %v3081 = vadd.f32 %v3042, %v3076
        %v3082 = vadd.f32 %v3043, %v3076
        %v3083 = vadd.f32 %v3044, %v3076
        %v3084 = vadd.f32 %v3045, %v3076
        %v3085 = vadd.f32 %v3046, %v3076
        %v3086 = vadd.f32 %v3047, %v3076
        %v3087 = vadd.f32 %v3048, %v3076
        %v3088 = vadd.f32 %v3049, %v3076
        %v3089 = vadd.f32 %v3050, %v3076
        %v3090 = vadd.f32 %v3051, %v3076
        %v3091 = vadd.f32 %v3052, %v3076
        %v3092 = vadd.f32 %v3053, %v3076
        %v3093 = vadd.f32 %v3054, %v3076
        %v3094 = vadd.f32 %v3055, %v3076
        %v3095 = vadd.f32 %v3056, %v3076
        %v3096 = vadd.f32 %v3057, %v3076
        %v3097 = vadd.f32 %v3058, %v3076
        %v3098 = vadd.f32 %v3059, %v3076
        %v3099 = vadd.f32 %v3060, %v3076
        %v3100 = vadd.f32 %v3061, %v3076
        %v3101 = vadd.f32 %v3062, %v3076
        %v3102 = vadd.f32 %v3063, %v3076
        %v3103 = vadd.f32 %v3064, %v3076
        %v3104 = vadd.f32 %v3065, %v3076
        %v3105 = vadd.f32 %v3066, %v3076
        %v3106 = vadd.f32 %v3067, %v3076
        %v3107 = vadd.f32 %v3068, %v3076
        %v3108 = vadd.f32 %v3069, %v3076
        %v3109 = vadd.f32 %v3070, %v3076
        %vm3110 = vcmp.gt.f32.partialorder %v3078, 0.0
        %vm3111 = vcmp.gt.f32.partialorder %v3079, 0.0
        %vm3112 = vcmp.gt.f32.partialorder %v3080, 0.0
        %vm3113 = vcmp.gt.f32.partialorder %v3081, 0.0
        %vm3114 = vcmp.gt.f32.partialorder %v3082, 0.0
        %vm3115 = vcmp.gt.f32.partialorder %v3083, 0.0
        %vm3116 = vcmp.gt.f32.partialorder %v3084, 0.0
        %vm3117 = vcmp.gt.f32.partialorder %v3085, 0.0
        %vm3118 = vcmp.gt.f32.partialorder %v3086, 0.0
        %vm3119 = vcmp.gt.f32.partialorder %v3087, 0.0
        %vm3120 = vcmp.gt.f32.partialorder %v3088, 0.0
        %vm3121 = vcmp.gt.f32.partialorder %v3089, 0.0
        %vm3122 = vcmp.gt.f32.partialorder %v3090, 0.0
        %vm3123 = vcmp.gt.f32.partialorder %v3091, 0.0
        %vm3124 = vcmp.gt.f32.partialorder %v3092, 0.0
        %vm3125 = vcmp.gt.f32.partialorder %v3093, 0.0
        %vm3126 = vcmp.gt.f32.partialorder %v3094, 0.0
        %vm3127 = vcmp.gt.f32.partialorder %v3095, 0.0
        %vm3128 = vcmp.gt.f32.partialorder %v3096, 0.0
        %vm3129 = vcmp.gt.f32.partialorder %v3097, 0.0
        %vm3130 = vcmp.gt.f32.partialorder %v3098, 0.0
        %vm3131 = vcmp.gt.f32.partialorder %v3099, 0.0
        %vm3132 = vcmp.gt.f32.partialorder %v3100, 0.0
        %vm3133 = vcmp.gt.f32.partialorder %v3101, 0.0
        %vm3134 = vcmp.gt.f32.partialorder %v3102, 0.0
        %vm3135 = vcmp.gt.f32.partialorder %v3103, 0.0
        %vm3136 = vcmp.gt.f32.partialorder %v3104, 0.0
        %vm3137 = vcmp.gt.f32.partialorder %v3105, 0.0
        %vm3138 = vcmp.gt.f32.partialorder %v3106, 0.0
        %vm3139 = vcmp.gt.f32.partialorder %v3107, 0.0
        %vm3140 = vcmp.gt.f32.partialorder %v3108, 0.0
        %vm3141 = vcmp.gt.f32.partialorder %v3109, 0.0
        %v3142 = vmul.f32 %v3078, 0.01
        %v3143 = vmul.f32 %v3079, 0.01
        %v3144 = vmul.f32 %v3080, 0.01
        %v3145 = vmul.f32 %v3081, 0.01
        %v3146 = vmul.f32 %v3082, 0.01
        %v3147 = vmul.f32 %v3083, 0.01
        %v3148 = vmul.f32 %v3084, 0.01
        %v3149 = vmul.f32 %v3085, 0.01
        %v3150 = vmul.f32 %v3086, 0.01
        %v3151 = vmul.f32 %v3087, 0.01
        %v3152 = vmul.f32 %v3088, 0.01
        %v3153 = vmul.f32 %v3089, 0.01
        %v3154 = vmul.f32 %v3090, 0.01
        %v3155 = vmul.f32 %v3091, 0.01
        %v3156 = vmul.f32 %v3092, 0.01
        %v3157 = vmul.f32 %v3093, 0.01
        %v3158 = vmul.f32 %v3094, 0.01
        %v3159 = vmul.f32 %v3095, 0.01
        %v3160 = vmul.f32 %v3096, 0.01
        %v3161 = vmul.f32 %v3097, 0.01
        %v3162 = vmul.f32 %v3098, 0.01
        %v3163 = vmul.f32 %v3099, 0.01
        %v3164 = vmul.f32 %v3100, 0.01
        %v3165 = vmul.f32 %v3101, 0.01
        %v3166 = vmul.f32 %v3102, 0.01
        %v3167 = vmul.f32 %v3103, 0.01
        %v3168 = vmul.f32 %v3104, 0.01
        %v3169 = vmul.f32 %v3105, 0.01
        %v3170 = vmul.f32 %v3106, 0.01
        %v3171 = vmul.f32 %v3107, 0.01
        %v3172 = vmul.f32 %v3108, 0.01
        %v3173 = vmul.f32 %v3109, 0.01
        %v3174 = vsel %vm3110, %v3078, %v3142
        %v3175 = vsel %vm3111, %v3079, %v3143
        %v3176 = vsel %vm3112, %v3080, %v3144
        %v3177 = vsel %vm3113, %v3081, %v3145
        %v3178 = vsel %vm3114, %v3082, %v3146
        %v3179 = vsel %vm3115, %v3083, %v3147
        %v3180 = vsel %vm3116, %v3084, %v3148
        %v3181 = vsel %vm3117, %v3085, %v3149
        %v3182 = vsel %vm3118, %v3086, %v3150
        %v3183 = vsel %vm3119, %v3087, %v3151
        %v3184 = vsel %vm3120, %v3088, %v3152
        %v3185 = vsel %vm3121, %v3089, %v3153
        %v3186 = vsel %vm3122, %v3090, %v3154
        %v3187 = vsel %vm3123, %v3091, %v3155
        %v3188 = vsel %vm3124, %v3092, %v3156
        %v3189 = vsel %vm3125, %v3093, %v3157
        %v3190 = vsel %vm3126, %v3094, %v3158
        %v3191 = vsel %vm3127, %v3095, %v3159
        %v3192 = vsel %vm3128, %v3096, %v3160
        %v3193 = vsel %vm3129, %v3097, %v3161
        %v3194 = vsel %vm3130, %v3098, %v3162
        %v3195 = vsel %vm3131, %v3099, %v3163
        %v3196 = vsel %vm3132, %v3100, %v3164
        %v3197 = vsel %vm3133, %v3101, %v3165
        %v3198 = vsel %vm3134, %v3102, %v3166
        %v3199 = vsel %vm3135, %v3103, %v3167
        %v3200 = vsel %vm3136, %v3104, %v3168
        %v3201 = vsel %vm3137, %v3105, %v3169
        %v3202 = vsel %vm3138, %v3106, %v3170
        %v3203 = vsel %vm3139, %v3107, %v3171
        %v3204 = vsel %vm3140, %v3108, %v3172
        %v3205 = vsel %vm3141, %v3109, %v3173
        %v3238 = vrot.slane %v3174, 7
        %v3239 = vrot.slane %v3175, 7
        %v3240 = vsel %vm706, %v3238, %v3239
        %v3241 = vrot.slane %v3176, 7
        %v3242 = vrot.slane %v3177, 7
        %v3243 = vsel %vm706, %v3241, %v3242
        %v3244 = vrot.slane %v3178, 7
        %v3245 = vrot.slane %v3179, 7
        %v3246 = vsel %vm706, %v3244, %v3245
        %v3247 = vrot.slane %v3180, 7
        %v3248 = vrot.slane %v3181, 7
        %v3249 = vsel %vm706, %v3247, %v3248
        %v3250 = vrot.slane %v3182, 7
        %v3251 = vrot.slane %v3183, 7
        %v3252 = vsel %vm706, %v3250, %v3251
        %v3253 = vrot.slane %v3184, 7
        %v3254 = vrot.slane %v3185, 7
        %v3255 = vsel %vm706, %v3253, %v3254
        %v3256 = vrot.slane %v3186, 7
        %v3257 = vrot.slane %v3187, 7
        %v3258 = vsel %vm706, %v3256, %v3257
        %v3259 = vrot.slane %v3188, 7
        %v3260 = vrot.slane %v3189, 7
        %v3261 = vsel %vm706, %v3259, %v3260
        %v3262 = vrot.slane %v3190, 7
        %v3263 = vrot.slane %v3191, 7
        %v3264 = vsel %vm706, %v3262, %v3263
        %v3265 = vrot.slane %v3192, 7
        %v3266 = vrot.slane %v3193, 7
        %v3267 = vsel %vm706, %v3265, %v3266
        %v3268 = vrot.slane %v3194, 7
        %v3269 = vrot.slane %v3195, 7
        %v3270 = vsel %vm706, %v3268, %v3269
        %v3271 = vrot.slane %v3196, 7
        %v3272 = vrot.slane %v3197, 7
        %v3273 = vsel %vm706, %v3271, %v3272
        %v3274 = vrot.slane %v3198, 7
        %v3275 = vrot.slane %v3199, 7
        %v3276 = vsel %vm706, %v3274, %v3275
        %v3277 = vrot.slane %v3200, 7
        %v3278 = vrot.slane %v3201, 7
        %v3279 = vsel %vm706, %v3277, %v3278
        %v3280 = vrot.slane %v3202, 7
        %v3281 = vrot.slane %v3203, 7
        %v3282 = vsel %vm706, %v3280, %v3281
        %v3283 = vrot.slane %v3204, 7
        %v3284 = vrot.slane %v3205, 7
        %v3285 = vsel %vm706, %v3283, %v3284
        %v3334 = vsel %vm706, 0.0, %v3238
        %v3335 = vsel %vm706, 0.0, %v3241
        %v3336 = vsel %vm706, 0.0, %v3244
        %v3337 = vsel %vm706, 0.0, %v3247
        %v3338 = vsel %vm706, 0.0, %v3250
        %v3339 = vsel %vm706, 0.0, %v3253
        %v3340 = vsel %vm706, 0.0, %v3256
        %v3341 = vsel %vm706, 0.0, %v3259
        %v3342 = vsel %vm706, 0.0, %v3262
        %v3343 = vsel %vm706, 0.0, %v3265
        %v3344 = vsel %vm706, 0.0, %v3268
        %v3345 = vsel %vm706, 0.0, %v3271
        %v3346 = vsel %vm706, 0.0, %v3274
        %v3347 = vsel %vm706, 0.0, %v3277
        %v3348 = vsel %vm706, 0.0, %v3280
        %v3349 = vsel %vm706, 0.0, %v3283
        %v3350 = vsel %vm706, %v3239, 0.0
        %v3351 = vsel %vm706, %v3242, 0.0
        %v3352 = vsel %vm706, %v3245, 0.0
        %v3353 = vsel %vm706, %v3248, 0.0
        %v3354 = vsel %vm706, %v3251, 0.0
        %v3355 = vsel %vm706, %v3254, 0.0
        %v3356 = vsel %vm706, %v3257, 0.0
        %v3357 = vsel %vm706, %v3260, 0.0
        %v3358 = vsel %vm706, %v3263, 0.0
        %v3359 = vsel %vm706, %v3266, 0.0
        %v3360 = vsel %vm706, %v3269, 0.0
        %v3361 = vsel %vm706, %v3272, 0.0
        %v3362 = vsel %vm706, %v3275, 0.0
        %v3363 = vsel %vm706, %v3278, 0.0
        %v3364 = vsel %vm706, %v3281, 0.0
        %v3365 = vsel %vm706, %v3284, 0.0
        %v3366 = vld [vmem:[%s6] sm:$0x1]
        %v3368 = vlaneseq
        %v3369 = vshrl.u32 %v3368, 7
        %v3370 = vsub.s32 0, %v3369
        %v3371 = vrot.slane %v3366, %v3370
        %v3373 = vmul.f32 %v3371, 0.0
        %v3374 = vmul.f32 %v3334, %v3371
        %v3375 = vmul.f32 %v3240, %v3371
        %v3376 = vmul.f32 %v3335, %v3371
        %v3377 = vmul.f32 %v3243, %v3371
        %v3378 = vmul.f32 %v3336, %v3371
        %v3379 = vmul.f32 %v3246, %v3371
        %v3380 = vmul.f32 %v3337, %v3371
        %v3381 = vmul.f32 %v3249, %v3371
        %v3382 = vmul.f32 %v3338, %v3371
        %v3383 = vmul.f32 %v3252, %v3371
        %v3384 = vmul.f32 %v3339, %v3371
        %v3385 = vmul.f32 %v3255, %v3371
        %v3386 = vmul.f32 %v3340, %v3371
        %v3387 = vmul.f32 %v3258, %v3371
        %v3388 = vmul.f32 %v3341, %v3371
        %v3389 = vmul.f32 %v3261, %v3371
        %v3390 = vmul.f32 %v3342, %v3371
        %v3391 = vmul.f32 %v3264, %v3371
        %v3392 = vmul.f32 %v3343, %v3371
        %v3393 = vmul.f32 %v3267, %v3371
        %v3394 = vmul.f32 %v3344, %v3371
        %v3395 = vmul.f32 %v3270, %v3371
        %v3396 = vmul.f32 %v3345, %v3371
        %v3397 = vmul.f32 %v3273, %v3371
        %v3398 = vmul.f32 %v3346, %v3371
        %v3399 = vmul.f32 %v3276, %v3371
        %v3400 = vmul.f32 %v3347, %v3371
        %v3401 = vmul.f32 %v3279, %v3371
        %v3402 = vmul.f32 %v3348, %v3371
        %v3403 = vmul.f32 %v3282, %v3371
        %v3404 = vadd.f32 %v3373, 0.0
        %v3405 = vadd.f32 %v3374, 0.0
        %v3406 = vadd.f32 %v3375, 0.0
        %v3407 = vadd.f32 %v3376, 0.0
        %v3408 = vadd.f32 %v3377, 0.0
        %v3409 = vadd.f32 %v3378, 0.0
        %v3410 = vadd.f32 %v3379, 0.0
        %v3411 = vadd.f32 %v3380, 0.0
        %v3412 = vadd.f32 %v3381, 0.0
        %v3413 = vadd.f32 %v3382, 0.0
        %v3414 = vadd.f32 %v3383, 0.0
        %v3415 = vadd.f32 %v3384, 0.0
        %v3416 = vadd.f32 %v3385, 0.0
        %v3417 = vadd.f32 %v3386, 0.0
        %v3418 = vadd.f32 %v3387, 0.0
        %v3419 = vadd.f32 %v3388, 0.0
        %v3420 = vadd.f32 %v3389, 0.0
        %v3421 = vadd.f32 %v3390, 0.0
        %v3422 = vadd.f32 %v3391, 0.0
        %v3423 = vadd.f32 %v3392, 0.0
        %v3424 = vadd.f32 %v3393, 0.0
        %v3425 = vadd.f32 %v3394, 0.0
        %v3426 = vadd.f32 %v3395, 0.0
        %v3427 = vadd.f32 %v3396, 0.0
        %v3428 = vadd.f32 %v3397, 0.0
        %v3429 = vadd.f32 %v3398, 0.0
        %v3430 = vadd.f32 %v3399, 0.0
        %v3431 = vadd.f32 %v3400, 0.0
        %v3432 = vadd.f32 %v3401, 0.0
        %v3433 = vadd.f32 %v3402, 0.0
        %v3434 = vadd.f32 %v3403, 0.0
        %s3435 = scalar_lea.vmem %s6, 1
        %v3436 = vld [vmem:[%s3435] sm:$0x1]
        %v3438 = vlaneseq
        %v3439 = vshrl.u32 %v3438, 7
        %v3440 = vsub.s32 0, %v3439
        %v3441 = vrot.slane %v3436, %v3440
        %v3443 = vmul.f32 %v3441, 0.0
        %v3444 = vmul.f32 %v3334, %v3441
        %v3445 = vmul.f32 %v3240, %v3441
        %v3446 = vmul.f32 %v3350, %v3441
        %v3447 = vmul.f32 %v3335, %v3441
        %v3448 = vmul.f32 %v3243, %v3441
        %v3449 = vmul.f32 %v3351, %v3441
        %v3450 = vmul.f32 %v3336, %v3441
        %v3451 = vmul.f32 %v3246, %v3441
        %v3452 = vmul.f32 %v3352, %v3441
        %v3453 = vmul.f32 %v3337, %v3441
        %v3454 = vmul.f32 %v3249, %v3441
        %v3455 = vmul.f32 %v3353, %v3441
        %v3456 = vmul.f32 %v3338, %v3441
        %v3457 = vmul.f32 %v3252, %v3441
        %v3458 = vmul.f32 %v3354, %v3441
        %v3459 = vmul.f32 %v3339, %v3441
        %v3460 = vmul.f32 %v3255, %v3441
        %v3461 = vmul.f32 %v3355, %v3441
        %v3462 = vmul.f32 %v3340, %v3441
        %v3463 = vmul.f32 %v3258, %v3441
        %v3464 = vmul.f32 %v3356, %v3441
        %v3465 = vmul.f32 %v3341, %v3441
        %v3466 = vmul.f32 %v3261, %v3441
        %v3467 = vmul.f32 %v3357, %v3441
        %v3468 = vmul.f32 %v3342, %v3441
        %v3469 = vmul.f32 %v3264, %v3441
        %v3470 = vmul.f32 %v3358, %v3441
        %v3471 = vmul.f32 %v3343, %v3441
        %v3472 = vmul.f32 %v3267, %v3441
        %v3473 = vmul.f32 %v3359, %v3441
        %v3474 = vmul.f32 %v3344, %v3441
        %v3475 = vmul.f32 %v3270, %v3441
        %v3476 = vmul.f32 %v3360, %v3441
        %v3477 = vmul.f32 %v3345, %v3441
        %v3478 = vmul.f32 %v3273, %v3441
        %v3479 = vmul.f32 %v3361, %v3441
        %v3480 = vmul.f32 %v3346, %v3441
        %v3481 = vmul.f32 %v3276, %v3441
        %v3482 = vmul.f32 %v3362, %v3441
        %v3483 = vmul.f32 %v3347, %v3441
        %v3484 = vmul.f32 %v3279, %v3441
        %v3485 = vmul.f32 %v3363, %v3441
        %v3486 = vmul.f32 %v3348, %v3441
        %v3487 = vmul.f32 %v3282, %v3441
        %v3488 = vmul.f32 %v3364, %v3441
        %v3535 = vrot.slane %v3443, 1
        %v3536 = vsel %vm1134, %v3535, %v3535
        %v3537 = vrot.slane %v3444, 1
        %v3538 = vrot.slane %v3445, 1
        %v3539 = vsel %vm1134, %v3537, %v3538
        %v3540 = vrot.slane %v3446, 1
        %v3541 = vsel %vm1134, %v3538, %v3540
        %v3542 = vrot.slane %v3447, 1
        %v3543 = vrot.slane %v3448, 1
        %v3544 = vsel %vm1134, %v3542, %v3543
        %v3545 = vrot.slane %v3449, 1
        %v3546 = vsel %vm1134, %v3543, %v3545
        %v3547 = vrot.slane %v3450, 1
        %v3548 = vrot.slane %v3451, 1
        %v3549 = vsel %vm1134, %v3547, %v3548
        %v3550 = vrot.slane %v3452, 1
        %v3551 = vsel %vm1134, %v3548, %v3550
        %v3552 = vrot.slane %v3453, 1
        %v3553 = vrot.slane %v3454, 1
        %v3554 = vsel %vm1134, %v3552, %v3553
        %v3555 = vrot.slane %v3455, 1
        %v3556 = vsel %vm1134, %v3553, %v3555
        %v3557 = vrot.slane %v3456, 1
        %v3558 = vrot.slane %v3457, 1
        %v3559 = vsel %vm1134, %v3557, %v3558
        %v3560 = vrot.slane %v3458, 1
        %v3561 = vsel %vm1134, %v3558, %v3560
        %v3562 = vrot.slane %v3459, 1
        %v3563 = vrot.slane %v3460, 1
        %v3564 = vsel %vm1134, %v3562, %v3563
        %v3565 = vrot.slane %v3461, 1
        %v3566 = vsel %vm1134, %v3563, %v3565
        %v3567 = vrot.slane %v3462, 1
        %v3568 = vrot.slane %v3463, 1
        %v3569 = vsel %vm1134, %v3567, %v3568
        %v3570 = vrot.slane %v3464, 1
        %v3571 = vsel %vm1134, %v3568, %v3570
        %v3572 = vrot.slane %v3465, 1
        %v3573 = vrot.slane %v3466, 1
        %v3574 = vsel %vm1134, %v3572, %v3573
        %v3575 = vrot.slane %v3467, 1
        %v3576 = vsel %vm1134, %v3573, %v3575
        %v3577 = vrot.slane %v3468, 1
        %v3578 = vrot.slane %v3469, 1
        %v3579 = vsel %vm1134, %v3577, %v3578
        %v3580 = vrot.slane %v3470, 1
        %v3581 = vsel %vm1134, %v3578, %v3580
        %v3582 = vrot.slane %v3471, 1
        %v3583 = vrot.slane %v3472, 1
        %v3584 = vsel %vm1134, %v3582, %v3583
        %v3585 = vrot.slane %v3473, 1
        %v3586 = vsel %vm1134, %v3583, %v3585
        %v3587 = vrot.slane %v3474, 1
        %v3588 = vrot.slane %v3475, 1
        %v3589 = vsel %vm1134, %v3587, %v3588
        %v3590 = vrot.slane %v3476, 1
        %v3591 = vsel %vm1134, %v3588, %v3590
        %v3592 = vrot.slane %v3477, 1
        %v3593 = vrot.slane %v3478, 1
        %v3594 = vsel %vm1134, %v3592, %v3593
        %v3595 = vrot.slane %v3479, 1
        %v3596 = vsel %vm1134, %v3593, %v3595
        %v3597 = vrot.slane %v3480, 1
        %v3598 = vrot.slane %v3481, 1
        %v3599 = vsel %vm1134, %v3597, %v3598
        %v3600 = vrot.slane %v3482, 1
        %v3601 = vsel %vm1134, %v3598, %v3600
        %v3602 = vrot.slane %v3483, 1
        %v3603 = vrot.slane %v3484, 1
        %v3604 = vsel %vm1134, %v3602, %v3603
        %v3605 = vrot.slane %v3485, 1
        %v3606 = vsel %vm1134, %v3603, %v3605
        %v3607 = vrot.slane %v3486, 1
        %v3608 = vrot.slane %v3487, 1
        %v3609 = vsel %vm1134, %v3607, %v3608
        %v3610 = vrot.slane %v3488, 1
        %v3611 = vsel %vm1134, %v3608, %v3610
        %v3643 = vadd.f32 %v3404, %v3536
        %v3644 = vadd.f32 %v3405, %v3539
        %v3645 = vadd.f32 %v3406, %v3541
        %v3646 = vadd.f32 %v3407, %v3544
        %v3647 = vadd.f32 %v3408, %v3546
        %v3648 = vadd.f32 %v3409, %v3549
        %v3649 = vadd.f32 %v3410, %v3551
        %v3650 = vadd.f32 %v3411, %v3554
        %v3651 = vadd.f32 %v3412, %v3556
        %v3652 = vadd.f32 %v3413, %v3559
        %v3653 = vadd.f32 %v3414, %v3561
        %v3654 = vadd.f32 %v3415, %v3564
        %v3655 = vadd.f32 %v3416, %v3566
        %v3656 = vadd.f32 %v3417, %v3569
        %v3657 = vadd.f32 %v3418, %v3571
        %v3658 = vadd.f32 %v3419, %v3574
        %v3659 = vadd.f32 %v3420, %v3576
        %v3660 = vadd.f32 %v3421, %v3579
        %v3661 = vadd.f32 %v3422, %v3581
        %v3662 = vadd.f32 %v3423, %v3584
        %v3663 = vadd.f32 %v3424, %v3586
        %v3664 = vadd.f32 %v3425, %v3589
        %v3665 = vadd.f32 %v3426, %v3591
        %v3666 = vadd.f32 %v3427, %v3594
        %v3667 = vadd.f32 %v3428, %v3596
        %v3668 = vadd.f32 %v3429, %v3599
        %v3669 = vadd.f32 %v3430, %v3601
        %v3670 = vadd.f32 %v3431, %v3604
        %v3671 = vadd.f32 %v3432, %v3606
        %v3672 = vadd.f32 %v3433, %v3609
        %v3673 = vadd.f32 %v3434, %v3611
        %s3674 = scalar_lea.vmem %s6, 2
        %v3675 = vld [vmem:[%s3674] sm:$0x1]
        %v3677 = vlaneseq
        %v3678 = vshrl.u32 %v3677, 7
        %v3679 = vsub.s32 0, %v3678
        %v3680 = vrot.slane %v3675, %v3679
        %v3682 = vmul.f32 %v3680, 0.0
        %v3683 = vmul.f32 %v3334, %v3680
        %v3684 = vmul.f32 %v3240, %v3680
        %v3685 = vmul.f32 %v3350, %v3680
        %v3686 = vmul.f32 %v3335, %v3680
        %v3687 = vmul.f32 %v3243, %v3680
        %v3688 = vmul.f32 %v3351, %v3680
        %v3689 = vmul.f32 %v3336, %v3680
        %v3690 = vmul.f32 %v3246, %v3680
        %v3691 = vmul.f32 %v3352, %v3680
        %v3692 = vmul.f32 %v3337, %v3680
        %v3693 = vmul.f32 %v3249, %v3680
        %v3694 = vmul.f32 %v3353, %v3680
        %v3695 = vmul.f32 %v3338, %v3680
        %v3696 = vmul.f32 %v3252, %v3680
        %v3697 = vmul.f32 %v3354, %v3680
        %v3698 = vmul.f32 %v3339, %v3680
        %v3699 = vmul.f32 %v3255, %v3680
        %v3700 = vmul.f32 %v3355, %v3680
        %v3701 = vmul.f32 %v3340, %v3680
        %v3702 = vmul.f32 %v3258, %v3680
        %v3703 = vmul.f32 %v3356, %v3680
        %v3704 = vmul.f32 %v3341, %v3680
        %v3705 = vmul.f32 %v3261, %v3680
        %v3706 = vmul.f32 %v3357, %v3680
        %v3707 = vmul.f32 %v3342, %v3680
        %v3708 = vmul.f32 %v3264, %v3680
        %v3709 = vmul.f32 %v3358, %v3680
        %v3710 = vmul.f32 %v3343, %v3680
        %v3711 = vmul.f32 %v3267, %v3680
        %v3712 = vmul.f32 %v3359, %v3680
        %v3713 = vmul.f32 %v3344, %v3680
        %v3714 = vmul.f32 %v3270, %v3680
        %v3715 = vmul.f32 %v3360, %v3680
        %v3716 = vmul.f32 %v3345, %v3680
        %v3717 = vmul.f32 %v3273, %v3680
        %v3718 = vmul.f32 %v3361, %v3680
        %v3719 = vmul.f32 %v3346, %v3680
        %v3720 = vmul.f32 %v3276, %v3680
        %v3721 = vmul.f32 %v3362, %v3680
        %v3722 = vmul.f32 %v3347, %v3680
        %v3723 = vmul.f32 %v3279, %v3680
        %v3724 = vmul.f32 %v3363, %v3680
        %v3725 = vmul.f32 %v3348, %v3680
        %v3726 = vmul.f32 %v3282, %v3680
        %v3727 = vmul.f32 %v3364, %v3680
        %vm3774 = vcmask 1045504
        %v3775 = vrot.slane %v3682, 2
        %v3776 = vsel %vm3774, %v3775, %v3775
        %v3777 = vrot.slane %v3683, 2
        %v3778 = vrot.slane %v3684, 2
        %v3779 = vsel %vm3774, %v3777, %v3778
        %v3780 = vrot.slane %v3685, 2
        %v3781 = vsel %vm3774, %v3778, %v3780
        %v3782 = vrot.slane %v3686, 2
        %v3783 = vrot.slane %v3687, 2
        %v3784 = vsel %vm3774, %v3782, %v3783
        %v3785 = vrot.slane %v3688, 2
        %v3786 = vsel %vm3774, %v3783, %v3785
        %v3787 = vrot.slane %v3689, 2
        %v3788 = vrot.slane %v3690, 2
        %v3789 = vsel %vm3774, %v3787, %v3788
        %v3790 = vrot.slane %v3691, 2
        %v3791 = vsel %vm3774, %v3788, %v3790
        %v3792 = vrot.slane %v3692, 2
        %v3793 = vrot.slane %v3693, 2
        %v3794 = vsel %vm3774, %v3792, %v3793
        %v3795 = vrot.slane %v3694, 2
        %v3796 = vsel %vm3774, %v3793, %v3795
        %v3797 = vrot.slane %v3695, 2
        %v3798 = vrot.slane %v3696, 2
        %v3799 = vsel %vm3774, %v3797, %v3798
        %v3800 = vrot.slane %v3697, 2
        %v3801 = vsel %vm3774, %v3798, %v3800
        %v3802 = vrot.slane %v3698, 2
        %v3803 = vrot.slane %v3699, 2
        %v3804 = vsel %vm3774, %v3802, %v3803
        %v3805 = vrot.slane %v3700, 2
        %v3806 = vsel %vm3774, %v3803, %v3805
        %v3807 = vrot.slane %v3701, 2
        %v3808 = vrot.slane %v3702, 2
        %v3809 = vsel %vm3774, %v3807, %v3808
        %v3810 = vrot.slane %v3703, 2
        %v3811 = vsel %vm3774, %v3808, %v3810
        %v3812 = vrot.slane %v3704, 2
        %v3813 = vrot.slane %v3705, 2
        %v3814 = vsel %vm3774, %v3812, %v3813
        %v3815 = vrot.slane %v3706, 2
        %v3816 = vsel %vm3774, %v3813, %v3815
        %v3817 = vrot.slane %v3707, 2
        %v3818 = vrot.slane %v3708, 2
        %v3819 = vsel %vm3774, %v3817, %v3818
        %v3820 = vrot.slane %v3709, 2
        %v3821 = vsel %vm3774, %v3818, %v3820
        %v3822 = vrot.slane %v3710, 2
        %v3823 = vrot.slane %v3711, 2
        %v3824 = vsel %vm3774, %v3822, %v3823
        %v3825 = vrot.slane %v3712, 2
        %v3826 = vsel %vm3774, %v3823, %v3825
        %v3827 = vrot.slane %v3713, 2
        %v3828 = vrot.slane %v3714, 2
        %v3829 = vsel %vm3774, %v3827, %v3828
        %v3830 = vrot.slane %v3715, 2
        %v3831 = vsel %vm3774, %v3828, %v3830
        %v3832 = vrot.slane %v3716, 2
        %v3833 = vrot.slane %v3717, 2
        %v3834 = vsel %vm3774, %v3832, %v3833
        %v3835 = vrot.slane %v3718, 2
        %v3836 = vsel %vm3774, %v3833, %v3835
        %v3837 = vrot.slane %v3719, 2
        %v3838 = vrot.slane %v3720, 2
        %v3839 = vsel %vm3774, %v3837, %v3838
        %v3840 = vrot.slane %v3721, 2
        %v3841 = vsel %vm3774, %v3838, %v3840
        %v3842 = vrot.slane %v3722, 2
        %v3843 = vrot.slane %v3723, 2
        %v3844 = vsel %vm3774, %v3842, %v3843
        %v3845 = vrot.slane %v3724, 2
        %v3846 = vsel %vm3774, %v3843, %v3845
        %v3847 = vrot.slane %v3725, 2
        %v3848 = vrot.slane %v3726, 2
        %v3849 = vsel %vm3774, %v3847, %v3848
        %v3850 = vrot.slane %v3727, 2
        %v3851 = vsel %vm3774, %v3848, %v3850
        %v3883 = vadd.f32 %v3643, %v3776
        %v3884 = vadd.f32 %v3644, %v3779
        %v3885 = vadd.f32 %v3645, %v3781
        %v3886 = vadd.f32 %v3646, %v3784
        %v3887 = vadd.f32 %v3647, %v3786
        %v3888 = vadd.f32 %v3648, %v3789
        %v3889 = vadd.f32 %v3649, %v3791
        %v3890 = vadd.f32 %v3650, %v3794
        %v3891 = vadd.f32 %v3651, %v3796
        %v3892 = vadd.f32 %v3652, %v3799
        %v3893 = vadd.f32 %v3653, %v3801
        %v3894 = vadd.f32 %v3654, %v3804
        %v3895 = vadd.f32 %v3655, %v3806
        %v3896 = vadd.f32 %v3656, %v3809
        %v3897 = vadd.f32 %v3657, %v3811
        %v3898 = vadd.f32 %v3658, %v3814
        %v3899 = vadd.f32 %v3659, %v3816
        %v3900 = vadd.f32 %v3660, %v3819
        %v3901 = vadd.f32 %v3661, %v3821
        %v3902 = vadd.f32 %v3662, %v3824
        %v3903 = vadd.f32 %v3663, %v3826
        %v3904 = vadd.f32 %v3664, %v3829
        %v3905 = vadd.f32 %v3665, %v3831
        %v3906 = vadd.f32 %v3666, %v3834
        %v3907 = vadd.f32 %v3667, %v3836
        %v3908 = vadd.f32 %v3668, %v3839
        %v3909 = vadd.f32 %v3669, %v3841
        %v3910 = vadd.f32 %v3670, %v3844
        %v3911 = vadd.f32 %v3671, %v3846
        %v3912 = vadd.f32 %v3672, %v3849
        %v3913 = vadd.f32 %v3673, %v3851
        %s3914 = scalar_lea.vmem %s6, 3
        %v3915 = vld [vmem:[%s3914] sm:$0x1]
        %v3917 = vlaneseq
        %v3918 = vshrl.u32 %v3917, 7
        %v3919 = vsub.s32 0, %v3918
        %v3920 = vrot.slane %v3915, %v3919
        %v3922 = vmul.f32 %v3334, %v3920
        %v3923 = vmul.f32 %v3240, %v3920
        %v3924 = vmul.f32 %v3335, %v3920
        %v3925 = vmul.f32 %v3243, %v3920
        %v3926 = vmul.f32 %v3336, %v3920
        %v3927 = vmul.f32 %v3246, %v3920
        %v3928 = vmul.f32 %v3337, %v3920
        %v3929 = vmul.f32 %v3249, %v3920
        %v3930 = vmul.f32 %v3338, %v3920
        %v3931 = vmul.f32 %v3252, %v3920
        %v3932 = vmul.f32 %v3339, %v3920
        %v3933 = vmul.f32 %v3255, %v3920
        %v3934 = vmul.f32 %v3340, %v3920
        %v3935 = vmul.f32 %v3258, %v3920
        %v3936 = vmul.f32 %v3341, %v3920
        %v3937 = vmul.f32 %v3261, %v3920
        %v3938 = vmul.f32 %v3342, %v3920
        %v3939 = vmul.f32 %v3264, %v3920
        %v3940 = vmul.f32 %v3343, %v3920
        %v3941 = vmul.f32 %v3267, %v3920
        %v3942 = vmul.f32 %v3344, %v3920
        %v3943 = vmul.f32 %v3270, %v3920
        %v3944 = vmul.f32 %v3345, %v3920
        %v3945 = vmul.f32 %v3273, %v3920
        %v3946 = vmul.f32 %v3346, %v3920
        %v3947 = vmul.f32 %v3276, %v3920
        %v3948 = vmul.f32 %v3347, %v3920
        %v3949 = vmul.f32 %v3279, %v3920
        %v3950 = vmul.f32 %v3348, %v3920
        %v3951 = vmul.f32 %v3282, %v3920
        %v3952 = vmul.f32 %v3349, %v3920
        %v3953 = vmul.f32 %v3285, %v3920
        %v3954 = vadd.f32 %v3883, %v3922
        %v3955 = vadd.f32 %v3883, %v3923
        %v3956 = vadd.f32 %v3884, %v3924
        %v3957 = vadd.f32 %v3885, %v3925
        %v3958 = vadd.f32 %v3886, %v3926
        %v3959 = vadd.f32 %v3887, %v3927
        %v3960 = vadd.f32 %v3888, %v3928
        %v3961 = vadd.f32 %v3889, %v3929
        %v3962 = vadd.f32 %v3890, %v3930
        %v3963 = vadd.f32 %v3891, %v3931
        %v3964 = vadd.f32 %v3892, %v3932
        %v3965 = vadd.f32 %v3893, %v3933
        %v3966 = vadd.f32 %v3894, %v3934
        %v3967 = vadd.f32 %v3895, %v3935
        %v3968 = vadd.f32 %v3896, %v3936
        %v3969 = vadd.f32 %v3897, %v3937
        %v3970 = vadd.f32 %v3898, %v3938
        %v3971 = vadd.f32 %v3899, %v3939
        %v3972 = vadd.f32 %v3900, %v3940
        %v3973 = vadd.f32 %v3901, %v3941
        %v3974 = vadd.f32 %v3902, %v3942
        %v3975 = vadd.f32 %v3903, %v3943
        %v3976 = vadd.f32 %v3904, %v3944
        %v3977 = vadd.f32 %v3905, %v3945
        %v3978 = vadd.f32 %v3906, %v3946
        %v3979 = vadd.f32 %v3907, %v3947
        %v3980 = vadd.f32 %v3908, %v3948
        %v3981 = vadd.f32 %v3909, %v3949
        %v3982 = vadd.f32 %v3910, %v3950
        %v3983 = vadd.f32 %v3911, %v3951
        %v3984 = vadd.f32 %v3912, %v3952
        %v3985 = vadd.f32 %v3913, %v3953
        %s3986 = scalar_lea.vmem %s6, 4
        %v3987 = vld [vmem:[%s3986] sm:$0x1]
        %v3989 = vlaneseq
        %v3990 = vshrl.u32 %v3989, 7
        %v3991 = vsub.s32 0, %v3990
        %v3992 = vrot.slane %v3987, %v3991
        %v3994 = vmul.f32 %v3334, %v3992
        %v3995 = vmul.f32 %v3240, %v3992
        %v3996 = vmul.f32 %v3350, %v3992
        %v3997 = vmul.f32 %v3335, %v3992
        %v3998 = vmul.f32 %v3243, %v3992
        %v3999 = vmul.f32 %v3351, %v3992
        %v4000 = vmul.f32 %v3336, %v3992
        %v4001 = vmul.f32 %v3246, %v3992
        %v4002 = vmul.f32 %v3352, %v3992
        %v4003 = vmul.f32 %v3337, %v3992
        %v4004 = vmul.f32 %v3249, %v3992
        %v4005 = vmul.f32 %v3353, %v3992
        %v4006 = vmul.f32 %v3338, %v3992
        %v4007 = vmul.f32 %v3252, %v3992
        %v4008 = vmul.f32 %v3354, %v3992
        %v4009 = vmul.f32 %v3339, %v3992
        %v4010 = vmul.f32 %v3255, %v3992
        %v4011 = vmul.f32 %v3355, %v3992
        %v4012 = vmul.f32 %v3340, %v3992
        %v4013 = vmul.f32 %v3258, %v3992
        %v4014 = vmul.f32 %v3356, %v3992
        %v4015 = vmul.f32 %v3341, %v3992
        %v4016 = vmul.f32 %v3261, %v3992
        %v4017 = vmul.f32 %v3357, %v3992
        %v4018 = vmul.f32 %v3342, %v3992
        %v4019 = vmul.f32 %v3264, %v3992
        %v4020 = vmul.f32 %v3358, %v3992
        %v4021 = vmul.f32 %v3343, %v3992
        %v4022 = vmul.f32 %v3267, %v3992
        %v4023 = vmul.f32 %v3359, %v3992
        %v4024 = vmul.f32 %v3344, %v3992
        %v4025 = vmul.f32 %v3270, %v3992
        %v4026 = vmul.f32 %v3360, %v3992
        %v4027 = vmul.f32 %v3345, %v3992
        %v4028 = vmul.f32 %v3273, %v3992
        %v4029 = vmul.f32 %v3361, %v3992
        %v4030 = vmul.f32 %v3346, %v3992
        %v4031 = vmul.f32 %v3276, %v3992
        %v4032 = vmul.f32 %v3362, %v3992
        %v4033 = vmul.f32 %v3347, %v3992
        %v4034 = vmul.f32 %v3279, %v3992
        %v4035 = vmul.f32 %v3363, %v3992
        %v4036 = vmul.f32 %v3348, %v3992
        %v4037 = vmul.f32 %v3282, %v3992
        %v4038 = vmul.f32 %v3364, %v3992
        %v4039 = vmul.f32 %v3349, %v3992
        %v4040 = vmul.f32 %v3285, %v3992
        %v4041 = vmul.f32 %v3365, %v3992
        %v4090 = vrot.slane %v3994, 1
        %v4091 = vrot.slane %v3995, 1
        %v4092 = vsel %vm1134, %v4090, %v4091
        %v4093 = vrot.slane %v3996, 1
        %v4094 = vsel %vm1134, %v4091, %v4093
        %v4095 = vrot.slane %v3997, 1
        %v4096 = vrot.slane %v3998, 1
        %v4097 = vsel %vm1134, %v4095, %v4096
        %v4098 = vrot.slane %v3999, 1
        %v4099 = vsel %vm1134, %v4096, %v4098
        %v4100 = vrot.slane %v4000, 1
        %v4101 = vrot.slane %v4001, 1
        %v4102 = vsel %vm1134, %v4100, %v4101
        %v4103 = vrot.slane %v4002, 1
        %v4104 = vsel %vm1134, %v4101, %v4103
        %v4105 = vrot.slane %v4003, 1
        %v4106 = vrot.slane %v4004, 1
        %v4107 = vsel %vm1134, %v4105, %v4106
        %v4108 = vrot.slane %v4005, 1
        %v4109 = vsel %vm1134, %v4106, %v4108
        %v4110 = vrot.slane %v4006, 1
        %v4111 = vrot.slane %v4007, 1
        %v4112 = vsel %vm1134, %v4110, %v4111
        %v4113 = vrot.slane %v4008, 1
        %v4114 = vsel %vm1134, %v4111, %v4113
        %v4115 = vrot.slane %v4009, 1
        %v4116 = vrot.slane %v4010, 1
        %v4117 = vsel %vm1134, %v4115, %v4116
        %v4118 = vrot.slane %v4011, 1
        %v4119 = vsel %vm1134, %v4116, %v4118
        %v4120 = vrot.slane %v4012, 1
        %v4121 = vrot.slane %v4013, 1
        %v4122 = vsel %vm1134, %v4120, %v4121
        %v4123 = vrot.slane %v4014, 1
        %v4124 = vsel %vm1134, %v4121, %v4123
        %v4125 = vrot.slane %v4015, 1
        %v4126 = vrot.slane %v4016, 1
        %v4127 = vsel %vm1134, %v4125, %v4126
        %v4128 = vrot.slane %v4017, 1
        %v4129 = vsel %vm1134, %v4126, %v4128
        %v4130 = vrot.slane %v4018, 1
        %v4131 = vrot.slane %v4019, 1
        %v4132 = vsel %vm1134, %v4130, %v4131
        %v4133 = vrot.slane %v4020, 1
        %v4134 = vsel %vm1134, %v4131, %v4133
        %v4135 = vrot.slane %v4021, 1
        %v4136 = vrot.slane %v4022, 1
        %v4137 = vsel %vm1134, %v4135, %v4136
        %v4138 = vrot.slane %v4023, 1
        %v4139 = vsel %vm1134, %v4136, %v4138
        %v4140 = vrot.slane %v4024, 1
        %v4141 = vrot.slane %v4025, 1
        %v4142 = vsel %vm1134, %v4140, %v4141
        %v4143 = vrot.slane %v4026, 1
        %v4144 = vsel %vm1134, %v4141, %v4143
        %v4145 = vrot.slane %v4027, 1
        %v4146 = vrot.slane %v4028, 1
        %v4147 = vsel %vm1134, %v4145, %v4146
        %v4148 = vrot.slane %v4029, 1
        %v4149 = vsel %vm1134, %v4146, %v4148
        %v4150 = vrot.slane %v4030, 1
        %v4151 = vrot.slane %v4031, 1
        %v4152 = vsel %vm1134, %v4150, %v4151
        %v4153 = vrot.slane %v4032, 1
        %v4154 = vsel %vm1134, %v4151, %v4153
        %v4155 = vrot.slane %v4033, 1
        %v4156 = vrot.slane %v4034, 1
        %v4157 = vsel %vm1134, %v4155, %v4156
        %v4158 = vrot.slane %v4035, 1
        %v4159 = vsel %vm1134, %v4156, %v4158
        %v4160 = vrot.slane %v4036, 1
        %v4161 = vrot.slane %v4037, 1
        %v4162 = vsel %vm1134, %v4160, %v4161
        %v4163 = vrot.slane %v4038, 1
        %v4164 = vsel %vm1134, %v4161, %v4163
        %v4165 = vrot.slane %v4039, 1
        %v4166 = vrot.slane %v4040, 1
        %v4167 = vsel %vm1134, %v4165, %v4166
        %v4168 = vrot.slane %v4041, 1
        %v4169 = vsel %vm1134, %v4166, %v4168
        %v4202 = vadd.f32 %v3954, %v4092
        %v4203 = vadd.f32 %v3955, %v4094
        %v4204 = vadd.f32 %v3956, %v4097
        %v4205 = vadd.f32 %v3957, %v4099
        %v4206 = vadd.f32 %v3958, %v4102
        %v4207 = vadd.f32 %v3959, %v4104
        %v4208 = vadd.f32 %v3960, %v4107
        %v4209 = vadd.f32 %v3961, %v4109
        %v4210 = vadd.f32 %v3962, %v4112
        %v4211 = vadd.f32 %v3963, %v4114
        %v4212 = vadd.f32 %v3964, %v4117
        %v4213 = vadd.f32 %v3965, %v4119
        %v4214 = vadd.f32 %v3966, %v4122
        %v4215 = vadd.f32 %v3967, %v4124
        %v4216 = vadd.f32 %v3968, %v4127
        %v4217 = vadd.f32 %v3969, %v4129
        %v4218 = vadd.f32 %v3970, %v4132
        %v4219 = vadd.f32 %v3971, %v4134
        %v4220 = vadd.f32 %v3972, %v4137
        %v4221 = vadd.f32 %v3973, %v4139
        %v4222 = vadd.f32 %v3974, %v4142
        %v4223 = vadd.f32 %v3975, %v4144
        %v4224 = vadd.f32 %v3976, %v4147
        %v4225 = vadd.f32 %v3977, %v4149
        %v4226 = vadd.f32 %v3978, %v4152
        %v4227 = vadd.f32 %v3979, %v4154
        %v4228 = vadd.f32 %v3980, %v4157
        %v4229 = vadd.f32 %v3981, %v4159
        %v4230 = vadd.f32 %v3982, %v4162
        %v4231 = vadd.f32 %v3983, %v4164
        %v4232 = vadd.f32 %v3984, %v4167
        %v4233 = vadd.f32 %v3985, %v4169
        %s4234 = scalar_lea.vmem %s6, 5
        %v4235 = vld [vmem:[%s4234] sm:$0x1]
        %v4237 = vlaneseq
        %v4238 = vshrl.u32 %v4237, 7
        %v4239 = vsub.s32 0, %v4238
        %v4240 = vrot.slane %v4235, %v4239
        %v4242 = vmul.f32 %v3334, %v4240
        %v4243 = vmul.f32 %v3240, %v4240
        %v4244 = vmul.f32 %v3350, %v4240
        %v4245 = vmul.f32 %v3335, %v4240
        %v4246 = vmul.f32 %v3243, %v4240
        %v4247 = vmul.f32 %v3351, %v4240
        %v4248 = vmul.f32 %v3336, %v4240
        %v4249 = vmul.f32 %v3246, %v4240
        %v4250 = vmul.f32 %v3352, %v4240
        %v4251 = vmul.f32 %v3337, %v4240
        %v4252 = vmul.f32 %v3249, %v4240
        %v4253 = vmul.f32 %v3353, %v4240
        %v4254 = vmul.f32 %v3338, %v4240
        %v4255 = vmul.f32 %v3252, %v4240
        %v4256 = vmul.f32 %v3354, %v4240
        %v4257 = vmul.f32 %v3339, %v4240
        %v4258 = vmul.f32 %v3255, %v4240
        %v4259 = vmul.f32 %v3355, %v4240
        %v4260 = vmul.f32 %v3340, %v4240
        %v4261 = vmul.f32 %v3258, %v4240
        %v4262 = vmul.f32 %v3356, %v4240
        %v4263 = vmul.f32 %v3341, %v4240
        %v4264 = vmul.f32 %v3261, %v4240
        %v4265 = vmul.f32 %v3357, %v4240
        %v4266 = vmul.f32 %v3342, %v4240
        %v4267 = vmul.f32 %v3264, %v4240
        %v4268 = vmul.f32 %v3358, %v4240
        %v4269 = vmul.f32 %v3343, %v4240
        %v4270 = vmul.f32 %v3267, %v4240
        %v4271 = vmul.f32 %v3359, %v4240
        %v4272 = vmul.f32 %v3344, %v4240
        %v4273 = vmul.f32 %v3270, %v4240
        %v4274 = vmul.f32 %v3360, %v4240
        %v4275 = vmul.f32 %v3345, %v4240
        %v4276 = vmul.f32 %v3273, %v4240
        %v4277 = vmul.f32 %v3361, %v4240
        %v4278 = vmul.f32 %v3346, %v4240
        %v4279 = vmul.f32 %v3276, %v4240
        %v4280 = vmul.f32 %v3362, %v4240
        %v4281 = vmul.f32 %v3347, %v4240
        %v4282 = vmul.f32 %v3279, %v4240
        %v4283 = vmul.f32 %v3363, %v4240
        %v4284 = vmul.f32 %v3348, %v4240
        %v4285 = vmul.f32 %v3282, %v4240
        %v4286 = vmul.f32 %v3364, %v4240
        %v4287 = vmul.f32 %v3349, %v4240
        %v4288 = vmul.f32 %v3285, %v4240
        %v4289 = vmul.f32 %v3365, %v4240
        %v4338 = vrot.slane %v4242, 2
        %v4339 = vrot.slane %v4243, 2
        %v4340 = vsel %vm3774, %v4338, %v4339
        %v4341 = vrot.slane %v4244, 2
        %v4342 = vsel %vm3774, %v4339, %v4341
        %v4343 = vrot.slane %v4245, 2
        %v4344 = vrot.slane %v4246, 2
        %v4345 = vsel %vm3774, %v4343, %v4344
        %v4346 = vrot.slane %v4247, 2
        %v4347 = vsel %vm3774, %v4344, %v4346
        %v4348 = vrot.slane %v4248, 2
        %v4349 = vrot.slane %v4249, 2
        %v4350 = vsel %vm3774, %v4348, %v4349
        %v4351 = vrot.slane %v4250, 2
        %v4352 = vsel %vm3774, %v4349, %v4351
        %v4353 = vrot.slane %v4251, 2
        %v4354 = vrot.slane %v4252, 2
        %v4355 = vsel %vm3774, %v4353, %v4354
        %v4356 = vrot.slane %v4253, 2
        %v4357 = vsel %vm3774, %v4354, %v4356
        %v4358 = vrot.slane %v4254, 2
        %v4359 = vrot.slane %v4255, 2
        %v4360 = vsel %vm3774, %v4358, %v4359
        %v4361 = vrot.slane %v4256, 2
        %v4362 = vsel %vm3774, %v4359, %v4361
        %v4363 = vrot.slane %v4257, 2
        %v4364 = vrot.slane %v4258, 2
        %v4365 = vsel %vm3774, %v4363, %v4364
        %v4366 = vrot.slane %v4259, 2
        %v4367 = vsel %vm3774, %v4364, %v4366
        %v4368 = vrot.slane %v4260, 2
        %v4369 = vrot.slane %v4261, 2
        %v4370 = vsel %vm3774, %v4368, %v4369
        %v4371 = vrot.slane %v4262, 2
        %v4372 = vsel %vm3774, %v4369, %v4371
        %v4373 = vrot.slane %v4263, 2
        %v4374 = vrot.slane %v4264, 2
        %v4375 = vsel %vm3774, %v4373, %v4374
        %v4376 = vrot.slane %v4265, 2
        %v4377 = vsel %vm3774, %v4374, %v4376
        %v4378 = vrot.slane %v4266, 2
        %v4379 = vrot.slane %v4267, 2
        %v4380 = vsel %vm3774, %v4378, %v4379
        %v4381 = vrot.slane %v4268, 2
        %v4382 = vsel %vm3774, %v4379, %v4381
        %v4383 = vrot.slane %v4269, 2
        %v4384 = vrot.slane %v4270, 2
        %v4385 = vsel %vm3774, %v4383, %v4384
        %v4386 = vrot.slane %v4271, 2
        %v4387 = vsel %vm3774, %v4384, %v4386
        %v4388 = vrot.slane %v4272, 2
        %v4389 = vrot.slane %v4273, 2
        %v4390 = vsel %vm3774, %v4388, %v4389
        %v4391 = vrot.slane %v4274, 2
        %v4392 = vsel %vm3774, %v4389, %v4391
        %v4393 = vrot.slane %v4275, 2
        %v4394 = vrot.slane %v4276, 2
        %v4395 = vsel %vm3774, %v4393, %v4394
        %v4396 = vrot.slane %v4277, 2
        %v4397 = vsel %vm3774, %v4394, %v4396
        %v4398 = vrot.slane %v4278, 2
        %v4399 = vrot.slane %v4279, 2
        %v4400 = vsel %vm3774, %v4398, %v4399
        %v4401 = vrot.slane %v4280, 2
        %v4402 = vsel %vm3774, %v4399, %v4401
        %v4403 = vrot.slane %v4281, 2
        %v4404 = vrot.slane %v4282, 2
        %v4405 = vsel %vm3774, %v4403, %v4404
        %v4406 = vrot.slane %v4283, 2
        %v4407 = vsel %vm3774, %v4404, %v4406
        %v4408 = vrot.slane %v4284, 2
        %v4409 = vrot.slane %v4285, 2
        %v4410 = vsel %vm3774, %v4408, %v4409
        %v4411 = vrot.slane %v4286, 2
        %v4412 = vsel %vm3774, %v4409, %v4411
        %v4413 = vrot.slane %v4287, 2
        %v4414 = vrot.slane %v4288, 2
        %v4415 = vsel %vm3774, %v4413, %v4414
        %v4416 = vrot.slane %v4289, 2
        %v4417 = vsel %vm3774, %v4414, %v4416
        %v4450 = vadd.f32 %v4202, %v4340
        %v4451 = vadd.f32 %v4203, %v4342
        %v4452 = vadd.f32 %v4204, %v4345
        %v4453 = vadd.f32 %v4205, %v4347
        %v4454 = vadd.f32 %v4206, %v4350
        %v4455 = vadd.f32 %v4207, %v4352
        %v4456 = vadd.f32 %v4208, %v4355
        %v4457 = vadd.f32 %v4209, %v4357
        %v4458 = vadd.f32 %v4210, %v4360
        %v4459 = vadd.f32 %v4211, %v4362
        %v4460 = vadd.f32 %v4212, %v4365
        %v4461 = vadd.f32 %v4213, %v4367
        %v4462 = vadd.f32 %v4214, %v4370
        %v4463 = vadd.f32 %v4215, %v4372
        %v4464 = vadd.f32 %v4216, %v4375
        %v4465 = vadd.f32 %v4217, %v4377
        %v4466 = vadd.f32 %v4218, %v4380
        %v4467 = vadd.f32 %v4219, %v4382
        %v4468 = vadd.f32 %v4220, %v4385
        %v4469 = vadd.f32 %v4221, %v4387
        %v4470 = vadd.f32 %v4222, %v4390
        %v4471 = vadd.f32 %v4223, %v4392
        %v4472 = vadd.f32 %v4224, %v4395
        %v4473 = vadd.f32 %v4225, %v4397
        %v4474 = vadd.f32 %v4226, %v4400
        %v4475 = vadd.f32 %v4227, %v4402
        %v4476 = vadd.f32 %v4228, %v4405
        %v4477 = vadd.f32 %v4229, %v4407
        %v4478 = vadd.f32 %v4230, %v4410
        %v4479 = vadd.f32 %v4231, %v4412
        %v4480 = vadd.f32 %v4232, %v4415
        %v4481 = vadd.f32 %v4233, %v4417
        %s4482 = scalar_lea.vmem %s6, 6
        %v4483 = vld [vmem:[%s4482] sm:$0x1]
        %v4485 = vlaneseq
        %v4486 = vshrl.u32 %v4485, 7
        %v4487 = vsub.s32 0, %v4486
        %v4488 = vrot.slane %v4483, %v4487
        %v4490 = vmul.f32 %v3335, %v4488
        %v4491 = vmul.f32 %v3243, %v4488
        %v4492 = vmul.f32 %v3336, %v4488
        %v4493 = vmul.f32 %v3246, %v4488
        %v4494 = vmul.f32 %v3337, %v4488
        %v4495 = vmul.f32 %v3249, %v4488
        %v4496 = vmul.f32 %v3338, %v4488
        %v4497 = vmul.f32 %v3252, %v4488
        %v4498 = vmul.f32 %v3339, %v4488
        %v4499 = vmul.f32 %v3255, %v4488
        %v4500 = vmul.f32 %v3340, %v4488
        %v4501 = vmul.f32 %v3258, %v4488
        %v4502 = vmul.f32 %v3341, %v4488
        %v4503 = vmul.f32 %v3261, %v4488
        %v4504 = vmul.f32 %v3342, %v4488
        %v4505 = vmul.f32 %v3264, %v4488
        %v4506 = vmul.f32 %v3343, %v4488
        %v4507 = vmul.f32 %v3267, %v4488
        %v4508 = vmul.f32 %v3344, %v4488
        %v4509 = vmul.f32 %v3270, %v4488
        %v4510 = vmul.f32 %v3345, %v4488
        %v4511 = vmul.f32 %v3273, %v4488
        %v4512 = vmul.f32 %v3346, %v4488
        %v4513 = vmul.f32 %v3276, %v4488
        %v4514 = vmul.f32 %v3347, %v4488
        %v4515 = vmul.f32 %v3279, %v4488
        %v4516 = vmul.f32 %v3348, %v4488
        %v4517 = vmul.f32 %v3282, %v4488
        %v4518 = vmul.f32 %v3349, %v4488
        %v4519 = vmul.f32 %v3285, %v4488
        %v4520 = vmul.f32 %v4488, 0.0
        %v4521 = vadd.f32 %v4450, %v4490
        %v4522 = vadd.f32 %v4451, %v4491
        %v4523 = vadd.f32 %v4452, %v4492
        %v4524 = vadd.f32 %v4453, %v4493
        %v4525 = vadd.f32 %v4454, %v4494
        %v4526 = vadd.f32 %v4455, %v4495
        %v4527 = vadd.f32 %v4456, %v4496
        %v4528 = vadd.f32 %v4457, %v4497
        %v4529 = vadd.f32 %v4458, %v4498
        %v4530 = vadd.f32 %v4459, %v4499
        %v4531 = vadd.f32 %v4460, %v4500
        %v4532 = vadd.f32 %v4461, %v4501
        %v4533 = vadd.f32 %v4462, %v4502
        %v4534 = vadd.f32 %v4463, %v4503
        %v4535 = vadd.f32 %v4464, %v4504
        %v4536 = vadd.f32 %v4465, %v4505
        %v4537 = vadd.f32 %v4466, %v4506
        %v4538 = vadd.f32 %v4467, %v4507
        %v4539 = vadd.f32 %v4468, %v4508
        %v4540 = vadd.f32 %v4469, %v4509
        %v4541 = vadd.f32 %v4470, %v4510
        %v4542 = vadd.f32 %v4471, %v4511
        %v4543 = vadd.f32 %v4472, %v4512
        %v4544 = vadd.f32 %v4473, %v4513
        %v4545 = vadd.f32 %v4474, %v4514
        %v4546 = vadd.f32 %v4475, %v4515
        %v4547 = vadd.f32 %v4476, %v4516
        %v4548 = vadd.f32 %v4477, %v4517
        %v4549 = vadd.f32 %v4478, %v4518
        %v4550 = vadd.f32 %v4479, %v4519
        %v4551 = vadd.f32 %v4480, %v4520
        %v4552 = vadd.f32 %v4481, %v4520
        %s4553 = scalar_lea.vmem %s6, 7
        %v4554 = vld [vmem:[%s4553] sm:$0x1]
        %v4556 = vlaneseq
        %v4557 = vshrl.u32 %v4556, 7
        %v4558 = vsub.s32 0, %v4557
        %v4559 = vrot.slane %v4554, %v4558
        %v4561 = vmul.f32 %v3335, %v4559
        %v4562 = vmul.f32 %v3243, %v4559
        %v4563 = vmul.f32 %v3351, %v4559
        %v4564 = vmul.f32 %v3336, %v4559
        %v4565 = vmul.f32 %v3246, %v4559
        %v4566 = vmul.f32 %v3352, %v4559
        %v4567 = vmul.f32 %v3337, %v4559
        %v4568 = vmul.f32 %v3249, %v4559
        %v4569 = vmul.f32 %v3353, %v4559
        %v4570 = vmul.f32 %v3338, %v4559
        %v4571 = vmul.f32 %v3252, %v4559
        %v4572 = vmul.f32 %v3354, %v4559
        %v4573 = vmul.f32 %v3339, %v4559
        %v4574 = vmul.f32 %v3255, %v4559
        %v4575 = vmul.f32 %v3355, %v4559
        %v4576 = vmul.f32 %v3340, %v4559
        %v4577 = vmul.f32 %v3258, %v4559
        %v4578 = vmul.f32 %v3356, %v4559
        %v4579 = vmul.f32 %v3341, %v4559
        %v4580 = vmul.f32 %v3261, %v4559
        %v4581 = vmul.f32 %v3357, %v4559
        %v4582 = vmul.f32 %v3342, %v4559
        %v4583 = vmul.f32 %v3264, %v4559
        %v4584 = vmul.f32 %v3358, %v4559
        %v4585 = vmul.f32 %v3343, %v4559
        %v4586 = vmul.f32 %v3267, %v4559
        %v4587 = vmul.f32 %v3359, %v4559
        %v4588 = vmul.f32 %v3344, %v4559
        %v4589 = vmul.f32 %v3270, %v4559
        %v4590 = vmul.f32 %v3360, %v4559
        %v4591 = vmul.f32 %v3345, %v4559
        %v4592 = vmul.f32 %v3273, %v4559
        %v4593 = vmul.f32 %v3361, %v4559
        %v4594 = vmul.f32 %v3346, %v4559
        %v4595 = vmul.f32 %v3276, %v4559
        %v4596 = vmul.f32 %v3362, %v4559
        %v4597 = vmul.f32 %v3347, %v4559
        %v4598 = vmul.f32 %v3279, %v4559
        %v4599 = vmul.f32 %v3363, %v4559
        %v4600 = vmul.f32 %v3348, %v4559
        %v4601 = vmul.f32 %v3282, %v4559
        %v4602 = vmul.f32 %v3364, %v4559
        %v4603 = vmul.f32 %v3349, %v4559
        %v4604 = vmul.f32 %v3285, %v4559
        %v4605 = vmul.f32 %v3365, %v4559
        %v4606 = vmul.f32 %v4559, 0.0
        %v4653 = vrot.slane %v4561, 1
        %v4654 = vrot.slane %v4562, 1
        %v4655 = vsel %vm1134, %v4653, %v4654
        %v4656 = vrot.slane %v4563, 1
        %v4657 = vsel %vm1134, %v4654, %v4656
        %v4658 = vrot.slane %v4564, 1
        %v4659 = vrot.slane %v4565, 1
        %v4660 = vsel %vm1134, %v4658, %v4659
        %v4661 = vrot.slane %v4566, 1
        %v4662 = vsel %vm1134, %v4659, %v4661
        %v4663 = vrot.slane %v4567, 1
        %v4664 = vrot.slane %v4568, 1
        %v4665 = vsel %vm1134, %v4663, %v4664
        %v4666 = vrot.slane %v4569, 1
        %v4667 = vsel %vm1134, %v4664, %v4666
        %v4668 = vrot.slane %v4570, 1
        %v4669 = vrot.slane %v4571, 1
        %v4670 = vsel %vm1134, %v4668, %v4669
        %v4671 = vrot.slane %v4572, 1
        %v4672 = vsel %vm1134, %v4669, %v4671
        %v4673 = vrot.slane %v4573, 1
        %v4674 = vrot.slane %v4574, 1
        %v4675 = vsel %vm1134, %v4673, %v4674
        %v4676 = vrot.slane %v4575, 1
        %v4677 = vsel %vm1134, %v4674, %v4676
        %v4678 = vrot.slane %v4576, 1
        %v4679 = vrot.slane %v4577, 1
        %v4680 = vsel %vm1134, %v4678, %v4679
        %v4681 = vrot.slane %v4578, 1
        %v4682 = vsel %vm1134, %v4679, %v4681
        %v4683 = vrot.slane %v4579, 1
        %v4684 = vrot.slane %v4580, 1
        %v4685 = vsel %vm1134, %v4683, %v4684
        %v4686 = vrot.slane %v4581, 1
        %v4687 = vsel %vm1134, %v4684, %v4686
        %v4688 = vrot.slane %v4582, 1
        %v4689 = vrot.slane %v4583, 1
        %v4690 = vsel %vm1134, %v4688, %v4689
        %v4691 = vrot.slane %v4584, 1
        %v4692 = vsel %vm1134, %v4689, %v4691
        %v4693 = vrot.slane %v4585, 1
        %v4694 = vrot.slane %v4586, 1
        %v4695 = vsel %vm1134, %v4693, %v4694
        %v4696 = vrot.slane %v4587, 1
        %v4697 = vsel %vm1134, %v4694, %v4696
        %v4698 = vrot.slane %v4588, 1
        %v4699 = vrot.slane %v4589, 1
        %v4700 = vsel %vm1134, %v4698, %v4699
        %v4701 = vrot.slane %v4590, 1
        %v4702 = vsel %vm1134, %v4699, %v4701
        %v4703 = vrot.slane %v4591, 1
        %v4704 = vrot.slane %v4592, 1
        %v4705 = vsel %vm1134, %v4703, %v4704
        %v4706 = vrot.slane %v4593, 1
        %v4707 = vsel %vm1134, %v4704, %v4706
        %v4708 = vrot.slane %v4594, 1
        %v4709 = vrot.slane %v4595, 1
        %v4710 = vsel %vm1134, %v4708, %v4709
        %v4711 = vrot.slane %v4596, 1
        %v4712 = vsel %vm1134, %v4709, %v4711
        %v4713 = vrot.slane %v4597, 1
        %v4714 = vrot.slane %v4598, 1
        %v4715 = vsel %vm1134, %v4713, %v4714
        %v4716 = vrot.slane %v4599, 1
        %v4717 = vsel %vm1134, %v4714, %v4716
        %v4718 = vrot.slane %v4600, 1
        %v4719 = vrot.slane %v4601, 1
        %v4720 = vsel %vm1134, %v4718, %v4719
        %v4721 = vrot.slane %v4602, 1
        %v4722 = vsel %vm1134, %v4719, %v4721
        %v4723 = vrot.slane %v4603, 1
        %v4724 = vrot.slane %v4604, 1
        %v4725 = vsel %vm1134, %v4723, %v4724
        %v4726 = vrot.slane %v4605, 1
        %v4727 = vsel %vm1134, %v4724, %v4726
        %v4728 = vrot.slane %v4606, 1
        %v4729 = vsel %vm1134, %v4728, %v4728
        %v4761 = vadd.f32 %v4521, %v4655
        %v4762 = vadd.f32 %v4522, %v4657
        %v4763 = vadd.f32 %v4523, %v4660
        %v4764 = vadd.f32 %v4524, %v4662
        %v4765 = vadd.f32 %v4525, %v4665
        %v4766 = vadd.f32 %v4526, %v4667
        %v4767 = vadd.f32 %v4527, %v4670
        %v4768 = vadd.f32 %v4528, %v4672
        %v4769 = vadd.f32 %v4529, %v4675
        %v4770 = vadd.f32 %v4530, %v4677
        %v4771 = vadd.f32 %v4531, %v4680
        %v4772 = vadd.f32 %v4532, %v4682
        %v4773 = vadd.f32 %v4533, %v4685
        %v4774 = vadd.f32 %v4534, %v4687
        %v4775 = vadd.f32 %v4535, %v4690
        %v4776 = vadd.f32 %v4536, %v4692
        %v4777 = vadd.f32 %v4537, %v4695
        %v4778 = vadd.f32 %v4538, %v4697
        %v4779 = vadd.f32 %v4539, %v4700
        %v4780 = vadd.f32 %v4540, %v4702
        %v4781 = vadd.f32 %v4541, %v4705
        %v4782 = vadd.f32 %v4542, %v4707
        %v4783 = vadd.f32 %v4543, %v4710
        %v4784 = vadd.f32 %v4544, %v4712
        %v4785 = vadd.f32 %v4545, %v4715
        %v4786 = vadd.f32 %v4546, %v4717
        %v4787 = vadd.f32 %v4547, %v4720
        %v4788 = vadd.f32 %v4548, %v4722
        %v4789 = vadd.f32 %v4549, %v4725
        %v4790 = vadd.f32 %v4550, %v4727
        %v4791 = vadd.f32 %v4551, %v4729
        %v4792 = vadd.f32 %v4552, %v4729
        %s4793 = scalar_lea.vmem %s6, 8
        %v4794 = vld [vmem:[%s4793] sm:$0x1]
        %v4796 = vlaneseq
        %v4797 = vshrl.u32 %v4796, 7
        %v4798 = vsub.s32 0, %v4797
        %v4799 = vrot.slane %v4794, %v4798
        %v4801 = vmul.f32 %v3335, %v4799
        %v4802 = vmul.f32 %v3243, %v4799
        %v4803 = vmul.f32 %v3351, %v4799
        %v4804 = vmul.f32 %v3336, %v4799
        %v4805 = vmul.f32 %v3246, %v4799
        %v4806 = vmul.f32 %v3352, %v4799
        %v4807 = vmul.f32 %v3337, %v4799
        %v4808 = vmul.f32 %v3249, %v4799
        %v4809 = vmul.f32 %v3353, %v4799
        %v4810 = vmul.f32 %v3338, %v4799
        %v4811 = vmul.f32 %v3252, %v4799
        %v4812 = vmul.f32 %v3354, %v4799
        %v4813 = vmul.f32 %v3339, %v4799
        %v4814 = vmul.f32 %v3255, %v4799
        %v4815 = vmul.f32 %v3355, %v4799
        %v4816 = vmul.f32 %v3340, %v4799
        %v4817 = vmul.f32 %v3258, %v4799
        %v4818 = vmul.f32 %v3356, %v4799
        %v4819 = vmul.f32 %v3341, %v4799
        %v4820 = vmul.f32 %v3261, %v4799
        %v4821 = vmul.f32 %v3357, %v4799
        %v4822 = vmul.f32 %v3342, %v4799
        %v4823 = vmul.f32 %v3264, %v4799
        %v4824 = vmul.f32 %v3358, %v4799
        %v4825 = vmul.f32 %v3343, %v4799
        %v4826 = vmul.f32 %v3267, %v4799
        %v4827 = vmul.f32 %v3359, %v4799
        %v4828 = vmul.f32 %v3344, %v4799
        %v4829 = vmul.f32 %v3270, %v4799
        %v4830 = vmul.f32 %v3360, %v4799
        %v4831 = vmul.f32 %v3345, %v4799
        %v4832 = vmul.f32 %v3273, %v4799
        %v4833 = vmul.f32 %v3361, %v4799
        %v4834 = vmul.f32 %v3346, %v4799
        %v4835 = vmul.f32 %v3276, %v4799
        %v4836 = vmul.f32 %v3362, %v4799
        %v4837 = vmul.f32 %v3347, %v4799
        %v4838 = vmul.f32 %v3279, %v4799
        %v4839 = vmul.f32 %v3363, %v4799
        %v4840 = vmul.f32 %v3348, %v4799
        %v4841 = vmul.f32 %v3282, %v4799
        %v4842 = vmul.f32 %v3364, %v4799
        %v4843 = vmul.f32 %v3349, %v4799
        %v4844 = vmul.f32 %v3285, %v4799
        %v4845 = vmul.f32 %v3365, %v4799
        %v4846 = vmul.f32 %v4799, 0.0
        %v4893 = vrot.slane %v4801, 2
        %v4894 = vrot.slane %v4802, 2
        %v4895 = vsel %vm3774, %v4893, %v4894
        %v4896 = vrot.slane %v4803, 2
        %v4897 = vsel %vm3774, %v4894, %v4896
        %v4898 = vrot.slane %v4804, 2
        %v4899 = vrot.slane %v4805, 2
        %v4900 = vsel %vm3774, %v4898, %v4899
        %v4901 = vrot.slane %v4806, 2
        %v4902 = vsel %vm3774, %v4899, %v4901
        %v4903 = vrot.slane %v4807, 2
        %v4904 = vrot.slane %v4808, 2
        %v4905 = vsel %vm3774, %v4903, %v4904
        %v4906 = vrot.slane %v4809, 2
        %v4907 = vsel %vm3774, %v4904, %v4906
        %v4908 = vrot.slane %v4810, 2
        %v4909 = vrot.slane %v4811, 2
        %v4910 = vsel %vm3774, %v4908, %v4909
        %v4911 = vrot.slane %v4812, 2
        %v4912 = vsel %vm3774, %v4909, %v4911
        %v4913 = vrot.slane %v4813, 2
        %v4914 = vrot.slane %v4814, 2
        %v4915 = vsel %vm3774, %v4913, %v4914
        %v4916 = vrot.slane %v4815, 2
        %v4917 = vsel %vm3774, %v4914, %v4916
        %v4918 = vrot.slane %v4816, 2
        %v4919 = vrot.slane %v4817, 2
        %v4920 = vsel %vm3774, %v4918, %v4919
        %v4921 = vrot.slane %v4818, 2
        %v4922 = vsel %vm3774, %v4919, %v4921
        %v4923 = vrot.slane %v4819, 2
        %v4924 = vrot.slane %v4820, 2
        %v4925 = vsel %vm3774, %v4923, %v4924
        %v4926 = vrot.slane %v4821, 2
        %v4927 = vsel %vm3774, %v4924, %v4926
        %v4928 = vrot.slane %v4822, 2
        %v4929 = vrot.slane %v4823, 2
        %v4930 = vsel %vm3774, %v4928, %v4929
        %v4931 = vrot.slane %v4824, 2
        %v4932 = vsel %vm3774, %v4929, %v4931
        %v4933 = vrot.slane %v4825, 2
        %v4934 = vrot.slane %v4826, 2
        %v4935 = vsel %vm3774, %v4933, %v4934
        %v4936 = vrot.slane %v4827, 2
        %v4937 = vsel %vm3774, %v4934, %v4936
        %v4938 = vrot.slane %v4828, 2
        %v4939 = vrot.slane %v4829, 2
        %v4940 = vsel %vm3774, %v4938, %v4939
        %v4941 = vrot.slane %v4830, 2
        %v4942 = vsel %vm3774, %v4939, %v4941
        %v4943 = vrot.slane %v4831, 2
        %v4944 = vrot.slane %v4832, 2
        %v4945 = vsel %vm3774, %v4943, %v4944
        %v4946 = vrot.slane %v4833, 2
        %v4947 = vsel %vm3774, %v4944, %v4946
        %v4948 = vrot.slane %v4834, 2
        %v4949 = vrot.slane %v4835, 2
        %v4950 = vsel %vm3774, %v4948, %v4949
        %v4951 = vrot.slane %v4836, 2
        %v4952 = vsel %vm3774, %v4949, %v4951
        %v4953 = vrot.slane %v4837, 2
        %v4954 = vrot.slane %v4838, 2
        %v4955 = vsel %vm3774, %v4953, %v4954
        %v4956 = vrot.slane %v4839, 2
        %v4957 = vsel %vm3774, %v4954, %v4956
        %v4958 = vrot.slane %v4840, 2
        %v4959 = vrot.slane %v4841, 2
        %v4960 = vsel %vm3774, %v4958, %v4959
        %v4961 = vrot.slane %v4842, 2
        %v4962 = vsel %vm3774, %v4959, %v4961
        %v4963 = vrot.slane %v4843, 2
        %v4964 = vrot.slane %v4844, 2
        %v4965 = vsel %vm3774, %v4963, %v4964
        %v4966 = vrot.slane %v4845, 2
        %v4967 = vsel %vm3774, %v4964, %v4966
        %v4968 = vrot.slane %v4846, 2
        %v4969 = vsel %vm3774, %v4968, %v4968
        %v5001 = vadd.f32 %v4761, %v4895
        %v5002 = vadd.f32 %v4762, %v4897
        %v5003 = vadd.f32 %v4763, %v4900
        %v5004 = vadd.f32 %v4764, %v4902
        %v5005 = vadd.f32 %v4765, %v4905
        %v5006 = vadd.f32 %v4766, %v4907
        %v5007 = vadd.f32 %v4767, %v4910
        %v5008 = vadd.f32 %v4768, %v4912
        %v5009 = vadd.f32 %v4769, %v4915
        %v5010 = vadd.f32 %v4770, %v4917
        %v5011 = vadd.f32 %v4771, %v4920
        %v5012 = vadd.f32 %v4772, %v4922
        %v5013 = vadd.f32 %v4773, %v4925
        %v5014 = vadd.f32 %v4774, %v4927
        %v5015 = vadd.f32 %v4775, %v4930
        %v5016 = vadd.f32 %v4776, %v4932
        %v5017 = vadd.f32 %v4777, %v4935
        %v5018 = vadd.f32 %v4778, %v4937
        %v5019 = vadd.f32 %v4779, %v4940
        %v5020 = vadd.f32 %v4780, %v4942
        %v5021 = vadd.f32 %v4781, %v4945
        %v5022 = vadd.f32 %v4782, %v4947
        %v5023 = vadd.f32 %v4783, %v4950
        %v5024 = vadd.f32 %v4784, %v4952
        %v5025 = vadd.f32 %v4785, %v4955
        %v5026 = vadd.f32 %v4786, %v4957
        %v5027 = vadd.f32 %v4787, %v4960
        %v5028 = vadd.f32 %v4788, %v4962
        %v5029 = vadd.f32 %v4789, %v4965
        %v5030 = vadd.f32 %v4790, %v4967
        %v5031 = vadd.f32 %v4791, %v4969
        %v5032 = vadd.f32 %v4792, %v4969
        %v5033 = vld [vmem:[%s7] sm:$0x1]
        %v5035 = vlaneseq
        %v5036 = vshrl.u32 %v5035, 7
        %v5037 = vsub.s32 0, %v5036
        %v5038 = vrot.slane %v5033, %v5037
        %v5040 = vadd.f32 %v5001, %v5038
        %v5041 = vadd.f32 %v5002, %v5038
        %v5042 = vadd.f32 %v5003, %v5038
        %v5043 = vadd.f32 %v5004, %v5038
        %v5044 = vadd.f32 %v5005, %v5038
        %v5045 = vadd.f32 %v5006, %v5038
        %v5046 = vadd.f32 %v5007, %v5038
        %v5047 = vadd.f32 %v5008, %v5038
        %v5048 = vadd.f32 %v5009, %v5038
        %v5049 = vadd.f32 %v5010, %v5038
        %v5050 = vadd.f32 %v5011, %v5038
        %v5051 = vadd.f32 %v5012, %v5038
        %v5052 = vadd.f32 %v5013, %v5038
        %v5053 = vadd.f32 %v5014, %v5038
        %v5054 = vadd.f32 %v5015, %v5038
        %v5055 = vadd.f32 %v5016, %v5038
        %v5056 = vadd.f32 %v5017, %v5038
        %v5057 = vadd.f32 %v5018, %v5038
        %v5058 = vadd.f32 %v5019, %v5038
        %v5059 = vadd.f32 %v5020, %v5038
        %v5060 = vadd.f32 %v5021, %v5038
        %v5061 = vadd.f32 %v5022, %v5038
        %v5062 = vadd.f32 %v5023, %v5038
        %v5063 = vadd.f32 %v5024, %v5038
        %v5064 = vadd.f32 %v5025, %v5038
        %v5065 = vadd.f32 %v5026, %v5038
        %v5066 = vadd.f32 %v5027, %v5038
        %v5067 = vadd.f32 %v5028, %v5038
        %v5068 = vadd.f32 %v5029, %v5038
        %v5069 = vadd.f32 %v5030, %v5038
        %v5070 = vadd.f32 %v5031, %v5038
        %v5071 = vadd.f32 %v5032, %v5038
        %vm5072 = vcmp.gt.f32.partialorder %v5040, 0.0
        %vm5073 = vcmp.gt.f32.partialorder %v5041, 0.0
        %vm5074 = vcmp.gt.f32.partialorder %v5042, 0.0
        %vm5075 = vcmp.gt.f32.partialorder %v5043, 0.0
        %vm5076 = vcmp.gt.f32.partialorder %v5044, 0.0
        %vm5077 = vcmp.gt.f32.partialorder %v5045, 0.0
        %vm5078 = vcmp.gt.f32.partialorder %v5046, 0.0
        %vm5079 = vcmp.gt.f32.partialorder %v5047, 0.0
        %vm5080 = vcmp.gt.f32.partialorder %v5048, 0.0
        %vm5081 = vcmp.gt.f32.partialorder %v5049, 0.0
        %vm5082 = vcmp.gt.f32.partialorder %v5050, 0.0
        %vm5083 = vcmp.gt.f32.partialorder %v5051, 0.0
        %vm5084 = vcmp.gt.f32.partialorder %v5052, 0.0
        %vm5085 = vcmp.gt.f32.partialorder %v5053, 0.0
        %vm5086 = vcmp.gt.f32.partialorder %v5054, 0.0
        %vm5087 = vcmp.gt.f32.partialorder %v5055, 0.0
        %vm5088 = vcmp.gt.f32.partialorder %v5056, 0.0
        %vm5089 = vcmp.gt.f32.partialorder %v5057, 0.0
        %vm5090 = vcmp.gt.f32.partialorder %v5058, 0.0
        %vm5091 = vcmp.gt.f32.partialorder %v5059, 0.0
        %vm5092 = vcmp.gt.f32.partialorder %v5060, 0.0
        %vm5093 = vcmp.gt.f32.partialorder %v5061, 0.0
        %vm5094 = vcmp.gt.f32.partialorder %v5062, 0.0
        %vm5095 = vcmp.gt.f32.partialorder %v5063, 0.0
        %vm5096 = vcmp.gt.f32.partialorder %v5064, 0.0
        %vm5097 = vcmp.gt.f32.partialorder %v5065, 0.0
        %vm5098 = vcmp.gt.f32.partialorder %v5066, 0.0
        %vm5099 = vcmp.gt.f32.partialorder %v5067, 0.0
        %vm5100 = vcmp.gt.f32.partialorder %v5068, 0.0
        %vm5101 = vcmp.gt.f32.partialorder %v5069, 0.0
        %vm5102 = vcmp.gt.f32.partialorder %v5070, 0.0
        %vm5103 = vcmp.gt.f32.partialorder %v5071, 0.0
        %v5104 = vmul.f32 %v5040, 0.01
        %v5105 = vmul.f32 %v5041, 0.01
        %v5106 = vmul.f32 %v5042, 0.01
        %v5107 = vmul.f32 %v5043, 0.01
        %v5108 = vmul.f32 %v5044, 0.01
        %v5109 = vmul.f32 %v5045, 0.01
        %v5110 = vmul.f32 %v5046, 0.01
        %v5111 = vmul.f32 %v5047, 0.01
        %v5112 = vmul.f32 %v5048, 0.01
        %v5113 = vmul.f32 %v5049, 0.01
        %v5114 = vmul.f32 %v5050, 0.01
        %v5115 = vmul.f32 %v5051, 0.01
        %v5116 = vmul.f32 %v5052, 0.01
        %v5117 = vmul.f32 %v5053, 0.01
        %v5118 = vmul.f32 %v5054, 0.01
        %v5119 = vmul.f32 %v5055, 0.01
        %v5120 = vmul.f32 %v5056, 0.01
        %v5121 = vmul.f32 %v5057, 0.01
        %v5122 = vmul.f32 %v5058, 0.01
        %v5123 = vmul.f32 %v5059, 0.01
        %v5124 = vmul.f32 %v5060, 0.01
        %v5125 = vmul.f32 %v5061, 0.01
        %v5126 = vmul.f32 %v5062, 0.01
        %v5127 = vmul.f32 %v5063, 0.01
        %v5128 = vmul.f32 %v5064, 0.01
        %v5129 = vmul.f32 %v5065, 0.01
        %v5130 = vmul.f32 %v5066, 0.01
        %v5131 = vmul.f32 %v5067, 0.01
        %v5132 = vmul.f32 %v5068, 0.01
        %v5133 = vmul.f32 %v5069, 0.01
        %v5134 = vmul.f32 %v5070, 0.01
        %v5135 = vmul.f32 %v5071, 0.01
        %v5136 = vsel %vm5072, %v5040, %v5104
        %v5137 = vsel %vm5073, %v5041, %v5105
        %v5138 = vsel %vm5074, %v5042, %v5106
        %v5139 = vsel %vm5075, %v5043, %v5107
        %v5140 = vsel %vm5076, %v5044, %v5108
        %v5141 = vsel %vm5077, %v5045, %v5109
        %v5142 = vsel %vm5078, %v5046, %v5110
        %v5143 = vsel %vm5079, %v5047, %v5111
        %v5144 = vsel %vm5080, %v5048, %v5112
        %v5145 = vsel %vm5081, %v5049, %v5113
        %v5146 = vsel %vm5082, %v5050, %v5114
        %v5147 = vsel %vm5083, %v5051, %v5115
        %v5148 = vsel %vm5084, %v5052, %v5116
        %v5149 = vsel %vm5085, %v5053, %v5117
        %v5150 = vsel %vm5086, %v5054, %v5118
        %v5151 = vsel %vm5087, %v5055, %v5119
        %v5152 = vsel %vm5088, %v5056, %v5120
        %v5153 = vsel %vm5089, %v5057, %v5121
        %v5154 = vsel %vm5090, %v5058, %v5122
        %v5155 = vsel %vm5091, %v5059, %v5123
        %v5156 = vsel %vm5092, %v5060, %v5124
        %v5157 = vsel %vm5093, %v5061, %v5125
        %v5158 = vsel %vm5094, %v5062, %v5126
        %v5159 = vsel %vm5095, %v5063, %v5127
        %v5160 = vsel %vm5096, %v5064, %v5128
        %v5161 = vsel %vm5097, %v5065, %v5129
        %v5162 = vsel %vm5098, %v5066, %v5130
        %v5163 = vsel %vm5099, %v5067, %v5131
        %v5164 = vsel %vm5100, %v5068, %v5132
        %v5165 = vsel %vm5101, %v5069, %v5133
        %v5166 = vsel %vm5102, %v5070, %v5134
        %v5167 = vsel %vm5103, %v5071, %v5135
        %vm5168 = vcmask 130048
        %5169 = vst.msk [vmem:[%s428] sm:$0xff] %vm5168, %v5136
        %5170 = vst.msk [vmem:[%s428 + $0x8] sm:$0xff] %vm5168, %v5137
        %5171 = vst.msk [vmem:[%s428 + $0x10] sm:$0xff] %vm5168, %v5138
        %5172 = vst.msk [vmem:[%s428 + $0x18] sm:$0xff] %vm5168, %v5139
        %5173 = vst.msk [vmem:[%s428 + $0x20] sm:$0xff] %vm5168, %v5140
        %5174 = vst.msk [vmem:[%s428 + $0x28] sm:$0xff] %vm5168, %v5141
        %5175 = vst.msk [vmem:[%s428 + $0x30] sm:$0xff] %vm5168, %v5142
        %5176 = vst.msk [vmem:[%s428 + $0x38] sm:$0xff] %vm5168, %v5143
        %5177 = vst.msk [vmem:[%s428 + $0x40] sm:$0xff] %vm5168, %v5144
        %5178 = vst.msk [vmem:[%s428 + $0x48] sm:$0xff] %vm5168, %v5145
        %5179 = vst.msk [vmem:[%s428 + $0x50] sm:$0xff] %vm5168, %v5146
        %5180 = vst.msk [vmem:[%s428 + $0x58] sm:$0xff] %vm5168, %v5147
        %5181 = vst.msk [vmem:[%s428 + $0x60] sm:$0xff] %vm5168, %v5148
        %5182 = vst.msk [vmem:[%s428 + $0x68] sm:$0xff] %vm5168, %v5149
        %5183 = vst.msk [vmem:[%s428 + $0x70] sm:$0xff] %vm5168, %v5150
        %5184 = vst.msk [vmem:[%s428 + $0x78] sm:$0xff] %vm5168, %v5151
        %5185 = vst.msk [vmem:[%s428 + $0x80] sm:$0xff] %vm5168, %v5152
        %5186 = vst.msk [vmem:[%s428 + $0x88] sm:$0xff] %vm5168, %v5153
        %5187 = vst.msk [vmem:[%s428 + $0x90] sm:$0xff] %vm5168, %v5154
        %5188 = vst.msk [vmem:[%s428 + $0x98] sm:$0xff] %vm5168, %v5155
        %5189 = vst.msk [vmem:[%s428 + $0xa0] sm:$0xff] %vm5168, %v5156
        %5190 = vst.msk [vmem:[%s428 + $0xa8] sm:$0xff] %vm5168, %v5157
        %5191 = vst.msk [vmem:[%s428 + $0xb0] sm:$0xff] %vm5168, %v5158
        %5192 = vst.msk [vmem:[%s428 + $0xb8] sm:$0xff] %vm5168, %v5159
        %5193 = vst.msk [vmem:[%s428 + $0xc0] sm:$0xff] %vm5168, %v5160
        %5194 = vst.msk [vmem:[%s428 + $0xc8] sm:$0xff] %vm5168, %v5161
        %5195 = vst.msk [vmem:[%s428 + $0xd0] sm:$0xff] %vm5168, %v5162
        %5196 = vst.msk [vmem:[%s428 + $0xd8] sm:$0xff] %vm5168, %v5163
        %5197 = vst.msk [vmem:[%s428 + $0xe0] sm:$0xff] %vm5168, %v5164
        %5198 = vst.msk [vmem:[%s428 + $0xe8] sm:$0xff] %vm5168, %v5165
        %5199 = vst.msk [vmem:[%s428 + $0xf0] sm:$0xff] %vm5168, %v5166
        %5200 = vst.msk [vmem:[%s428 + $0xf8] sm:$0xff] %vm5168, %v5167
        %v5201 = vpack.c.bf16 %v5137, %v5136
        %v5202 = vpack.c.bf16 %v5139, %v5138
        %v5203 = vpack.c.bf16 %v5141, %v5140
        %v5204 = vpack.c.bf16 %v5143, %v5142
        %v5205 = vpack.c.bf16 %v5145, %v5144
        %v5206 = vpack.c.bf16 %v5147, %v5146
        %v5207 = vpack.c.bf16 %v5149, %v5148
        %v5208 = vpack.c.bf16 %v5151, %v5150
        %v5209 = vpack.c.bf16 %v5153, %v5152
        %v5210 = vpack.c.bf16 %v5155, %v5154
        %v5211 = vpack.c.bf16 %v5157, %v5156
        %v5212 = vpack.c.bf16 %v5159, %v5158
        %v5213 = vpack.c.bf16 %v5161, %v5160
        %v5214 = vpack.c.bf16 %v5163, %v5162
        %v5215 = vpack.c.bf16 %v5165, %v5164
        %v5216 = vpack.c.bf16 %v5167, %v5166
        %v5217 = vld [vmem:[%s8] sm:$0xf]
        %v5218 = vld [vmem:[%s8 + $0x4] sm:$0xf]
        %v5219 = vld [vmem:[%s9] sm:$0x1]
        %v5221 = vlaneseq
        %v5222 = vshrl.u32 %v5221, 7
        %v5223 = vsub.s32 0, %v5222
        %v5224 = vrot.slane %v5219, %v5223
        %v5228 = vunpack.c.l.b16 %v5217
        %v5229 = vunpack.c.l.b16 %v5218
        %v5230 = vpack.c.b16 %v5229, %v5228
        %v5233 = vsel %vm5168, %v5201, 0
        %v5236 = vsel %vm5168, %v5202, 0
        %v5239 = vsel %vm5168, %v5203, 0
        %v5242 = vsel %vm5168, %v5204, 0
        %v5245 = vsel %vm5168, %v5205, 0
        %v5248 = vsel %vm5168, %v5206, 0
        %v5251 = vsel %vm5168, %v5207, 0
        %v5254 = vsel %vm5168, %v5208, 0
        %v5257 = vsel %vm5168, %v5209, 0
        %v5260 = vsel %vm5168, %v5210, 0
        %v5263 = vsel %vm5168, %v5211, 0
        %v5266 = vsel %vm5168, %v5212, 0
        %v5269 = vsel %vm5168, %v5213, 0
        %v5272 = vsel %vm5168, %v5214, 0
        %v5275 = vsel %vm5168, %v5215, 0
        %v5278 = vsel %vm5168, %v5216, 0
        %5280 = vmatprep.subr.bf16.mxu0 0
        %5281 = vmatpush1.bf16.msra.mxu0 %v5230
        %5282 = vmatprep.subr.bf16.mxu0 0
        %5283 = vmatpush1.bf16.msra.mxu0 0
        %5284 = vmatprep.subr.bf16.mxu0 0
        %5285 = vmatpush1.bf16.msra.mxu0 0
        %5286 = vmatprep.subr.bf16.mxu0 0
        %5287 = vmatpush1.bf16.msra.mxu0 0
        %5288 = vmatprep.subr.bf16.mxu0 0
        %5289 = vmatpush1.bf16.msra.mxu0 0
        %5290 = vmatprep.subr.bf16.mxu0 0
        %5291 = vmatpush1.bf16.msra.mxu0 0
        %5292 = vmatprep.subr.bf16.mxu0 0
        %5293 = vmatpush1.bf16.msra.mxu0 0
        %5294 = vmatprep.subr.bf16.mxu0 0
        %5295 = vmatpush1.bf16.msra.mxu0 0
        %5296 = vmatprep.subr.bf16.mxu0 0
        %5297 = vmatpush1.bf16.msra.mxu0 0
        %5298 = vmatprep.subr.bf16.mxu0 0
        %5299 = vmatpush1.bf16.msra.mxu0 0
        %5300 = vmatprep.subr.bf16.mxu0 0
        %5301 = vmatpush1.bf16.msra.mxu0 0
        %5302 = vmatprep.subr.bf16.mxu0 0
        %5303 = vmatpush1.bf16.msra.mxu0 0
        %5304 = vmatprep.subr.bf16.mxu0 0
        %5305 = vmatpush1.bf16.msra.mxu0 0
        %5306 = vmatprep.subr.bf16.mxu0 0
        %5307 = vmatpush1.bf16.msra.mxu0 0
        %5308 = vmatprep.subr.bf16.mxu0 0
        %5309 = vmatpush1.bf16.msra.mxu0 0
        %5310 = vmatprep.subr.bf16.mxu0 0
        %5311 = vmatpush1.bf16.msra.mxu0 0
        %5312 = vmatprep.mubr.bf16.mxu0 0
        %5313 = vmatmul.mubr.bf16.gmra.mrb[0].mxu0 %v5233
        %v5314 = vpop.f32.mrb[0].mxu0
        %v5315 = vadd.f32 %v5224, %v5314
        %v5316 = vpop.f32.mrb[0].mxu0
        %v5317 = vpop.f32.mrb[0].mxu0
        %v5318 = vadd.f32 %v5224, %v5317
        %v5319 = vpop.f32.mrb[0].mxu0
        %5320 = vmatprep.mubr.bf16.mxu0 0
        %5321 = vmatmul.mubr.bf16.gmra.mrb[0].mxu0 %v5236
        %v5322 = vpop.f32.mrb[0].mxu0
        %v5323 = vadd.f32 %v5224, %v5322
        %v5324 = vpop.f32.mrb[0].mxu0
        %v5325 = vpop.f32.mrb[0].mxu0
        %v5326 = vadd.f32 %v5224, %v5325
        %v5327 = vpop.f32.mrb[0].mxu0
        %5328 = vmatprep.mubr.bf16.mxu0 0
        %5329 = vmatmul.mubr.bf16.gmra.mrb[0].mxu0 %v5239
        %v5330 = vpop.f32.mrb[0].mxu0
        %v5331 = vadd.f32 %v5224, %v5330
        %v5332 = vpop.f32.mrb[0].mxu0
        %v5333 = vpop.f32.mrb[0].mxu0
        %v5334 = vadd.f32 %v5224, %v5333
        %v5335 = vpop.f32.mrb[0].mxu0
        %5336 = vmatprep.mubr.bf16.mxu0 0
        %5337 = vmatmul.mubr.bf16.gmra.mrb[0].mxu0 %v5242
        %v5338 = vpop.f32.mrb[0].mxu0
        %v5339 = vadd.f32 %v5224, %v5338
        %v5340 = vpop.f32.mrb[0].mxu0
        %v5341 = vpop.f32.mrb[0].mxu0
        %v5342 = vadd.f32 %v5224, %v5341
        %v5343 = vpop.f32.mrb[0].mxu0
        %5344 = vmatprep.mubr.bf16.mxu0 0
        %5345 = vmatmul.mubr.bf16.gmra.mrb[0].mxu0 %v5245
        %v5346 = vpop.f32.mrb[0].mxu0
        %v5347 = vadd.f32 %v5224, %v5346
        %v5348 = vpop.f32.mrb[0].mxu0
        %v5349 = vpop.f32.mrb[0].mxu0
        %v5350 = vadd.f32 %v5224, %v5349
        %v5351 = vpop.f32.mrb[0].mxu0
        %5352 = vmatprep.mubr.bf16.mxu0 0
        %5353 = vmatmul.mubr.bf16.gmra.mrb[0].mxu0 %v5248
        %v5354 = vpop.f32.mrb[0].mxu0
        %v5355 = vadd.f32 %v5224, %v5354
        %v5356 = vpop.f32.mrb[0].mxu0
        %v5357 = vpop.f32.mrb[0].mxu0
        %v5358 = vadd.f32 %v5224, %v5357
        %v5359 = vpop.f32.mrb[0].mxu0
        %5360 = vmatprep.mubr.bf16.mxu0 0
        %5361 = vmatmul.mubr.bf16.gmra.mrb[0].mxu0 %v5251
        %v5362 = vpop.f32.mrb[0].mxu0
        %v5363 = vadd.f32 %v5224, %v5362
        %v5364 = vpop.f32.mrb[0].mxu0
        %v5365 = vpop.f32.mrb[0].mxu0
        %v5366 = vadd.f32 %v5224, %v5365
        %v5367 = vpop.f32.mrb[0].mxu0
        %5368 = vmatprep.mubr.bf16.mxu0 0
        %5369 = vmatmul.mubr.bf16.gmra.mrb[0].mxu0 %v5254
        %v5370 = vpop.f32.mrb[0].mxu0
        %v5371 = vadd.f32 %v5224, %v5370
        %v5372 = vpop.f32.mrb[0].mxu0
        %v5373 = vpop.f32.mrb[0].mxu0
        %v5374 = vadd.f32 %v5224, %v5373
        %v5375 = vpop.f32.mrb[0].mxu0
        %5376 = vmatprep.mubr.bf16.mxu0 0
        %5377 = vmatmul.mubr.bf16.gmra.mrb[0].mxu0 %v5257
        %v5378 = vpop.f32.mrb[0].mxu0
        %v5379 = vadd.f32 %v5224, %v5378
        %v5380 = vpop.f32.mrb[0].mxu0
        %v5381 = vpop.f32.mrb[0].mxu0
        %v5382 = vadd.f32 %v5224, %v5381
        %v5383 = vpop.f32.mrb[0].mxu0
        %5384 = vmatprep.mubr.bf16.mxu0 0
        %5385 = vmatmul.mubr.bf16.gmra.mrb[0].mxu0 %v5260
        %v5386 = vpop.f32.mrb[0].mxu0
        %v5387 = vadd.f32 %v5224, %v5386
        %v5388 = vpop.f32.mrb[0].mxu0
        %v5389 = vpop.f32.mrb[0].mxu0
        %v5390 = vadd.f32 %v5224, %v5389
        %v5391 = vpop.f32.mrb[0].mxu0
        %5392 = vmatprep.mubr.bf16.mxu0 0
        %5393 = vmatmul.mubr.bf16.gmra.mrb[0].mxu0 %v5263
        %v5394 = vpop.f32.mrb[0].mxu0
        %v5395 = vadd.f32 %v5224, %v5394
        %v5396 = vpop.f32.mrb[0].mxu0
        %v5397 = vpop.f32.mrb[0].mxu0
        %v5398 = vadd.f32 %v5224, %v5397
        %v5399 = vpop.f32.mrb[0].mxu0
        %5400 = vmatprep.mubr.bf16.mxu0 0
        %5401 = vmatmul.mubr.bf16.gmra.mrb[0].mxu0 %v5266
        %v5402 = vpop.f32.mrb[0].mxu0
        %v5403 = vadd.f32 %v5224, %v5402
        %v5404 = vpop.f32.mrb[0].mxu0
        %v5405 = vpop.f32.mrb[0].mxu0
        %v5406 = vadd.f32 %v5224, %v5405
        %v5407 = vpop.f32.mrb[0].mxu0
        %5408 = vmatprep.mubr.bf16.mxu0 0
        %5409 = vmatmul.mubr.bf16.gmra.mrb[0].mxu0 %v5269
        %v5410 = vpop.f32.mrb[0].mxu0
        %v5411 = vadd.f32 %v5224, %v5410
        %v5412 = vpop.f32.mrb[0].mxu0
        %v5413 = vpop.f32.mrb[0].mxu0
        %v5414 = vadd.f32 %v5224, %v5413
        %v5415 = vpop.f32.mrb[0].mxu0
        %5416 = vmatprep.mubr.bf16.mxu0 0
        %5417 = vmatmul.mubr.bf16.gmra.mrb[0].mxu0 %v5272
        %v5418 = vpop.f32.mrb[0].mxu0
        %v5419 = vadd.f32 %v5224, %v5418
        %v5420 = vpop.f32.mrb[0].mxu0
        %v5421 = vpop.f32.mrb[0].mxu0
        %v5422 = vadd.f32 %v5224, %v5421
        %v5423 = vpop.f32.mrb[0].mxu0
        %5424 = vmatprep.mubr.bf16.mxu0 0
        %5425 = vmatmul.mubr.bf16.gmra.mrb[0].mxu0 %v5275
        %v5426 = vpop.f32.mrb[0].mxu0
        %v5427 = vadd.f32 %v5224, %v5426
        %v5428 = vpop.f32.mrb[0].mxu0
        %v5429 = vpop.f32.mrb[0].mxu0
        %v5430 = vadd.f32 %v5224, %v5429
        %v5431 = vpop.f32.mrb[0].mxu0
        %5432 = vmatprep.mubr.bf16.mxu0 0
        %5433 = vmatmul.mubr.bf16.gmra.mrb[0].mxu0 %v5278
        %v5434 = vpop.f32.mrb[0].mxu0
        %v5435 = vadd.f32 %v5224, %v5434
        %v5436 = vpop.f32.mrb[0].mxu0
        %v5437 = vpop.f32.mrb[0].mxu0
        %v5438 = vadd.f32 %v5224, %v5437
        %v5439 = vpop.f32.mrb[0].mxu0
        %5440 = vdwg.mxu0
        %v5441 = vmax.f32 %v5315, 0.0
        %v5442 = vmax.f32 %v5318, 0.0
        %v5443 = vmax.f32 %v5323, 0.0
        %v5444 = vmax.f32 %v5326, 0.0
        %v5445 = vmax.f32 %v5331, 0.0
        %v5446 = vmax.f32 %v5334, 0.0
        %v5447 = vmax.f32 %v5339, 0.0
        %v5448 = vmax.f32 %v5342, 0.0
        %v5449 = vmax.f32 %v5347, 0.0
        %v5450 = vmax.f32 %v5350, 0.0
        %v5451 = vmax.f32 %v5355, 0.0
        %v5452 = vmax.f32 %v5358, 0.0
        %v5453 = vmax.f32 %v5363, 0.0
        %v5454 = vmax.f32 %v5366, 0.0
        %v5455 = vmax.f32 %v5371, 0.0
        %v5456 = vmax.f32 %v5374, 0.0
        %v5457 = vmax.f32 %v5379, 0.0
        %v5458 = vmax.f32 %v5382, 0.0
        %v5459 = vmax.f32 %v5387, 0.0
        %v5460 = vmax.f32 %v5390, 0.0
        %v5461 = vmax.f32 %v5395, 0.0
        %v5462 = vmax.f32 %v5398, 0.0
        %v5463 = vmax.f32 %v5403, 0.0
        %v5464 = vmax.f32 %v5406, 0.0
        %v5465 = vmax.f32 %v5411, 0.0
        %v5466 = vmax.f32 %v5414, 0.0
        %v5467 = vmax.f32 %v5419, 0.0
        %v5468 = vmax.f32 %v5422, 0.0
        %v5469 = vmax.f32 %v5427, 0.0
        %v5470 = vmax.f32 %v5430, 0.0
        %v5471 = vmax.f32 %v5435, 0.0
        %v5472 = vmax.f32 %v5438, 0.0
        %5473 = vst.msk [vmem:[%s435] sm:$0xff] %vm5168, %v5441
        %5474 = vst.msk [vmem:[%s435 + $0x8] sm:$0xff] %vm5168, %v5442
        %5475 = vst.msk [vmem:[%s435 + $0x10] sm:$0xff] %vm5168, %v5443
        %5476 = vst.msk [vmem:[%s435 + $0x18] sm:$0xff] %vm5168, %v5444
        %5477 = vst.msk [vmem:[%s435 + $0x20] sm:$0xff] %vm5168, %v5445
        %5478 = vst.msk [vmem:[%s435 + $0x28] sm:$0xff] %vm5168, %v5446
        %5479 = vst.msk [vmem:[%s435 + $0x30] sm:$0xff] %vm5168, %v5447
        %5480 = vst.msk [vmem:[%s435 + $0x38] sm:$0xff] %vm5168, %v5448
        %5481 = vst.msk [vmem:[%s435 + $0x40] sm:$0xff] %vm5168, %v5449
        %5482 = vst.msk [vmem:[%s435 + $0x48] sm:$0xff] %vm5168, %v5450
        %5483 = vst.msk [vmem:[%s435 + $0x50] sm:$0xff] %vm5168, %v5451
        %5484 = vst.msk [vmem:[%s435 + $0x58] sm:$0xff] %vm5168, %v5452
        %5485 = vst.msk [vmem:[%s435 + $0x60] sm:$0xff] %vm5168, %v5453
        %5486 = vst.msk [vmem:[%s435 + $0x68] sm:$0xff] %vm5168, %v5454
        %5487 = vst.msk [vmem:[%s435 + $0x70] sm:$0xff] %vm5168, %v5455
        %5488 = vst.msk [vmem:[%s435 + $0x78] sm:$0xff] %vm5168, %v5456
        %5489 = vst.msk [vmem:[%s435 + $0x80] sm:$0xff] %vm5168, %v5457
        %5490 = vst.msk [vmem:[%s435 + $0x88] sm:$0xff] %vm5168, %v5458
        %5491 = vst.msk [vmem:[%s435 + $0x90] sm:$0xff] %vm5168, %v5459
        %5492 = vst.msk [vmem:[%s435 + $0x98] sm:$0xff] %vm5168, %v5460
        %5493 = vst.msk [vmem:[%s435 + $0xa0] sm:$0xff] %vm5168, %v5461
        %5494 = vst.msk [vmem:[%s435 + $0xa8] sm:$0xff] %vm5168, %v5462
        %5495 = vst.msk [vmem:[%s435 + $0xb0] sm:$0xff] %vm5168, %v5463
        %5496 = vst.msk [vmem:[%s435 + $0xb8] sm:$0xff] %vm5168, %v5464
        %5497 = vst.msk [vmem:[%s435 + $0xc0] sm:$0xff] %vm5168, %v5465
        %5498 = vst.msk [vmem:[%s435 + $0xc8] sm:$0xff] %vm5168, %v5466
        %5499 = vst.msk [vmem:[%s435 + $0xd0] sm:$0xff] %vm5168, %v5467
        %5500 = vst.msk [vmem:[%s435 + $0xd8] sm:$0xff] %vm5168, %v5468
        %5501 = vst.msk [vmem:[%s435 + $0xe0] sm:$0xff] %vm5168, %v5469
        %5502 = vst.msk [vmem:[%s435 + $0xe8] sm:$0xff] %vm5168, %v5470
        %5503 = vst.msk [vmem:[%s435 + $0xf0] sm:$0xff] %vm5168, %v5471
        %5504 = vst.msk [vmem:[%s435 + $0xf8] sm:$0xff] %vm5168, %v5472
        %s5505 = sand.u32 %s267, 1
        %s5506 = scalar_lea.sflag [#allocation3], %s5505
        %s5507 = sand.u32 %s267, 1
        %s5508 = smul.addr %s5507, 256
        %s5509 = scalar_lea.vmem [#allocation2], %s5508
        %s5510 = sand.u32 %s293, 1
        %s5511 = scalar_lea.sflag [#allocation5], %s5510
        %s5512 = sand.u32 %s293, 1
        %s5513 = smul.addr %s5512, 256
        %s5514 = scalar_lea.vmem [#allocation4], %s5513
        // Predicated region
        $region61: #{tpu_custom_call.1} parent=59 // pred_check
          %p5515 = pneg %p277
        $region62: #{tpu_custom_call.1} parent=59 // pred_check_branch
          %5517 = sbr.rel (%p5515) target = $region64
        $region63: #{tpu_custom_call.1} parent=59 // pred_region
          %s5519 = ssub.s32 4096, 4096
          %5520 = vsyncadd %s5506, %s5519
          %s5521 = smul.addr %s29, 32
          %s5522 = smul.addr %s5521, 128
          %s5523 = scalar_lea.hbm %s10, %s5522
          %s5524 = sshll.u32 %s5509, 4
          %s5525 = int_to_ptr.vmem [resolvable:$true] %s5524
          %5530 = dma.vmem_to_hbm [thread:$0]  %s5525, 4096, %s5523, %s5506, 128, 128, 8
        $region64: #{tpu_custom_call.1} parent=59 // pred_fallthru
          _
        // Predicated region
        $region65: #{tpu_custom_call.1} parent=59 // pred_check
          %p5531 = pneg %p303
        $region66: #{tpu_custom_call.1} parent=59 // pred_check_branch
          %5533 = sbr.rel (%p5531) target = $region68
        $region67: #{tpu_custom_call.1} parent=59 // pred_region
          %s5535 = ssub.s32 4096, 4096
          %5536 = vsyncadd %s5511, %s5535
          %s5537 = smul.addr %s29, 32
          %s5538 = smul.addr %s5537, 128
          %s5539 = scalar_lea.hbm %s11, %s5538
          %s5540 = sshll.u32 %s5514, 4
          %s5541 = int_to_ptr.vmem [resolvable:$true] %s5540
          %5546 = dma.vmem_to_hbm [thread:$0]  %s5541, 4096, %s5539, %s5511, 128, 128, 8
        $region68: #{tpu_custom_call.1} parent=59 // pred_fallthru
          _
      $region60: #{tpu_custom_call.1} parent=5 // pred_fallthru
        _
      %p5547 = scmp.le.s32.totalorder 2, %s24
      // Predicated region
      $region69: #{tpu_custom_call.1} parent=5 // pred_check
        %p5548 = pneg %p5547
      $region70: #{tpu_custom_call.1} parent=5 // pred_check_branch
        %5550 = sbr.rel (%p5548) target = $region72
      $region71: #{tpu_custom_call.1} parent=5 // pred_region
        %s5551 = ssub.s32 %s24, 2
        // Predicated region
        $region73: #{tpu_custom_call.1} parent=71 // pred_check
          %p5552 = pneg %p283
        $region74: #{tpu_custom_call.1} parent=71 // pred_check_branch
          %5554 = sbr.rel (%p5552) target = $region76
        $region75: #{tpu_custom_call.1} parent=71 // pred_region
          %s5555 = sand.u32 %s268, 1
          %s5556 = scalar_lea.sflag [#allocation3], %s5555
          %s5557 = sand.u32 %s268, 1
          %s5558 = smul.addr %s5557, 256
          %s5559 = scalar_lea.vmem [#allocation2], %s5558
          %5560 = dma.done %s5556, 4096
        $region76: #{tpu_custom_call.1} parent=71 // pred_fallthru
          _
        // Predicated region
        $region77: #{tpu_custom_call.1} parent=71 // pred_check
          %p5561 = pneg %p309
        $region78: #{tpu_custom_call.1} parent=71 // pred_check_branch
          %5563 = sbr.rel (%p5561) target = $region80
        $region79: #{tpu_custom_call.1} parent=71 // pred_region
          %s5564 = sand.u32 %s294, 1
          %s5565 = scalar_lea.sflag [#allocation5], %s5564
          %s5566 = sand.u32 %s294, 1
          %s5567 = smul.addr %s5566, 256
          %s5568 = scalar_lea.vmem [#allocation4], %s5567
          %5569 = dma.done %s5565, 4096
        $region80: #{tpu_custom_call.1} parent=71 // pred_fallthru
          _
      $region72: #{tpu_custom_call.1} parent=5 // pred_fallthru
        _
    $region6: #{tpu_custom_call.1} parent=1 // loop_footer
      %s28 = sadd.s32 1, %s24
    $region7: #{tpu_custom_call.1} parent=1 // loop_footer_branch
      %23 = sbr.rel target = $region3
    $region8: #{tpu_custom_call.1} parent=1 // loop_exit
      _
    %5570 = vsyncpa [#allocation3], 1
    %s5571 = scalar_lea.sflag [#allocation3], 1
    %5572 = vsyncpa %s5571, 1
    %5573 = vsyncpa [#allocation5], 1
    %s5574 = scalar_lea.sflag [#allocation5], 1
    %5575 = vsyncpa %s5574, 1

</llo_original>
